<compile_context>
chip_gen: v7x
topology: tpu7x:2x2x1
jax: 0.10.0
libtpu: 0.0.40
codegen_flags: <defaults>
</compile_context>

<pallas_src>
import jax
import jax.numpy as jnp
from jax import lax
from jax.experimental import pallas as pl
from jax.experimental.pallas import tpu as pltpu


_LANE = 128       # f32 lane width
_SUBLANE = 8      # f32 sublane width
_MAX_BLOCK_B = 256  # MXU-sized batch tile (256 rows on v6e/v7x; also fine on v5e)

# Set to jnp.bfloat16 on v6e/v7x to hit bf16 MXU peak (weights / x / gates scratch
# are then pre-cast + stored in bf16 by the wrapper; loosen the allclose tolerance
# accordingly). Kept f32 here for exact verification and v5e.
_MATMUL_DTYPE = jnp.float32


def _round_up(n, m):
    return ((n + m - 1) // m) * m


# ----------------------------------------------------------------------------
# Fused kernel: all LSTM layers + additive attention + softmax over time + FC.
# ----------------------------------------------------------------------------
def fused_lstm_attn_kernel(
    x_ref,        # (T, BB, Hp)    time-major, padded input sequence (matmul dtype)
    w_ih_ref,     # (L, Hp, 4*Hp)  input->gates weights (gate blocks lane-aligned)
    w_hh_ref,     # (L, Hp, 4*Hp)  hidden->gates weights
    b_ref,        # (L, 1, 4*Hp)   bias_ih + bias_hh (f32)
    w1_ref,       # (Hp, Hp)       attention linear 1 (pre-transposed)
    b1_ref,       # (1, Hp)
    w2_ref,       # (1, Hp)        attention linear 2 weight row
    wfc_ref,      # (Hp, Op)       final fc (pre-transposed)
    bfc_ref,      # (1, Op)
    out_ref,      # (BB, Op)
    seq_scr,      # VMEM (T, BB, Hp)    current layer's hidden-state sequence (f32)
    gates_scr,    # VMEM (T, BB, 4*Hp)  precomputed x-projection gates (matmul dtype)
):
    T, BB, Hp = x_ref.shape
    L = w_ih_ref.shape[0]
    G = 4 * Hp
    mm = x_ref.dtype            # matmul operand dtype (weights pre-cast in wrapper)

    unroll = True if T <= 16 else 8
    # Chunk the big flattened matmuls over T when T*BB rows would make the live
    # intermediate spill out of the vreg file (keeps M = BB, still MXU-friendly).
    chunk = (T * BB) > 512

    for layer in range(L):      # static Python loop; all layer weights VMEM-resident
        # TODO(synk): for real model sizes (H >= 512) on v7x, stream per-layer
        # weights via a second grid axis (grid=(nb, L)) instead of keeping all L
        # layers resident simultaneously.
        w_ih_l = w_ih_ref[layer]            # (Hp, G)  hoisted, already matmul dtype
        w_hh_l = w_hh_ref[layer]            # (Hp, G)  hoisted out of the time loop
        bias = b_ref[layer]                 # (1, G)   f32

        # ---- hoisted input projection: x @ W_ih + b for all T, outside the
        #      sequential recurrence ----
        if chunk:
            bias_bb = jnp.broadcast_to(bias, (BB, G))     # hoisted broadcast
            for t in range(T):
                x_t = x_ref[t] if layer == 0 else seq_scr[t].astype(mm)
                g_t = jnp.dot(x_t, w_ih_l,
                              preferred_element_type=jnp.float32) + bias_bb
                gates_scr[t] = g_t.astype(gates_scr.dtype)
        else:
            xin = x_ref[...] if layer == 0 else seq_scr[...].astype(mm)
            xin2 = xin.reshape(T * BB, Hp)
            gx = jnp.dot(xin2, w_ih_l,
                         preferred_element_type=jnp.float32) + bias   # (T*BB, G)
            gates_scr[...] = gx.reshape(T, BB, G).astype(gates_scr.dtype)

        def step(t, carry):
            h, c = carry                                   # (BB, Hp) f32, in vregs
            g = gates_scr[t].astype(jnp.float32) + jnp.dot(
                h.astype(mm), w_hh_l, preferred_element_type=jnp.float32)
            # lane-aligned gate slices (each gate block padded to Hp = k*128)
            i_g = jax.nn.sigmoid(g[:, 0:Hp])
            f_g = jax.nn.sigmoid(g[:, Hp:2 * Hp])
            g_g = jnp.tanh(g[:, 2 * Hp:3 * Hp])
            o_g = jax.nn.sigmoid(g[:, 3 * Hp:4 * Hp])
            # TODO(synk): on v6e/v7x with large batch tiles the gate transcendentals
            # could run in bf16 on the EUP; kept f32 for exactness / v5e.
            c_new = f_g * c + i_g * g_g
            h_new = o_g * jnp.tanh(c_new)
            seq_scr[t] = h_new
            return (h_new, c_new)

        h0 = jnp.zeros((BB, Hp), jnp.float32)
        c0 = jnp.zeros((BB, Hp), jnp.float32)
        lax.fori_loop(0, T, step, (h0, c0), unroll=unroll)
        # TODO(synk): inter-layer dropout omitted (eval-mode identity)

    # ---- additive attention over time on the VMEM-resident sequence ----
    w1 = w1_ref[...]                                       # (Hp, Hp) matmul dtype
    b1 = b1_ref[...]                                       # (1, Hp)  f32
    w2 = w2_ref[...]                                       # (1, Hp)  f32
    if chunk:
        rows = []
        for t in range(T):
            e_t = jnp.tanh(jnp.dot(seq_scr[t].astype(mm), w1,
                                   preferred_element_type=jnp.float32) + b1)
            rows.append(jnp.sum(e_t * w2, axis=-1, keepdims=True))   # (BB, 1)
        scores = jnp.stack(rows, axis=0)                              # (T, BB, 1)
    else:
        hs2 = seq_scr[...].reshape(T * BB, Hp).astype(mm)
        e = jnp.tanh(jnp.dot(hs2, w1,
                             preferred_element_type=jnp.float32) + b1)
        scores = jnp.sum(e.reshape(T, BB, Hp) * w2, axis=-1, keepdims=True)
    # (the attention head's "+ b2" is softmax-invariant -> dropped as dead work)

    m = jnp.max(scores, axis=0, keepdims=True)             # (1, BB, 1)
    ex = jnp.exp(scores - m)
    attn_w = ex / jnp.sum(ex, axis=0, keepdims=True)       # exact; tiny (T, BB, 1)

    # attended = sum_t attn_w[t] * h[t]; width-1 last dim -> cheap lane splat
    attended = jnp.zeros((BB, Hp), jnp.float32)
    for t in range(T):
        attended = attended + attn_w[t] * seq_scr[t]

    # TODO(synk): output dropout omitted (eval-mode identity)
    out = jnp.dot(attended.astype(mm), wfc_ref[...],
                  preferred_element_type=jnp.float32) + bfc_ref[...]
    out_ref[...] = out.astype(out_ref.dtype)


def _fused_forward_pallas(x_tm, w_ih, w_hh, b, w1, b1, w2, wfc, bfc, *, block_b):
    T, Bp, Hp = x_tm.shape
    L = w_ih.shape[0]
    G = 4 * Hp
    Op = wfc.shape[1]
    nb = Bp // block_b
    mm_bytes = x_tm.dtype.itemsize

    # Explicit VMEM budget: weights (assume worst-case double-buffering in the
    # estimate) + pipelined x/out blocks + the two scratch buffers, with headroom.
    est = (
        2 * (w_ih.size + w_hh.size + w1.size + wfc.size) * mm_bytes
        + 2 * (b.size + b1.size + w2.size + bfc.size) * 4
        + 2 * T * block_b * Hp * mm_bytes        # x block (double-buffered)
        + T * block_b * Hp * 4                   # seq scratch (f32)
        + T * block_b * G * mm_bytes             # gates scratch
        + 2 * block_b * Op * 4                   # out block (double-buffered)
    )
    vmem_limit = min(max(int(est * 3 // 2) + (2 << 20), 32 << 20), 96 << 20)

    def const_spec(shape):
        # Grid-invariant operands: single-buffer them so they don't pay 2x VMEM
        # (matters on v7x's 64 MiB). Fall back if pipeline_mode is unavailable.
        try:
            return pl.BlockSpec(shape, lambda i: (0,) * len(shape),
                                pipeline_mode=pl.Buffered(1))
        except (TypeError, AttributeError):
            return pl.BlockSpec(shape, lambda i: (0,) * len(shape))

    grid_spec = pltpu.PrefetchScalarGridSpec(
        num_scalar_prefetch=0,
        grid=(nb,),
        in_specs=[
            pl.BlockSpec((T, block_b, Hp), lambda i: (0, i, 0)),   # x (time-major)
            const_spec((L, Hp, G)),          # w_ih (all layers)
            const_spec((L, Hp, G)),          # w_hh
            const_spec((L, 1, G)),           # biases
            const_spec((Hp, Hp)),            # attn W1
            const_spec((1, Hp)),             # attn b1
            const_spec((1, Hp)),             # attn W2 row
            const_spec((Hp, Op)),            # fc W
            const_spec((1, Op)),             # fc b
        ],
        out_specs=pl.BlockSpec((block_b, Op), lambda i: (i, 0)),
        scratch_shapes=[
            pltpu.VMEM((T, block_b, Hp), jnp.float32),   # hidden-state sequence
            pltpu.VMEM((T, block_b, G), x_tm.dtype),     # precomputed x-proj gates
        ],
    )
    return pl.pallas_call(
        fused_lstm_attn_kernel,
        out_shape=jax.ShapeDtypeStruct((Bp, Op), jnp.float32),
        grid_spec=grid_spec,
        compiler_params=pltpu.CompilerParams(
            dimension_semantics=("parallel",),   # batch blocks shard across TCs
            vmem_limit_bytes=vmem_limit,
        ),
    )(x_tm, w_ih, w_hh, b, w1, b1, w2, wfc, bfc)


# ----------------------------------------------------------------------------
# Full forward wrapper: pad/pack to lane-aligned layout, call the fused kernel.
# ----------------------------------------------------------------------------
@jax.jit
def attention_lstm_forward(x, params):
    B, T, Din = x.shape
    H = params["lstm"][0][1].shape[1]
    O = params["fc"][0].shape[0]
    mm = _MATMUL_DTYPE

    Hp = _round_up(max(H, Din), _LANE)
    Op = _round_up(O, _LANE)
    G = 4 * Hp

    Bp = _round_up(B, _SUBLANE)
    block_b = min(Bp, _MAX_BLOCK_B)          # MXU-sized batch tile
    Bp = _round_up(Bp, block_b)

    # ---- pack LSTM weights: transpose to (Din,4H)/(H,4H), pad each gate block to
    #      a lane-aligned width Hp (so in-kernel gate slices are 128-aligned),
    #      stack layers, pre-cast matmul operands to the matmul dtype.
    # TODO(synk): for tiny H (e.g. 32) the 4 gates could be packed into a single
    # 128-lane block instead of one Hp block each to cut padded FLOPs/DMA.
    w_ih_l, w_hh_l, b_l = [], [], []
    for (w_ih, w_hh, b_ih, b_hh) in params["lstm"]:
        din = w_ih.shape[1]
        wi = jnp.zeros((Hp, 4, Hp), jnp.float32)
        wi = wi.at[:din, :, :H].set(w_ih.T.reshape(din, 4, H))
        wh = jnp.zeros((Hp, 4, Hp), jnp.float32)
        wh = wh.at[:H, :, :H].set(w_hh.T.reshape(H, 4, H))
        bb = jnp.zeros((4, Hp), jnp.float32)
        bb = bb.at[:, :H].set((b_ih + b_hh).reshape(4, H))
        w_ih_l.append(wi.reshape(Hp, G))
        w_hh_l.append(wh.reshape(Hp, G))
        b_l.append(bb.reshape(1, G))
    w_ih_all = jnp.stack(w_ih_l).astype(mm)   # (L, Hp, 4Hp)
    w_hh_all = jnp.stack(w_hh_l).astype(mm)   # (L, Hp, 4Hp)
    b_all = jnp.stack(b_l)                     # (L, 1, 4Hp)  f32

    # ---- attention + fc weights (pre-transposed, zero-padded, pre-cast) ----
    w1, b1, w2, b2 = params["attn"]            # b2 is softmax-invariant -> unused
    wfc, bfc = params["fc"]
    w1_p = jnp.zeros((Hp, Hp), jnp.float32).at[:H, :H].set(w1.T).astype(mm)
    b1_p = jnp.zeros((1, Hp), jnp.float32).at[0, :H].set(b1)
    w2_p = jnp.zeros((1, Hp), jnp.float32).at[:, :H].set(w2)
    wfc_p = jnp.zeros((Hp, Op), jnp.float32).at[:H, :O].set(wfc.T).astype(mm)
    bfc_p = jnp.zeros((1, Op), jnp.float32).at[0, :O].set(bfc)

    # ---- input: one-time tiny transpose to time-major + zero-pad to (T, Bp, Hp) ----
    x_tm = jnp.swapaxes(x, 0, 1)                              # (T, B, Din)
    x_p = jnp.zeros((T, Bp, Hp), mm).at[:, :B, :Din].set(x_tm.astype(mm))

    out_p = _fused_forward_pallas(
        x_p, w_ih_all, w_hh_all, b_all,
        w1_p, b1_p, w2_p, wfc_p, bfc_p,
        block_b=block_b,
    )
    return out_p[:B, :O]


# ----------------------------------------------------------------------------
# Pure-JAX reference for verification.
# ----------------------------------------------------------------------------
def reference_forward(x, params):
    h_seq = x
    for (w_ih, w_hh, b_ih, b_hh) in params["lstm"]:
        B = h_seq.shape[0]
        H = w_hh.shape[1]

        def step(carry, x_t):
            h, c = carry
            gates = x_t @ w_ih.T + h @ w_hh.T + b_ih + b_hh
            i = jax.nn.sigmoid(gates[:, :H])
            f = jax.nn.sigmoid(gates[:, H:2 * H])
            g = jnp.tanh(gates[:, 2 * H:3 * H])
            o = jax.nn.sigmoid(gates[:, 3 * H:])
            c = f * c + i * g
            h = o * jnp.tanh(c)
            return (h, c), h

        init = (jnp.zeros((B, H)), jnp.zeros((B, H)))
        _, hs = lax.scan(step, init, jnp.swapaxes(h_seq, 0, 1))
        h_seq = jnp.swapaxes(hs, 0, 1)

    w1, b1, w2, b2 = params["attn"]
    wfc, bfc = params["fc"]
    e = jnp.tanh(h_seq @ w1.T + b1)
    scores = e @ w2.T + b2                          # (B, T, 1)
    attn = jax.nn.softmax(scores, axis=1)
    attended = jnp.sum(attn * h_seq, axis=1)        # (B, H)
    return attended @ wfc.T + bfc


# ----------------------------------------------------------------------------
# Deterministic parameter construction (PyTorch-style shapes).
# ----------------------------------------------------------------------------
def init_params(key, input_size, hidden_size, num_layers, output_size):
    bound = 1.0 / jnp.sqrt(hidden_size)
    params = {"lstm": []}
    for layer in range(num_layers):
        din = input_size if layer == 0 else hidden_size
        key, k1, k2, k3, k4 = jax.random.split(key, 5)
        params["lstm"].append((
            jax.random.uniform(k1, (4 * hidden_size, din), jnp.float32, -bound, bound),
            jax.random.uniform(k2, (4 * hidden_size, hidden_size), jnp.float32, -bound, bound),
            jax.random.uniform(k3, (4 * hidden_size,), jnp.float32, -bound, bound),
            jax.random.uniform(k4, (4 * hidden_size,), jnp.float32, -bound, bound),
        ))
    key, k1, k2, k3, k4, k5, k6 = jax.random.split(key, 7)
    params["attn"] = (
        jax.random.uniform(k1, (hidden_size, hidden_size), jnp.float32, -bound, bound),
        jax.random.uniform(k2, (hidden_size,), jnp.float32, -bound, bound),
        jax.random.uniform(k3, (1, hidden_size), jnp.float32, -bound, bound),
        jax.random.uniform(k4, (1,), jnp.float32, -bound, bound),
    )
    params["fc"] = (
        jax.random.uniform(k5, (output_size, hidden_size), jnp.float32, -bound, bound),
        jax.random.uniform(k6, (output_size,), jnp.float32, -bound, bound),
    )
    return params


if __name__ == "__main__":
    B, T, INPUT, HIDDEN, LAYERS, OUT = 2, 8, 4, 32, 2, 3

    key = jax.random.PRNGKey(0)
    key, xkey = jax.random.split(key)
    x = jax.random.normal(xkey, (B, T, INPUT), jnp.float32)
    params = init_params(key, INPUT, HIDDEN, LAYERS, OUT)

    out = attention_lstm_forward(x, params)
    out = jax.block_until_ready(out)

    ref = reference_forward(x, params)
    assert out.shape == (B, OUT)
    # Softmax now uses an exact divide; the remaining tolerance only covers MXU
    # matmul rounding (f32-via-bf16-pass behaviour on some chips).
    assert bool(jnp.allclose(out, ref, atol=2e-3, rtol=2e-2)), "mismatch vs reference"

    print("KERNEL_OK")
</pallas_src>

<mosaic_0001>
module attributes {stable_mosaic.version = 11 : i64} {
  func.func @fused_lstm_attn_kernel(%arg0: i32, %arg1: memref<8x8x128xf32, #tpu.memory_space<vmem>>, %arg2: memref<2x128x512xf32, #tpu.memory_space<vmem>>, %arg3: memref<2x128x512xf32, #tpu.memory_space<vmem>>, %arg4: memref<2x1x512xf32, #tpu.memory_space<vmem>>, %arg5: memref<128x128xf32, #tpu.memory_space<vmem>>, %arg6: memref<1x128xf32, #tpu.memory_space<vmem>>, %arg7: memref<1x128xf32, #tpu.memory_space<vmem>>, %arg8: memref<128x128xf32, #tpu.memory_space<vmem>>, %arg9: memref<1x128xf32, #tpu.memory_space<vmem>>, %arg10: memref<8x128xf32, #tpu.memory_space<vmem>>, %arg11: memref<8x8x128xf32, #tpu.memory_space<vmem>>, %arg12: memref<8x8x512xf32, #tpu.memory_space<vmem>>) attributes {dimension_semantics = [#tpu.dimension_semantics<parallel>], iteration_bounds = array<i64: 1>, scalar_prefetch = 0 : i64, scratch_operands = 2 : i64, tpu.core_type = #tpu.core_type<tc>, window_params = [{transform_indices = @transform_0, window_bounds = array<i64: 8, 8, 128>}, {pipeline_mode = #tpu.pipeline_mode<synchronous>, transform_indices = @transform_1, window_bounds = array<i64: 2, 128, 512>}, {pipeline_mode = #tpu.pipeline_mode<synchronous>, transform_indices = @transform_2, window_bounds = array<i64: 2, 128, 512>}, {pipeline_mode = #tpu.pipeline_mode<synchronous>, transform_indices = @transform_3, window_bounds = array<i64: 2, 1, 512>}, {pipeline_mode = #tpu.pipeline_mode<synchronous>, transform_indices = @transform_4, window_bounds = array<i64: 128, 128>}, {pipeline_mode = #tpu.pipeline_mode<synchronous>, transform_indices = @transform_5, window_bounds = array<i64: 1, 128>}, {pipeline_mode = #tpu.pipeline_mode<synchronous>, transform_indices = @transform_6, window_bounds = array<i64: 1, 128>}, {pipeline_mode = #tpu.pipeline_mode<synchronous>, transform_indices = @transform_7, window_bounds = array<i64: 128, 128>}, {pipeline_mode = #tpu.pipeline_mode<synchronous>, transform_indices = @transform_8, window_bounds = array<i64: 1, 128>}, {transform_indices = @transform_9, window_bounds = array<i64: 8, 128>}]} {
    %c0 = arith.constant 0 : index
    %c0_0 = arith.constant 0 : index
    %c0_1 = arith.constant 0 : index
    %0 = vector.load %arg2[%c0, %c0_0, %c0_1] : memref<2x128x512xf32, #tpu.memory_space<vmem>>, vector<1x128x512xf32>
    %1 = vector.shape_cast %0 : vector<1x128x512xf32> to vector<128x512xf32>
    %c0_2 = arith.constant 0 : index
    %c0_3 = arith.constant 0 : index
    %c0_4 = arith.constant 0 : index
    %2 = vector.load %arg3[%c0_2, %c0_3, %c0_4] : memref<2x128x512xf32, #tpu.memory_space<vmem>>, vector<1x128x512xf32>
    %3 = vector.shape_cast %2 : vector<1x128x512xf32> to vector<128x512xf32>
    %c0_5 = arith.constant 0 : index
    %c0_6 = arith.constant 0 : index
    %c0_7 = arith.constant 0 : index
    %4 = vector.load %arg4[%c0_5, %c0_6, %c0_7] : memref<2x1x512xf32, #tpu.memory_space<vmem>>, vector<1x1x512xf32>
    %5 = vector.shape_cast %4 : vector<1x1x512xf32> to vector<1x512xf32>
    %c0_8 = arith.constant 0 : index
    %c0_9 = arith.constant 0 : index
    %c0_10 = arith.constant 0 : index
    %6 = vector.load %arg1[%c0_8, %c0_9, %c0_10] : memref<8x8x128xf32, #tpu.memory_space<vmem>>, vector<8x8x128xf32>
    %7 = vector.shape_cast %6 : vector<8x8x128xf32> to vector<64x128xf32>
    %cst = arith.constant dense<0.000000e+00> : vector<64x512xf32>
    %8 = tpu.matmul %7, %1, %cst {dimension_numbers = #tpu.dot_dimension_numbers<[1], [0], [0], [1], [0, 0, 1, 1], [], []>} : vector<64x128xf32>, vector<128x512xf32>, vector<64x512xf32> -> vector<64x512xf32>
    %9 = vector.broadcast %5 : vector<1x512xf32> to vector<64x512xf32>
    %10 = arith.addf %8, %9 : vector<64x512xf32>
    %11 = vector.shape_cast %10 : vector<64x512xf32> to vector<8x8x512xf32>
    %c0_11 = arith.constant 0 : index
    %c0_12 = arith.constant 0 : index
    %c0_13 = arith.constant 0 : index
    %12 = vector.load %arg12[%c0_11, %c0_12, %c0_13] : memref<8x8x512xf32, #tpu.memory_space<vmem>>, vector<8x8x512xf32>
    tpu.vector_store %arg12[%c0_11, %c0_12, %c0_13], %11 {strides = array<i32>} : memref<8x8x512xf32, #tpu.memory_space<vmem>>, vector<8x8x512xf32>,
    %cst_14 = arith.constant 0.000000e+00 : f32
    %13 = vector.broadcast %cst_14 : f32 to vector<8x128xf32>
    %cst_15 = arith.constant 0.000000e+00 : f32
    %14 = vector.broadcast %cst_15 : f32 to vector<8x128xf32>
    %c0_i32 = arith.constant 0 : i32
    %15 = arith.index_cast %c0_i32 : i32 to index
    %c0_16 = arith.constant 0 : index
    %c0_17 = arith.constant 0 : index
    %16 = vector.load %arg12[%15, %c0_16, %c0_17] : memref<8x8x512xf32, #tpu.memory_space<vmem>>, vector<1x8x512xf32>
    %17 = vector.shape_cast %16 : vector<1x8x512xf32> to vector<8x512xf32>
    %cst_18 = arith.constant dense<0.000000e+00> : vector<8x512xf32>
    %18 = tpu.matmul %13, %3, %cst_18 {dimension_numbers = #tpu.dot_dimension_numbers<[1], [0], [0], [1], [0, 0, 1, 1], [], []>} : vector<8x128xf32>, vector<128x512xf32>, vector<8x512xf32> -> vector<8x512xf32>
    %19 = arith.addf %17, %18 : vector<8x512xf32>
    %20 = vector.extract_strided_slice %19 {offsets = [0, 0], sizes = [8, 128], strides = [1, 1]} : vector<8x512xf32> to vector<8x128xf32>
    %21 = arith.negf %20 : vector<8x128xf32>
    %22 = math.exp %21 : vector<8x128xf32>
    %cst_19 = arith.constant 1.000000e+00 : f32
    %23 = vector.broadcast %cst_19 : f32 to vector<8x128xf32>
    %24 = arith.addf %23, %22 : vector<8x128xf32>
    %25 = arith.divf %23, %24 : vector<8x128xf32>
    %26 = vector.extract_strided_slice %19 {offsets = [0, 128], sizes = [8, 128], strides = [1, 1]} : vector<8x512xf32> to vector<8x128xf32>
    %27 = arith.negf %26 : vector<8x128xf32>
    %28 = math.exp %27 : vector<8x128xf32>
    %cst_20 = arith.constant 1.000000e+00 : f32
    %29 = vector.broadcast %cst_20 : f32 to vector<8x128xf32>
    %30 = arith.addf %29, %28 : vector<8x128xf32>
    %31 = arith.divf %29, %30 : vector<8x128xf32>
    %32 = vector.extract_strided_slice %19 {offsets = [0, 256], sizes = [8, 128], strides = [1, 1]} : vector<8x512xf32> to vector<8x128xf32>
    %33 = math.tanh %32 : vector<8x128xf32>
    %34 = vector.extract_strided_slice %19 {offsets = [0, 384], sizes = [8, 128], strides = [1, 1]} : vector<8x512xf32> to vector<8x128xf32>
    %35 = arith.negf %34 : vector<8x128xf32>
    %36 = math.exp %35 : vector<8x128xf32>
    %cst_21 = arith.constant 1.000000e+00 : f32
    %37 = vector.broadcast %cst_21 : f32 to vector<8x128xf32>
    %38 = arith.addf %37, %36 : vector<8x128xf32>
    %39 = arith.divf %37, %38 : vector<8x128xf32>
    %40 = arith.mulf %31, %14 : vector<8x128xf32>
    %41 = arith.mulf %25, %33 : vector<8x128xf32>
    %42 = arith.addf %40, %41 : vector<8x128xf32>
    %43 = math.tanh %42 : vector<8x128xf32>
    %44 = arith.mulf %39, %43 : vector<8x128xf32>
    %45 = arith.index_cast %c0_i32 : i32 to index
    %c0_22 = arith.constant 0 : index
    %c0_23 = arith.constant 0 : index
    %46 = vector.load %arg11[%45, %c0_22, %c0_23] : memref<8x8x128xf32, #tpu.memory_space<vmem>>, vector<1x8x128xf32>
    %47 = vector.shape_cast %46 : vector<1x8x128xf32> to vector<8x128xf32>
    %48 = vector.shape_cast %44 : vector<8x128xf32> to vector<1x8x128xf32>
    tpu.vector_store %arg11[%45, %c0_22, %c0_23], %48 {strides = array<i32>} : memref<8x8x128xf32, #tpu.memory_space<vmem>>, vector<1x8x128xf32>,
    %c1_i32 = arith.constant 1 : i32
    %49 = arith.index_cast %c1_i32 : i32 to index
    %c0_24 = arith.constant 0 : index
    %c0_25 = arith.constant 0 : index
    %50 = vector.load %arg12[%49, %c0_24, %c0_25] : memref<8x8x512xf32, #tpu.memory_space<vmem>>, vector<1x8x512xf32>
    %51 = vector.shape_cast %50 : vector<1x8x512xf32> to vector<8x512xf32>
    %cst_26 = arith.constant dense<0.000000e+00> : vector<8x512xf32>
    %52 = tpu.matmul %44, %3, %cst_26 {dimension_numbers = #tpu.dot_dimension_numbers<[1], [0], [0], [1], [0, 0, 1, 1], [], []>} : vector<8x128xf32>, vector<128x512xf32>, vector<8x512xf32> -> vector<8x512xf32>
    %53 = arith.addf %51, %52 : vector<8x512xf32>
    %54 = vector.extract_strided_slice %53 {offsets = [0, 0], sizes = [8, 128], strides = [1, 1]} : vector<8x512xf32> to vector<8x128xf32>
    %55 = arith.negf %54 : vector<8x128xf32>
    %56 = math.exp %55 : vector<8x128xf32>
    %cst_27 = arith.constant 1.000000e+00 : f32
    %57 = vector.broadcast %cst_27 : f32 to vector<8x128xf32>
    %58 = arith.addf %57, %56 : vector<8x128xf32>
    %59 = arith.divf %57, %58 : vector<8x128xf32>
    %60 = vector.extract_strided_slice %53 {offsets = [0, 128], sizes = [8, 128], strides = [1, 1]} : vector<8x512xf32> to vector<8x128xf32>
    %61 = arith.negf %60 : vector<8x128xf32>
    %62 = math.exp %61 : vector<8x128xf32>
    %cst_28 = arith.constant 1.000000e+00 : f32
    %63 = vector.broadcast %cst_28 : f32 to vector<8x128xf32>
    %64 = arith.addf %63, %62 : vector<8x128xf32>
    %65 = arith.divf %63, %64 : vector<8x128xf32>
    %66 = vector.extract_strided_slice %53 {offsets = [0, 256], sizes = [8, 128], strides = [1, 1]} : vector<8x512xf32> to vector<8x128xf32>
    %67 = math.tanh %66 : vector<8x128xf32>
    %68 = vector.extract_strided_slice %53 {offsets = [0, 384], sizes = [8, 128], strides = [1, 1]} : vector<8x512xf32> to vector<8x128xf32>
    %69 = arith.negf %68 : vector<8x128xf32>
    %70 = math.exp %69 : vector<8x128xf32>
    %cst_29 = arith.constant 1.000000e+00 : f32
    %71 = vector.broadcast %cst_29 : f32 to vector<8x128xf32>
    %72 = arith.addf %71, %70 : vector<8x128xf32>
    %73 = arith.divf %71, %72 : vector<8x128xf32>
    %74 = arith.mulf %65, %42 : vector<8x128xf32>
    %75 = arith.mulf %59, %67 : vector<8x128xf32>
    %76 = arith.addf %74, %75 : vector<8x128xf32>
    %77 = math.tanh %76 : vector<8x128xf32>
    %78 = arith.mulf %73, %77 : vector<8x128xf32>
    %79 = arith.index_cast %c1_i32 : i32 to index
    %c0_30 = arith.constant 0 : index
    %c0_31 = arith.constant 0 : index
    %80 = vector.load %arg11[%79, %c0_30, %c0_31] : memref<8x8x128xf32, #tpu.memory_space<vmem>>, vector<1x8x128xf32>
    %81 = vector.shape_cast %80 : vector<1x8x128xf32> to vector<8x128xf32>
    %82 = vector.shape_cast %78 : vector<8x128xf32> to vector<1x8x128xf32>
    tpu.vector_store %arg11[%79, %c0_30, %c0_31], %82 {strides = array<i32>} : memref<8x8x128xf32, #tpu.memory_space<vmem>>, vector<1x8x128xf32>,
    %c2_i32 = arith.constant 2 : i32
    %83 = arith.index_cast %c2_i32 : i32 to index
    %c0_32 = arith.constant 0 : index
    %c0_33 = arith.constant 0 : index
    %84 = vector.load %arg12[%83, %c0_32, %c0_33] : memref<8x8x512xf32, #tpu.memory_space<vmem>>, vector<1x8x512xf32>
    %85 = vector.shape_cast %84 : vector<1x8x512xf32> to vector<8x512xf32>
    %cst_34 = arith.constant dense<0.000000e+00> : vector<8x512xf32>
    %86 = tpu.matmul %78, %3, %cst_34 {dimension_numbers = #tpu.dot_dimension_numbers<[1], [0], [0], [1], [0, 0, 1, 1], [], []>} : vector<8x128xf32>, vector<128x512xf32>, vector<8x512xf32> -> vector<8x512xf32>
    %87 = arith.addf %85, %86 : vector<8x512xf32>
    %88 = vector.extract_strided_slice %87 {offsets = [0, 0], sizes = [8, 128], strides = [1, 1]} : vector<8x512xf32> to vector<8x128xf32>
    %89 = arith.negf %88 : vector<8x128xf32>
    %90 = math.exp %89 : vector<8x128xf32>
    %cst_35 = arith.constant 1.000000e+00 : f32
    %91 = vector.broadcast %cst_35 : f32 to vector<8x128xf32>
    %92 = arith.addf %91, %90 : vector<8x128xf32>
    %93 = arith.divf %91, %92 : vector<8x128xf32>
    %94 = vector.extract_strided_slice %87 {offsets = [0, 128], sizes = [8, 128], strides = [1, 1]} : vector<8x512xf32> to vector<8x128xf32>
    %95 = arith.negf %94 : vector<8x128xf32>
    %96 = math.exp %95 : vector<8x128xf32>
    %cst_36 = arith.constant 1.000000e+00 : f32
    %97 = vector.broadcast %cst_36 : f32 to vector<8x128xf32>
    %98 = arith.addf %97, %96 : vector<8x128xf32>
    %99 = arith.divf %97, %98 : vector<8x128xf32>
    %100 = vector.extract_strided_slice %87 {offsets = [0, 256], sizes = [8, 128], strides = [1, 1]} : vector<8x512xf32> to vector<8x128xf32>
    %101 = math.tanh %100 : vector<8x128xf32>
    %102 = vector.extract_strided_slice %87 {offsets = [0, 384], sizes = [8, 128], strides = [1, 1]} : vector<8x512xf32> to vector<8x128xf32>
    %103 = arith.negf %102 : vector<8x128xf32>
    %104 = math.exp %103 : vector<8x128xf32>
    %cst_37 = arith.constant 1.000000e+00 : f32
    %105 = vector.broadcast %cst_37 : f32 to vector<8x128xf32>
    %106 = arith.addf %105, %104 : vector<8x128xf32>
    %107 = arith.divf %105, %106 : vector<8x128xf32>
    %108 = arith.mulf %99, %76 : vector<8x128xf32>
    %109 = arith.mulf %93, %101 : vector<8x128xf32>
    %110 = arith.addf %108, %109 : vector<8x128xf32>
    %111 = math.tanh %110 : vector<8x128xf32>
    %112 = arith.mulf %107, %111 : vector<8x128xf32>
    %113 = arith.index_cast %c2_i32 : i32 to index
    %c0_38 = arith.constant 0 : index
    %c0_39 = arith.constant 0 : index
    %114 = vector.load %arg11[%113, %c0_38, %c0_39] : memref<8x8x128xf32, #tpu.memory_space<vmem>>, vector<1x8x128xf32>
    %115 = vector.shape_cast %114 : vector<1x8x128xf32> to vector<8x128xf32>
    %116 = vector.shape_cast %112 : vector<8x128xf32> to vector<1x8x128xf32>
    tpu.vector_store %arg11[%113, %c0_38, %c0_39], %116 {strides = array<i32>} : memref<8x8x128xf32, #tpu.memory_space<vmem>>, vector<1x8x128xf32>,
    %c3_i32 = arith.constant 3 : i32
    %117 = arith.index_cast %c3_i32 : i32 to index
    %c0_40 = arith.constant 0 : index
    %c0_41 = arith.constant 0 : index
    %118 = vector.load %arg12[%117, %c0_40, %c0_41] : memref<8x8x512xf32, #tpu.memory_space<vmem>>, vector<1x8x512xf32>
    %119 = vector.shape_cast %118 : vector<1x8x512xf32> to vector<8x512xf32>
    %cst_42 = arith.constant dense<0.000000e+00> : vector<8x512xf32>
    %120 = tpu.matmul %112, %3, %cst_42 {dimension_numbers = #tpu.dot_dimension_numbers<[1], [0], [0], [1], [0, 0, 1, 1], [], []>} : vector<8x128xf32>, vector<128x512xf32>, vector<8x512xf32> -> vector<8x512xf32>
    %121 = arith.addf %119, %120 : vector<8x512xf32>
    %122 = vector.extract_strided_slice %121 {offsets = [0, 0], sizes = [8, 128], strides = [1, 1]} : vector<8x512xf32> to vector<8x128xf32>
    %123 = arith.negf %122 : vector<8x128xf32>
    %124 = math.exp %123 : vector<8x128xf32>
    %cst_43 = arith.constant 1.000000e+00 : f32
    %125 = vector.broadcast %cst_43 : f32 to vector<8x128xf32>
    %126 = arith.addf %125, %124 : vector<8x128xf32>
    %127 = arith.divf %125, %126 : vector<8x128xf32>
    %128 = vector.extract_strided_slice %121 {offsets = [0, 128], sizes = [8, 128], strides = [1, 1]} : vector<8x512xf32> to vector<8x128xf32>
    %129 = arith.negf %128 : vector<8x128xf32>
    %130 = math.exp %129 : vector<8x128xf32>
    %cst_44 = arith.constant 1.000000e+00 : f32
    %131 = vector.broadcast %cst_44 : f32 to vector<8x128xf32>
    %132 = arith.addf %131, %130 : vector<8x128xf32>
    %133 = arith.divf %131, %132 : vector<8x128xf32>
    %134 = vector.extract_strided_slice %121 {offsets = [0, 256], sizes = [8, 128], strides = [1, 1]} : vector<8x512xf32> to vector<8x128xf32>
    %135 = math.tanh %134 : vector<8x128xf32>
    %136 = vector.extract_strided_slice %121 {offsets = [0, 384], sizes = [8, 128], strides = [1, 1]} : vector<8x512xf32> to vector<8x128xf32>
    %137 = arith.negf %136 : vector<8x128xf32>
    %138 = math.exp %137 : vector<8x128xf32>
    %cst_45 = arith.constant 1.000000e+00 : f32
    %139 = vector.broadcast %cst_45 : f32 to vector<8x128xf32>
    %140 = arith.addf %139, %138 : vector<8x128xf32>
    %141 = arith.divf %139, %140 : vector<8x128xf32>
    %142 = arith.mulf %133, %110 : vector<8x128xf32>
    %143 = arith.mulf %127, %135 : vector<8x128xf32>
    %144 = arith.addf %142, %143 : vector<8x128xf32>
    %145 = math.tanh %144 : vector<8x128xf32>
    %146 = arith.mulf %141, %145 : vector<8x128xf32>
    %147 = arith.index_cast %c3_i32 : i32 to index
    %c0_46 = arith.constant 0 : index
    %c0_47 = arith.constant 0 : index
    %148 = vector.load %arg11[%147, %c0_46, %c0_47] : memref<8x8x128xf32, #tpu.memory_space<vmem>>, vector<1x8x128xf32>
    %149 = vector.shape_cast %148 : vector<1x8x128xf32> to vector<8x128xf32>
    %150 = vector.shape_cast %146 : vector<8x128xf32> to vector<1x8x128xf32>
    tpu.vector_store %arg11[%147, %c0_46, %c0_47], %150 {strides = array<i32>} : memref<8x8x128xf32, #tpu.memory_space<vmem>>, vector<1x8x128xf32>,
    %c4_i32 = arith.constant 4 : i32
    %151 = arith.index_cast %c4_i32 : i32 to index
    %c0_48 = arith.constant 0 : index
    %c0_49 = arith.constant 0 : index
    %152 = vector.load %arg12[%151, %c0_48, %c0_49] : memref<8x8x512xf32, #tpu.memory_space<vmem>>, vector<1x8x512xf32>
    %153 = vector.shape_cast %152 : vector<1x8x512xf32> to vector<8x512xf32>
    %cst_50 = arith.constant dense<0.000000e+00> : vector<8x512xf32>
    %154 = tpu.matmul %146, %3, %cst_50 {dimension_numbers = #tpu.dot_dimension_numbers<[1], [0], [0], [1], [0, 0, 1, 1], [], []>} : vector<8x128xf32>, vector<128x512xf32>, vector<8x512xf32> -> vector<8x512xf32>
    %155 = arith.addf %153, %154 : vector<8x512xf32>
    %156 = vector.extract_strided_slice %155 {offsets = [0, 0], sizes = [8, 128], strides = [1, 1]} : vector<8x512xf32> to vector<8x128xf32>
    %157 = arith.negf %156 : vector<8x128xf32>
    %158 = math.exp %157 : vector<8x128xf32>
    %cst_51 = arith.constant 1.000000e+00 : f32
    %159 = vector.broadcast %cst_51 : f32 to vector<8x128xf32>
    %160 = arith.addf %159, %158 : vector<8x128xf32>
    %161 = arith.divf %159, %160 : vector<8x128xf32>
    %162 = vector.extract_strided_slice %155 {offsets = [0, 128], sizes = [8, 128], strides = [1, 1]} : vector<8x512xf32> to vector<8x128xf32>
    %163 = arith.negf %162 : vector<8x128xf32>
    %164 = math.exp %163 : vector<8x128xf32>
    %cst_52 = arith.constant 1.000000e+00 : f32
    %165 = vector.broadcast %cst_52 : f32 to vector<8x128xf32>
    %166 = arith.addf %165, %164 : vector<8x128xf32>
    %167 = arith.divf %165, %166 : vector<8x128xf32>
    %168 = vector.extract_strided_slice %155 {offsets = [0, 256], sizes = [8, 128], strides = [1, 1]} : vector<8x512xf32> to vector<8x128xf32>
    %169 = math.tanh %168 : vector<8x128xf32>
    %170 = vector.extract_strided_slice %155 {offsets = [0, 384], sizes = [8, 128], strides = [1, 1]} : vector<8x512xf32> to vector<8x128xf32>
    %171 = arith.negf %170 : vector<8x128xf32>
    %172 = math.exp %171 : vector<8x128xf32>
    %cst_53 = arith.constant 1.000000e+00 : f32
    %173 = vector.broadcast %cst_53 : f32 to vector<8x128xf32>
    %174 = arith.addf %173, %172 : vector<8x128xf32>
    %175 = arith.divf %173, %174 : vector<8x128xf32>
    %176 = arith.mulf %167, %144 : vector<8x128xf32>
    %177 = arith.mulf %161, %169 : vector<8x128xf32>
    %178 = arith.addf %176, %177 : vector<8x128xf32>
    %179 = math.tanh %178 : vector<8x128xf32>
    %180 = arith.mulf %175, %179 : vector<8x128xf32>
    %181 = arith.index_cast %c4_i32 : i32 to index
    %c0_54 = arith.constant 0 : index
    %c0_55 = arith.constant 0 : index
    %182 = vector.load %arg11[%181, %c0_54, %c0_55] : memref<8x8x128xf32, #tpu.memory_space<vmem>>, vector<1x8x128xf32>
    %183 = vector.shape_cast %182 : vector<1x8x128xf32> to vector<8x128xf32>
    %184 = vector.shape_cast %180 : vector<8x128xf32> to vector<1x8x128xf32>
    tpu.vector_store %arg11[%181, %c0_54, %c0_55], %184 {strides = array<i32>} : memref<8x8x128xf32, #tpu.memory_space<vmem>>, vector<1x8x128xf32>,
    %c5_i32 = arith.constant 5 : i32
    %185 = arith.index_cast %c5_i32 : i32 to index
    %c0_56 = arith.constant 0 : index
    %c0_57 = arith.constant 0 : index
    %186 = vector.load %arg12[%185, %c0_56, %c0_57] : memref<8x8x512xf32, #tpu.memory_space<vmem>>, vector<1x8x512xf32>
    %187 = vector.shape_cast %186 : vector<1x8x512xf32> to vector<8x512xf32>
    %cst_58 = arith.constant dense<0.000000e+00> : vector<8x512xf32>
    %188 = tpu.matmul %180, %3, %cst_58 {dimension_numbers = #tpu.dot_dimension_numbers<[1], [0], [0], [1], [0, 0, 1, 1], [], []>} : vector<8x128xf32>, vector<128x512xf32>, vector<8x512xf32> -> vector<8x512xf32>
    %189 = arith.addf %187, %188 : vector<8x512xf32>
    %190 = vector.extract_strided_slice %189 {offsets = [0, 0], sizes = [8, 128], strides = [1, 1]} : vector<8x512xf32> to vector<8x128xf32>
    %191 = arith.negf %190 : vector<8x128xf32>
    %192 = math.exp %191 : vector<8x128xf32>
    %cst_59 = arith.constant 1.000000e+00 : f32
    %193 = vector.broadcast %cst_59 : f32 to vector<8x128xf32>
    %194 = arith.addf %193, %192 : vector<8x128xf32>
    %195 = arith.divf %193, %194 : vector<8x128xf32>
    %196 = vector.extract_strided_slice %189 {offsets = [0, 128], sizes = [8, 128], strides = [1, 1]} : vector<8x512xf32> to vector<8x128xf32>
    %197 = arith.negf %196 : vector<8x128xf32>
    %198 = math.exp %197 : vector<8x128xf32>
    %cst_60 = arith.constant 1.000000e+00 : f32
    %199 = vector.broadcast %cst_60 : f32 to vector<8x128xf32>
    %200 = arith.addf %199, %198 : vector<8x128xf32>
    %201 = arith.divf %199, %200 : vector<8x128xf32>
    %202 = vector.extract_strided_slice %189 {offsets = [0, 256], sizes = [8, 128], strides = [1, 1]} : vector<8x512xf32> to vector<8x128xf32>
    %203 = math.tanh %202 : vector<8x128xf32>
    %204 = vector.extract_strided_slice %189 {offsets = [0, 384], sizes = [8, 128], strides = [1, 1]} : vector<8x512xf32> to vector<8x128xf32>
    %205 = arith.negf %204 : vector<8x128xf32>
    %206 = math.exp %205 : vector<8x128xf32>
    %cst_61 = arith.constant 1.000000e+00 : f32
    %207 = vector.broadcast %cst_61 : f32 to vector<8x128xf32>
    %208 = arith.addf %207, %206 : vector<8x128xf32>
    %209 = arith.divf %207, %208 : vector<8x128xf32>
    %210 = arith.mulf %201, %178 : vector<8x128xf32>
    %211 = arith.mulf %195, %203 : vector<8x128xf32>
    %212 = arith.addf %210, %211 : vector<8x128xf32>
    %213 = math.tanh %212 : vector<8x128xf32>
    %214 = arith.mulf %209, %213 : vector<8x128xf32>
    %215 = arith.index_cast %c5_i32 : i32 to index
    %c0_62 = arith.constant 0 : index
    %c0_63 = arith.constant 0 : index
    %216 = vector.load %arg11[%215, %c0_62, %c0_63] : memref<8x8x128xf32, #tpu.memory_space<vmem>>, vector<1x8x128xf32>
    %217 = vector.shape_cast %216 : vector<1x8x128xf32> to vector<8x128xf32>
    %218 = vector.shape_cast %214 : vector<8x128xf32> to vector<1x8x128xf32>
    tpu.vector_store %arg11[%215, %c0_62, %c0_63], %218 {strides = array<i32>} : memref<8x8x128xf32, #tpu.memory_space<vmem>>, vector<1x8x128xf32>,
    %c6_i32 = arith.constant 6 : i32
    %219 = arith.index_cast %c6_i32 : i32 to index
    %c0_64 = arith.constant 0 : index
    %c0_65 = arith.constant 0 : index
    %220 = vector.load %arg12[%219, %c0_64, %c0_65] : memref<8x8x512xf32, #tpu.memory_space<vmem>>, vector<1x8x512xf32>
    %221 = vector.shape_cast %220 : vector<1x8x512xf32> to vector<8x512xf32>
    %cst_66 = arith.constant dense<0.000000e+00> : vector<8x512xf32>
    %222 = tpu.matmul %214, %3, %cst_66 {dimension_numbers = #tpu.dot_dimension_numbers<[1], [0], [0], [1], [0, 0, 1, 1], [], []>} : vector<8x128xf32>, vector<128x512xf32>, vector<8x512xf32> -> vector<8x512xf32>
    %223 = arith.addf %221, %222 : vector<8x512xf32>
    %224 = vector.extract_strided_slice %223 {offsets = [0, 0], sizes = [8, 128], strides = [1, 1]} : vector<8x512xf32> to vector<8x128xf32>
    %225 = arith.negf %224 : vector<8x128xf32>
    %226 = math.exp %225 : vector<8x128xf32>
    %cst_67 = arith.constant 1.000000e+00 : f32
    %227 = vector.broadcast %cst_67 : f32 to vector<8x128xf32>
    %228 = arith.addf %227, %226 : vector<8x128xf32>
    %229 = arith.divf %227, %228 : vector<8x128xf32>
    %230 = vector.extract_strided_slice %223 {offsets = [0, 128], sizes = [8, 128], strides = [1, 1]} : vector<8x512xf32> to vector<8x128xf32>
    %231 = arith.negf %230 : vector<8x128xf32>
    %232 = math.exp %231 : vector<8x128xf32>
    %cst_68 = arith.constant 1.000000e+00 : f32
    %233 = vector.broadcast %cst_68 : f32 to vector<8x128xf32>
    %234 = arith.addf %233, %232 : vector<8x128xf32>
    %235 = arith.divf %233, %234 : vector<8x128xf32>
    %236 = vector.extract_strided_slice %223 {offsets = [0, 256], sizes = [8, 128], strides = [1, 1]} : vector<8x512xf32> to vector<8x128xf32>
    %237 = math.tanh %236 : vector<8x128xf32>
    %238 = vector.extract_strided_slice %223 {offsets = [0, 384], sizes = [8, 128], strides = [1, 1]} : vector<8x512xf32> to vector<8x128xf32>
    %239 = arith.negf %238 : vector<8x128xf32>
    %240 = math.exp %239 : vector<8x128xf32>
    %cst_69 = arith.constant 1.000000e+00 : f32
    %241 = vector.broadcast %cst_69 : f32 to vector<8x128xf32>
    %242 = arith.addf %241, %240 : vector<8x128xf32>
    %243 = arith.divf %241, %242 : vector<8x128xf32>
    %244 = arith.mulf %235, %212 : vector<8x128xf32>
    %245 = arith.mulf %229, %237 : vector<8x128xf32>
    %246 = arith.addf %244, %245 : vector<8x128xf32>
    %247 = math.tanh %246 : vector<8x128xf32>
    %248 = arith.mulf %243, %247 : vector<8x128xf32>
    %249 = arith.index_cast %c6_i32 : i32 to index
    %c0_70 = arith.constant 0 : index
    %c0_71 = arith.constant 0 : index
    %250 = vector.load %arg11[%249, %c0_70, %c0_71] : memref<8x8x128xf32, #tpu.memory_space<vmem>>, vector<1x8x128xf32>
    %251 = vector.shape_cast %250 : vector<1x8x128xf32> to vector<8x128xf32>
    %252 = vector.shape_cast %248 : vector<8x128xf32> to vector<1x8x128xf32>
    tpu.vector_store %arg11[%249, %c0_70, %c0_71], %252 {strides = array<i32>} : memref<8x8x128xf32, #tpu.memory_space<vmem>>, vector<1x8x128xf32>,
    %c7_i32 = arith.constant 7 : i32
    %253 = arith.index_cast %c7_i32 : i32 to index
    %c0_72 = arith.constant 0 : index
    %c0_73 = arith.constant 0 : index
    %254 = vector.load %arg12[%253, %c0_72, %c0_73] : memref<8x8x512xf32, #tpu.memory_space<vmem>>, vector<1x8x512xf32>
    %255 = vector.shape_cast %254 : vector<1x8x512xf32> to vector<8x512xf32>
    %cst_74 = arith.constant dense<0.000000e+00> : vector<8x512xf32>
    %256 = tpu.matmul %248, %3, %cst_74 {dimension_numbers = #tpu.dot_dimension_numbers<[1], [0], [0], [1], [0, 0, 1, 1], [], []>} : vector<8x128xf32>, vector<128x512xf32>, vector<8x512xf32> -> vector<8x512xf32>
    %257 = arith.addf %255, %256 : vector<8x512xf32>
    %258 = vector.extract_strided_slice %257 {offsets = [0, 0], sizes = [8, 128], strides = [1, 1]} : vector<8x512xf32> to vector<8x128xf32>
    %259 = arith.negf %258 : vector<8x128xf32>
    %260 = math.exp %259 : vector<8x128xf32>
    %cst_75 = arith.constant 1.000000e+00 : f32
    %261 = vector.broadcast %cst_75 : f32 to vector<8x128xf32>
    %262 = arith.addf %261, %260 : vector<8x128xf32>
    %263 = arith.divf %261, %262 : vector<8x128xf32>
    %264 = vector.extract_strided_slice %257 {offsets = [0, 128], sizes = [8, 128], strides = [1, 1]} : vector<8x512xf32> to vector<8x128xf32>
    %265 = arith.negf %264 : vector<8x128xf32>
    %266 = math.exp %265 : vector<8x128xf32>
    %cst_76 = arith.constant 1.000000e+00 : f32
    %267 = vector.broadcast %cst_76 : f32 to vector<8x128xf32>
    %268 = arith.addf %267, %266 : vector<8x128xf32>
    %269 = arith.divf %267, %268 : vector<8x128xf32>
    %270 = vector.extract_strided_slice %257 {offsets = [0, 256], sizes = [8, 128], strides = [1, 1]} : vector<8x512xf32> to vector<8x128xf32>
    %271 = math.tanh %270 : vector<8x128xf32>
    %272 = vector.extract_strided_slice %257 {offsets = [0, 384], sizes = [8, 128], strides = [1, 1]} : vector<8x512xf32> to vector<8x128xf32>
    %273 = arith.negf %272 : vector<8x128xf32>
    %274 = math.exp %273 : vector<8x128xf32>
    %cst_77 = arith.constant 1.000000e+00 : f32
    %275 = vector.broadcast %cst_77 : f32 to vector<8x128xf32>
    %276 = arith.addf %275, %274 : vector<8x128xf32>
    %277 = arith.divf %275, %276 : vector<8x128xf32>
    %278 = arith.mulf %269, %246 : vector<8x128xf32>
    %279 = arith.mulf %263, %271 : vector<8x128xf32>
    %280 = arith.addf %278, %279 : vector<8x128xf32>
    %281 = math.tanh %280 : vector<8x128xf32>
    %282 = arith.mulf %277, %281 : vector<8x128xf32>
    %283 = arith.index_cast %c7_i32 : i32 to index
    %c0_78 = arith.constant 0 : index
    %c0_79 = arith.constant 0 : index
    %284 = vector.load %arg11[%283, %c0_78, %c0_79] : memref<8x8x128xf32, #tpu.memory_space<vmem>>, vector<1x8x128xf32>
    %285 = vector.shape_cast %284 : vector<1x8x128xf32> to vector<8x128xf32>
    %286 = vector.shape_cast %282 : vector<8x128xf32> to vector<1x8x128xf32>
    tpu.vector_store %arg11[%283, %c0_78, %c0_79], %286 {strides = array<i32>} : memref<8x8x128xf32, #tpu.memory_space<vmem>>, vector<1x8x128xf32>,
    %c8_i32 = arith.constant 8 : i32
    %c1 = arith.constant 1 : index
    %c0_80 = arith.constant 0 : index
    %c0_81 = arith.constant 0 : index
    %287 = vector.load %arg2[%c1, %c0_80, %c0_81] : memref<2x128x512xf32, #tpu.memory_space<vmem>>, vector<1x128x512xf32>
    %288 = vector.shape_cast %287 : vector<1x128x512xf32> to vector<128x512xf32>
    %c1_82 = arith.constant 1 : index
    %c0_83 = arith.constant 0 : index
    %c0_84 = arith.constant 0 : index
    %289 = vector.load %arg3[%c1_82, %c0_83, %c0_84] : memref<2x128x512xf32, #tpu.memory_space<vmem>>, vector<1x128x512xf32>
    %290 = vector.shape_cast %289 : vector<1x128x512xf32> to vector<128x512xf32>
    %c1_85 = arith.constant 1 : index
    %c0_86 = arith.constant 0 : index
    %c0_87 = arith.constant 0 : index
    %291 = vector.load %arg4[%c1_85, %c0_86, %c0_87] : memref<2x1x512xf32, #tpu.memory_space<vmem>>, vector<1x1x512xf32>
    %292 = vector.shape_cast %291 : vector<1x1x512xf32> to vector<1x512xf32>
    %c0_88 = arith.constant 0 : index
    %c0_89 = arith.constant 0 : index
    %c0_90 = arith.constant 0 : index
    %293 = vector.load %arg11[%c0_88, %c0_89, %c0_90] : memref<8x8x128xf32, #tpu.memory_space<vmem>>, vector<8x8x128xf32>
    %294 = vector.shape_cast %293 : vector<8x8x128xf32> to vector<64x128xf32>
    %cst_91 = arith.constant dense<0.000000e+00> : vector<64x512xf32>
    %295 = tpu.matmul %294, %288, %cst_91 {dimension_numbers = #tpu.dot_dimension_numbers<[1], [0], [0], [1], [0, 0, 1, 1], [], []>} : vector<64x128xf32>, vector<128x512xf32>, vector<64x512xf32> -> vector<64x512xf32>
    %296 = vector.broadcast %292 : vector<1x512xf32> to vector<64x512xf32>
    %297 = arith.addf %295, %296 : vector<64x512xf32>
    %298 = vector.shape_cast %297 : vector<64x512xf32> to vector<8x8x512xf32>
    %c0_92 = arith.constant 0 : index
    %c0_93 = arith.constant 0 : index
    %c0_94 = arith.constant 0 : index
    %299 = vector.load %arg12[%c0_92, %c0_93, %c0_94] : memref<8x8x512xf32, #tpu.memory_space<vmem>>, vector<8x8x512xf32>
    tpu.vector_store %arg12[%c0_92, %c0_93, %c0_94], %298 {strides = array<i32>} : memref<8x8x512xf32, #tpu.memory_space<vmem>>, vector<8x8x512xf32>,
    %cst_95 = arith.constant 0.000000e+00 : f32
    %300 = vector.broadcast %cst_95 : f32 to vector<8x128xf32>
    %cst_96 = arith.constant 0.000000e+00 : f32
    %301 = vector.broadcast %cst_96 : f32 to vector<8x128xf32>
    %c0_i32_97 = arith.constant 0 : i32
    %302 = arith.index_cast %c0_i32_97 : i32 to index
    %c0_98 = arith.constant 0 : index
    %c0_99 = arith.constant 0 : index
    %303 = vector.load %arg12[%302, %c0_98, %c0_99] : memref<8x8x512xf32, #tpu.memory_space<vmem>>, vector<1x8x512xf32>
    %304 = vector.shape_cast %303 : vector<1x8x512xf32> to vector<8x512xf32>
    %cst_100 = arith.constant dense<0.000000e+00> : vector<8x512xf32>
    %305 = tpu.matmul %300, %290, %cst_100 {dimension_numbers = #tpu.dot_dimension_numbers<[1], [0], [0], [1], [0, 0, 1, 1], [], []>} : vector<8x128xf32>, vector<128x512xf32>, vector<8x512xf32> -> vector<8x512xf32>
    %306 = arith.addf %304, %305 : vector<8x512xf32>
    %307 = vector.extract_strided_slice %306 {offsets = [0, 0], sizes = [8, 128], strides = [1, 1]} : vector<8x512xf32> to vector<8x128xf32>
    %308 = arith.negf %307 : vector<8x128xf32>
    %309 = math.exp %308 : vector<8x128xf32>
    %cst_101 = arith.constant 1.000000e+00 : f32
    %310 = vector.broadcast %cst_101 : f32 to vector<8x128xf32>
    %311 = arith.addf %310, %309 : vector<8x128xf32>
    %312 = arith.divf %310, %311 : vector<8x128xf32>
    %313 = vector.extract_strided_slice %306 {offsets = [0, 128], sizes = [8, 128], strides = [1, 1]} : vector<8x512xf32> to vector<8x128xf32>
    %314 = arith.negf %313 : vector<8x128xf32>
    %315 = math.exp %314 : vector<8x128xf32>
    %cst_102 = arith.constant 1.000000e+00 : f32
    %316 = vector.broadcast %cst_102 : f32 to vector<8x128xf32>
    %317 = arith.addf %316, %315 : vector<8x128xf32>
    %318 = arith.divf %316, %317 : vector<8x128xf32>
    %319 = vector.extract_strided_slice %306 {offsets = [0, 256], sizes = [8, 128], strides = [1, 1]} : vector<8x512xf32> to vector<8x128xf32>
    %320 = math.tanh %319 : vector<8x128xf32>
    %321 = vector.extract_strided_slice %306 {offsets = [0, 384], sizes = [8, 128], strides = [1, 1]} : vector<8x512xf32> to vector<8x128xf32>
    %322 = arith.negf %321 : vector<8x128xf32>
    %323 = math.exp %322 : vector<8x128xf32>
    %cst_103 = arith.constant 1.000000e+00 : f32
    %324 = vector.broadcast %cst_103 : f32 to vector<8x128xf32>
    %325 = arith.addf %324, %323 : vector<8x128xf32>
    %326 = arith.divf %324, %325 : vector<8x128xf32>
    %327 = arith.mulf %318, %301 : vector<8x128xf32>
    %328 = arith.mulf %312, %320 : vector<8x128xf32>
    %329 = arith.addf %327, %328 : vector<8x128xf32>
    %330 = math.tanh %329 : vector<8x128xf32>
    %331 = arith.mulf %326, %330 : vector<8x128xf32>
    %332 = arith.index_cast %c0_i32_97 : i32 to index
    %c0_104 = arith.constant 0 : index
    %c0_105 = arith.constant 0 : index
    %333 = vector.load %arg11[%332, %c0_104, %c0_105] : memref<8x8x128xf32, #tpu.memory_space<vmem>>, vector<1x8x128xf32>
    %334 = vector.shape_cast %333 : vector<1x8x128xf32> to vector<8x128xf32>
    %335 = vector.shape_cast %331 : vector<8x128xf32> to vector<1x8x128xf32>
    tpu.vector_store %arg11[%332, %c0_104, %c0_105], %335 {strides = array<i32>} : memref<8x8x128xf32, #tpu.memory_space<vmem>>, vector<1x8x128xf32>,
    %c1_i32_106 = arith.constant 1 : i32
    %336 = arith.index_cast %c1_i32_106 : i32 to index
    %c0_107 = arith.constant 0 : index
    %c0_108 = arith.constant 0 : index
    %337 = vector.load %arg12[%336, %c0_107, %c0_108] : memref<8x8x512xf32, #tpu.memory_space<vmem>>, vector<1x8x512xf32>
    %338 = vector.shape_cast %337 : vector<1x8x512xf32> to vector<8x512xf32>
    %cst_109 = arith.constant dense<0.000000e+00> : vector<8x512xf32>
    %339 = tpu.matmul %331, %290, %cst_109 {dimension_numbers = #tpu.dot_dimension_numbers<[1], [0], [0], [1], [0, 0, 1, 1], [], []>} : vector<8x128xf32>, vector<128x512xf32>, vector<8x512xf32> -> vector<8x512xf32>
    %340 = arith.addf %338, %339 : vector<8x512xf32>
    %341 = vector.extract_strided_slice %340 {offsets = [0, 0], sizes = [8, 128], strides = [1, 1]} : vector<8x512xf32> to vector<8x128xf32>
    %342 = arith.negf %341 : vector<8x128xf32>
    %343 = math.exp %342 : vector<8x128xf32>
    %cst_110 = arith.constant 1.000000e+00 : f32
    %344 = vector.broadcast %cst_110 : f32 to vector<8x128xf32>
    %345 = arith.addf %344, %343 : vector<8x128xf32>
    %346 = arith.divf %344, %345 : vector<8x128xf32>
    %347 = vector.extract_strided_slice %340 {offsets = [0, 128], sizes = [8, 128], strides = [1, 1]} : vector<8x512xf32> to vector<8x128xf32>
    %348 = arith.negf %347 : vector<8x128xf32>
    %349 = math.exp %348 : vector<8x128xf32>
    %cst_111 = arith.constant 1.000000e+00 : f32
    %350 = vector.broadcast %cst_111 : f32 to vector<8x128xf32>
    %351 = arith.addf %350, %349 : vector<8x128xf32>
    %352 = arith.divf %350, %351 : vector<8x128xf32>
    %353 = vector.extract_strided_slice %340 {offsets = [0, 256], sizes = [8, 128], strides = [1, 1]} : vector<8x512xf32> to vector<8x128xf32>
    %354 = math.tanh %353 : vector<8x128xf32>
    %355 = vector.extract_strided_slice %340 {offsets = [0, 384], sizes = [8, 128], strides = [1, 1]} : vector<8x512xf32> to vector<8x128xf32>
    %356 = arith.negf %355 : vector<8x128xf32>
    %357 = math.exp %356 : vector<8x128xf32>
    %cst_112 = arith.constant 1.000000e+00 : f32
    %358 = vector.broadcast %cst_112 : f32 to vector<8x128xf32>
    %359 = arith.addf %358, %357 : vector<8x128xf32>
    %360 = arith.divf %358, %359 : vector<8x128xf32>
    %361 = arith.mulf %352, %329 : vector<8x128xf32>
    %362 = arith.mulf %346, %354 : vector<8x128xf32>
    %363 = arith.addf %361, %362 : vector<8x128xf32>
    %364 = math.tanh %363 : vector<8x128xf32>
    %365 = arith.mulf %360, %364 : vector<8x128xf32>
    %366 = arith.index_cast %c1_i32_106 : i32 to index
    %c0_113 = arith.constant 0 : index
    %c0_114 = arith.constant 0 : index
    %367 = vector.load %arg11[%366, %c0_113, %c0_114] : memref<8x8x128xf32, #tpu.memory_space<vmem>>, vector<1x8x128xf32>
    %368 = vector.shape_cast %367 : vector<1x8x128xf32> to vector<8x128xf32>
    %369 = vector.shape_cast %365 : vector<8x128xf32> to vector<1x8x128xf32>
    tpu.vector_store %arg11[%366, %c0_113, %c0_114], %369 {strides = array<i32>} : memref<8x8x128xf32, #tpu.memory_space<vmem>>, vector<1x8x128xf32>,
    %c2_i32_115 = arith.constant 2 : i32
    %370 = arith.index_cast %c2_i32_115 : i32 to index
    %c0_116 = arith.constant 0 : index
    %c0_117 = arith.constant 0 : index
    %371 = vector.load %arg12[%370, %c0_116, %c0_117] : memref<8x8x512xf32, #tpu.memory_space<vmem>>, vector<1x8x512xf32>
    %372 = vector.shape_cast %371 : vector<1x8x512xf32> to vector<8x512xf32>
    %cst_118 = arith.constant dense<0.000000e+00> : vector<8x512xf32>
    %373 = tpu.matmul %365, %290, %cst_118 {dimension_numbers = #tpu.dot_dimension_numbers<[1], [0], [0], [1], [0, 0, 1, 1], [], []>} : vector<8x128xf32>, vector<128x512xf32>, vector<8x512xf32> -> vector<8x512xf32>
    %374 = arith.addf %372, %373 : vector<8x512xf32>
    %375 = vector.extract_strided_slice %374 {offsets = [0, 0], sizes = [8, 128], strides = [1, 1]} : vector<8x512xf32> to vector<8x128xf32>
    %376 = arith.negf %375 : vector<8x128xf32>
    %377 = math.exp %376 : vector<8x128xf32>
    %cst_119 = arith.constant 1.000000e+00 : f32
    %378 = vector.broadcast %cst_119 : f32 to vector<8x128xf32>
    %379 = arith.addf %378, %377 : vector<8x128xf32>
    %380 = arith.divf %378, %379 : vector<8x128xf32>
    %381 = vector.extract_strided_slice %374 {offsets = [0, 128], sizes = [8, 128], strides = [1, 1]} : vector<8x512xf32> to vector<8x128xf32>
    %382 = arith.negf %381 : vector<8x128xf32>
    %383 = math.exp %382 : vector<8x128xf32>
    %cst_120 = arith.constant 1.000000e+00 : f32
    %384 = vector.broadcast %cst_120 : f32 to vector<8x128xf32>
    %385 = arith.addf %384, %383 : vector<8x128xf32>
    %386 = arith.divf %384, %385 : vector<8x128xf32>
    %387 = vector.extract_strided_slice %374 {offsets = [0, 256], sizes = [8, 128], strides = [1, 1]} : vector<8x512xf32> to vector<8x128xf32>
    %388 = math.tanh %387 : vector<8x128xf32>
    %389 = vector.extract_strided_slice %374 {offsets = [0, 384], sizes = [8, 128], strides = [1, 1]} : vector<8x512xf32> to vector<8x128xf32>
    %390 = arith.negf %389 : vector<8x128xf32>
    %391 = math.exp %390 : vector<8x128xf32>
    %cst_121 = arith.constant 1.000000e+00 : f32
    %392 = vector.broadcast %cst_121 : f32 to vector<8x128xf32>
    %393 = arith.addf %392, %391 : vector<8x128xf32>
    %394 = arith.divf %392, %393 : vector<8x128xf32>
    %395 = arith.mulf %386, %363 : vector<8x128xf32>
    %396 = arith.mulf %380, %388 : vector<8x128xf32>
    %397 = arith.addf %395, %396 : vector<8x128xf32>
    %398 = math.tanh %397 : vector<8x128xf32>
    %399 = arith.mulf %394, %398 : vector<8x128xf32>
    %400 = arith.index_cast %c2_i32_115 : i32 to index
    %c0_122 = arith.constant 0 : index
    %c0_123 = arith.constant 0 : index
    %401 = vector.load %arg11[%400, %c0_122, %c0_123] : memref<8x8x128xf32, #tpu.memory_space<vmem>>, vector<1x8x128xf32>
    %402 = vector.shape_cast %401 : vector<1x8x128xf32> to vector<8x128xf32>
    %403 = vector.shape_cast %399 : vector<8x128xf32> to vector<1x8x128xf32>
    tpu.vector_store %arg11[%400, %c0_122, %c0_123], %403 {strides = array<i32>} : memref<8x8x128xf32, #tpu.memory_space<vmem>>, vector<1x8x128xf32>,
    %c3_i32_124 = arith.constant 3 : i32
    %404 = arith.index_cast %c3_i32_124 : i32 to index
    %c0_125 = arith.constant 0 : index
    %c0_126 = arith.constant 0 : index
    %405 = vector.load %arg12[%404, %c0_125, %c0_126] : memref<8x8x512xf32, #tpu.memory_space<vmem>>, vector<1x8x512xf32>
    %406 = vector.shape_cast %405 : vector<1x8x512xf32> to vector<8x512xf32>
    %cst_127 = arith.constant dense<0.000000e+00> : vector<8x512xf32>
    %407 = tpu.matmul %399, %290, %cst_127 {dimension_numbers = #tpu.dot_dimension_numbers<[1], [0], [0], [1], [0, 0, 1, 1], [], []>} : vector<8x128xf32>, vector<128x512xf32>, vector<8x512xf32> -> vector<8x512xf32>
    %408 = arith.addf %406, %407 : vector<8x512xf32>
    %409 = vector.extract_strided_slice %408 {offsets = [0, 0], sizes = [8, 128], strides = [1, 1]} : vector<8x512xf32> to vector<8x128xf32>
    %410 = arith.negf %409 : vector<8x128xf32>
    %411 = math.exp %410 : vector<8x128xf32>
    %cst_128 = arith.constant 1.000000e+00 : f32
    %412 = vector.broadcast %cst_128 : f32 to vector<8x128xf32>
    %413 = arith.addf %412, %411 : vector<8x128xf32>
    %414 = arith.divf %412, %413 : vector<8x128xf32>
    %415 = vector.extract_strided_slice %408 {offsets = [0, 128], sizes = [8, 128], strides = [1, 1]} : vector<8x512xf32> to vector<8x128xf32>
    %416 = arith.negf %415 : vector<8x128xf32>
    %417 = math.exp %416 : vector<8x128xf32>
    %cst_129 = arith.constant 1.000000e+00 : f32
    %418 = vector.broadcast %cst_129 : f32 to vector<8x128xf32>
    %419 = arith.addf %418, %417 : vector<8x128xf32>
    %420 = arith.divf %418, %419 : vector<8x128xf32>
    %421 = vector.extract_strided_slice %408 {offsets = [0, 256], sizes = [8, 128], strides = [1, 1]} : vector<8x512xf32> to vector<8x128xf32>
    %422 = math.tanh %421 : vector<8x128xf32>
    %423 = vector.extract_strided_slice %408 {offsets = [0, 384], sizes = [8, 128], strides = [1, 1]} : vector<8x512xf32> to vector<8x128xf32>
    %424 = arith.negf %423 : vector<8x128xf32>
    %425 = math.exp %424 : vector<8x128xf32>
    %cst_130 = arith.constant 1.000000e+00 : f32
    %426 = vector.broadcast %cst_130 : f32 to vector<8x128xf32>
    %427 = arith.addf %426, %425 : vector<8x128xf32>
    %428 = arith.divf %426, %427 : vector<8x128xf32>
    %429 = arith.mulf %420, %397 : vector<8x128xf32>
    %430 = arith.mulf %414, %422 : vector<8x128xf32>
    %431 = arith.addf %429, %430 : vector<8x128xf32>
    %432 = math.tanh %431 : vector<8x128xf32>
    %433 = arith.mulf %428, %432 : vector<8x128xf32>
    %434 = arith.index_cast %c3_i32_124 : i32 to index
    %c0_131 = arith.constant 0 : index
    %c0_132 = arith.constant 0 : index
    %435 = vector.load %arg11[%434, %c0_131, %c0_132] : memref<8x8x128xf32, #tpu.memory_space<vmem>>, vector<1x8x128xf32>
    %436 = vector.shape_cast %435 : vector<1x8x128xf32> to vector<8x128xf32>
    %437 = vector.shape_cast %433 : vector<8x128xf32> to vector<1x8x128xf32>
    tpu.vector_store %arg11[%434, %c0_131, %c0_132], %437 {strides = array<i32>} : memref<8x8x128xf32, #tpu.memory_space<vmem>>, vector<1x8x128xf32>,
    %c4_i32_133 = arith.constant 4 : i32
    %438 = arith.index_cast %c4_i32_133 : i32 to index
    %c0_134 = arith.constant 0 : index
    %c0_135 = arith.constant 0 : index
    %439 = vector.load %arg12[%438, %c0_134, %c0_135] : memref<8x8x512xf32, #tpu.memory_space<vmem>>, vector<1x8x512xf32>
    %440 = vector.shape_cast %439 : vector<1x8x512xf32> to vector<8x512xf32>
    %cst_136 = arith.constant dense<0.000000e+00> : vector<8x512xf32>
    %441 = tpu.matmul %433, %290, %cst_136 {dimension_numbers = #tpu.dot_dimension_numbers<[1], [0], [0], [1], [0, 0, 1, 1], [], []>} : vector<8x128xf32>, vector<128x512xf32>, vector<8x512xf32> -> vector<8x512xf32>
    %442 = arith.addf %440, %441 : vector<8x512xf32>
    %443 = vector.extract_strided_slice %442 {offsets = [0, 0], sizes = [8, 128], strides = [1, 1]} : vector<8x512xf32> to vector<8x128xf32>
    %444 = arith.negf %443 : vector<8x128xf32>
    %445 = math.exp %444 : vector<8x128xf32>
    %cst_137 = arith.constant 1.000000e+00 : f32
    %446 = vector.broadcast %cst_137 : f32 to vector<8x128xf32>
    %447 = arith.addf %446, %445 : vector<8x128xf32>
    %448 = arith.divf %446, %447 : vector<8x128xf32>
    %449 = vector.extract_strided_slice %442 {offsets = [0, 128], sizes = [8, 128], strides = [1, 1]} : vector<8x512xf32> to vector<8x128xf32>
    %450 = arith.negf %449 : vector<8x128xf32>
    %451 = math.exp %450 : vector<8x128xf32>
    %cst_138 = arith.constant 1.000000e+00 : f32
    %452 = vector.broadcast %cst_138 : f32 to vector<8x128xf32>
    %453 = arith.addf %452, %451 : vector<8x128xf32>
    %454 = arith.divf %452, %453 : vector<8x128xf32>
    %455 = vector.extract_strided_slice %442 {offsets = [0, 256], sizes = [8, 128], strides = [1, 1]} : vector<8x512xf32> to vector<8x128xf32>
    %456 = math.tanh %455 : vector<8x128xf32>
    %457 = vector.extract_strided_slice %442 {offsets = [0, 384], sizes = [8, 128], strides = [1, 1]} : vector<8x512xf32> to vector<8x128xf32>
    %458 = arith.negf %457 : vector<8x128xf32>
    %459 = math.exp %458 : vector<8x128xf32>
    %cst_139 = arith.constant 1.000000e+00 : f32
    %460 = vector.broadcast %cst_139 : f32 to vector<8x128xf32>
    %461 = arith.addf %460, %459 : vector<8x128xf32>
    %462 = arith.divf %460, %461 : vector<8x128xf32>
    %463 = arith.mulf %454, %431 : vector<8x128xf32>
    %464 = arith.mulf %448, %456 : vector<8x128xf32>
    %465 = arith.addf %463, %464 : vector<8x128xf32>
    %466 = math.tanh %465 : vector<8x128xf32>
    %467 = arith.mulf %462, %466 : vector<8x128xf32>
    %468 = arith.index_cast %c4_i32_133 : i32 to index
    %c0_140 = arith.constant 0 : index
    %c0_141 = arith.constant 0 : index
    %469 = vector.load %arg11[%468, %c0_140, %c0_141] : memref<8x8x128xf32, #tpu.memory_space<vmem>>, vector<1x8x128xf32>
    %470 = vector.shape_cast %469 : vector<1x8x128xf32> to vector<8x128xf32>
    %471 = vector.shape_cast %467 : vector<8x128xf32> to vector<1x8x128xf32>
    tpu.vector_store %arg11[%468, %c0_140, %c0_141], %471 {strides = array<i32>} : memref<8x8x128xf32, #tpu.memory_space<vmem>>, vector<1x8x128xf32>,
    %c5_i32_142 = arith.constant 5 : i32
    %472 = arith.index_cast %c5_i32_142 : i32 to index
    %c0_143 = arith.constant 0 : index
    %c0_144 = arith.constant 0 : index
    %473 = vector.load %arg12[%472, %c0_143, %c0_144] : memref<8x8x512xf32, #tpu.memory_space<vmem>>, vector<1x8x512xf32>
    %474 = vector.shape_cast %473 : vector<1x8x512xf32> to vector<8x512xf32>
    %cst_145 = arith.constant dense<0.000000e+00> : vector<8x512xf32>
    %475 = tpu.matmul %467, %290, %cst_145 {dimension_numbers = #tpu.dot_dimension_numbers<[1], [0], [0], [1], [0, 0, 1, 1], [], []>} : vector<8x128xf32>, vector<128x512xf32>, vector<8x512xf32> -> vector<8x512xf32>
    %476 = arith.addf %474, %475 : vector<8x512xf32>
    %477 = vector.extract_strided_slice %476 {offsets = [0, 0], sizes = [8, 128], strides = [1, 1]} : vector<8x512xf32> to vector<8x128xf32>
    %478 = arith.negf %477 : vector<8x128xf32>
    %479 = math.exp %478 : vector<8x128xf32>
    %cst_146 = arith.constant 1.000000e+00 : f32
    %480 = vector.broadcast %cst_146 : f32 to vector<8x128xf32>
    %481 = arith.addf %480, %479 : vector<8x128xf32>
    %482 = arith.divf %480, %481 : vector<8x128xf32>
    %483 = vector.extract_strided_slice %476 {offsets = [0, 128], sizes = [8, 128], strides = [1, 1]} : vector<8x512xf32> to vector<8x128xf32>
    %484 = arith.negf %483 : vector<8x128xf32>
    %485 = math.exp %484 : vector<8x128xf32>
    %cst_147 = arith.constant 1.000000e+00 : f32
    %486 = vector.broadcast %cst_147 : f32 to vector<8x128xf32>
    %487 = arith.addf %486, %485 : vector<8x128xf32>
    %488 = arith.divf %486, %487 : vector<8x128xf32>
    %489 = vector.extract_strided_slice %476 {offsets = [0, 256], sizes = [8, 128], strides = [1, 1]} : vector<8x512xf32> to vector<8x128xf32>
    %490 = math.tanh %489 : vector<8x128xf32>
    %491 = vector.extract_strided_slice %476 {offsets = [0, 384], sizes = [8, 128], strides = [1, 1]} : vector<8x512xf32> to vector<8x128xf32>
    %492 = arith.negf %491 : vector<8x128xf32>
    %493 = math.exp %492 : vector<8x128xf32>
    %cst_148 = arith.constant 1.000000e+00 : f32
    %494 = vector.broadcast %cst_148 : f32 to vector<8x128xf32>
    %495 = arith.addf %494, %493 : vector<8x128xf32>
    %496 = arith.divf %494, %495 : vector<8x128xf32>
    %497 = arith.mulf %488, %465 : vector<8x128xf32>
    %498 = arith.mulf %482, %490 : vector<8x128xf32>
    %499 = arith.addf %497, %498 : vector<8x128xf32>
    %500 = math.tanh %499 : vector<8x128xf32>
    %501 = arith.mulf %496, %500 : vector<8x128xf32>
    %502 = arith.index_cast %c5_i32_142 : i32 to index
    %c0_149 = arith.constant 0 : index
    %c0_150 = arith.constant 0 : index
    %503 = vector.load %arg11[%502, %c0_149, %c0_150] : memref<8x8x128xf32, #tpu.memory_space<vmem>>, vector<1x8x128xf32>
    %504 = vector.shape_cast %503 : vector<1x8x128xf32> to vector<8x128xf32>
    %505 = vector.shape_cast %501 : vector<8x128xf32> to vector<1x8x128xf32>
    tpu.vector_store %arg11[%502, %c0_149, %c0_150], %505 {strides = array<i32>} : memref<8x8x128xf32, #tpu.memory_space<vmem>>, vector<1x8x128xf32>,
    %c6_i32_151 = arith.constant 6 : i32
    %506 = arith.index_cast %c6_i32_151 : i32 to index
    %c0_152 = arith.constant 0 : index
    %c0_153 = arith.constant 0 : index
    %507 = vector.load %arg12[%506, %c0_152, %c0_153] : memref<8x8x512xf32, #tpu.memory_space<vmem>>, vector<1x8x512xf32>
    %508 = vector.shape_cast %507 : vector<1x8x512xf32> to vector<8x512xf32>
    %cst_154 = arith.constant dense<0.000000e+00> : vector<8x512xf32>
    %509 = tpu.matmul %501, %290, %cst_154 {dimension_numbers = #tpu.dot_dimension_numbers<[1], [0], [0], [1], [0, 0, 1, 1], [], []>} : vector<8x128xf32>, vector<128x512xf32>, vector<8x512xf32> -> vector<8x512xf32>
    %510 = arith.addf %508, %509 : vector<8x512xf32>
    %511 = vector.extract_strided_slice %510 {offsets = [0, 0], sizes = [8, 128], strides = [1, 1]} : vector<8x512xf32> to vector<8x128xf32>
    %512 = arith.negf %511 : vector<8x128xf32>
    %513 = math.exp %512 : vector<8x128xf32>
    %cst_155 = arith.constant 1.000000e+00 : f32
    %514 = vector.broadcast %cst_155 : f32 to vector<8x128xf32>
    %515 = arith.addf %514, %513 : vector<8x128xf32>
    %516 = arith.divf %514, %515 : vector<8x128xf32>
    %517 = vector.extract_strided_slice %510 {offsets = [0, 128], sizes = [8, 128], strides = [1, 1]} : vector<8x512xf32> to vector<8x128xf32>
    %518 = arith.negf %517 : vector<8x128xf32>
    %519 = math.exp %518 : vector<8x128xf32>
    %cst_156 = arith.constant 1.000000e+00 : f32
    %520 = vector.broadcast %cst_156 : f32 to vector<8x128xf32>
    %521 = arith.addf %520, %519 : vector<8x128xf32>
    %522 = arith.divf %520, %521 : vector<8x128xf32>
    %523 = vector.extract_strided_slice %510 {offsets = [0, 256], sizes = [8, 128], strides = [1, 1]} : vector<8x512xf32> to vector<8x128xf32>
    %524 = math.tanh %523 : vector<8x128xf32>
    %525 = vector.extract_strided_slice %510 {offsets = [0, 384], sizes = [8, 128], strides = [1, 1]} : vector<8x512xf32> to vector<8x128xf32>
    %526 = arith.negf %525 : vector<8x128xf32>
    %527 = math.exp %526 : vector<8x128xf32>
    %cst_157 = arith.constant 1.000000e+00 : f32
    %528 = vector.broadcast %cst_157 : f32 to vector<8x128xf32>
    %529 = arith.addf %528, %527 : vector<8x128xf32>
    %530 = arith.divf %528, %529 : vector<8x128xf32>
    %531 = arith.mulf %522, %499 : vector<8x128xf32>
    %532 = arith.mulf %516, %524 : vector<8x128xf32>
    %533 = arith.addf %531, %532 : vector<8x128xf32>
    %534 = math.tanh %533 : vector<8x128xf32>
    %535 = arith.mulf %530, %534 : vector<8x128xf32>
    %536 = arith.index_cast %c6_i32_151 : i32 to index
    %c0_158 = arith.constant 0 : index
    %c0_159 = arith.constant 0 : index
    %537 = vector.load %arg11[%536, %c0_158, %c0_159] : memref<8x8x128xf32, #tpu.memory_space<vmem>>, vector<1x8x128xf32>
    %538 = vector.shape_cast %537 : vector<1x8x128xf32> to vector<8x128xf32>
    %539 = vector.shape_cast %535 : vector<8x128xf32> to vector<1x8x128xf32>
    tpu.vector_store %arg11[%536, %c0_158, %c0_159], %539 {strides = array<i32>} : memref<8x8x128xf32, #tpu.memory_space<vmem>>, vector<1x8x128xf32>,
    %c7_i32_160 = arith.constant 7 : i32
    %540 = arith.index_cast %c7_i32_160 : i32 to index
    %c0_161 = arith.constant 0 : index
    %c0_162 = arith.constant 0 : index
    %541 = vector.load %arg12[%540, %c0_161, %c0_162] : memref<8x8x512xf32, #tpu.memory_space<vmem>>, vector<1x8x512xf32>
    %542 = vector.shape_cast %541 : vector<1x8x512xf32> to vector<8x512xf32>
    %cst_163 = arith.constant dense<0.000000e+00> : vector<8x512xf32>
    %543 = tpu.matmul %535, %290, %cst_163 {dimension_numbers = #tpu.dot_dimension_numbers<[1], [0], [0], [1], [0, 0, 1, 1], [], []>} : vector<8x128xf32>, vector<128x512xf32>, vector<8x512xf32> -> vector<8x512xf32>
    %544 = arith.addf %542, %543 : vector<8x512xf32>
    %545 = vector.extract_strided_slice %544 {offsets = [0, 0], sizes = [8, 128], strides = [1, 1]} : vector<8x512xf32> to vector<8x128xf32>
    %546 = arith.negf %545 : vector<8x128xf32>
    %547 = math.exp %546 : vector<8x128xf32>
    %cst_164 = arith.constant 1.000000e+00 : f32
    %548 = vector.broadcast %cst_164 : f32 to vector<8x128xf32>
    %549 = arith.addf %548, %547 : vector<8x128xf32>
    %550 = arith.divf %548, %549 : vector<8x128xf32>
    %551 = vector.extract_strided_slice %544 {offsets = [0, 128], sizes = [8, 128], strides = [1, 1]} : vector<8x512xf32> to vector<8x128xf32>
    %552 = arith.negf %551 : vector<8x128xf32>
    %553 = math.exp %552 : vector<8x128xf32>
    %cst_165 = arith.constant 1.000000e+00 : f32
    %554 = vector.broadcast %cst_165 : f32 to vector<8x128xf32>
    %555 = arith.addf %554, %553 : vector<8x128xf32>
    %556 = arith.divf %554, %555 : vector<8x128xf32>
    %557 = vector.extract_strided_slice %544 {offsets = [0, 256], sizes = [8, 128], strides = [1, 1]} : vector<8x512xf32> to vector<8x128xf32>
    %558 = math.tanh %557 : vector<8x128xf32>
    %559 = vector.extract_strided_slice %544 {offsets = [0, 384], sizes = [8, 128], strides = [1, 1]} : vector<8x512xf32> to vector<8x128xf32>
    %560 = arith.negf %559 : vector<8x128xf32>
    %561 = math.exp %560 : vector<8x128xf32>
    %cst_166 = arith.constant 1.000000e+00 : f32
    %562 = vector.broadcast %cst_166 : f32 to vector<8x128xf32>
    %563 = arith.addf %562, %561 : vector<8x128xf32>
    %564 = arith.divf %562, %563 : vector<8x128xf32>
    %565 = arith.mulf %556, %533 : vector<8x128xf32>
    %566 = arith.mulf %550, %558 : vector<8x128xf32>
    %567 = arith.addf %565, %566 : vector<8x128xf32>
    %568 = math.tanh %567 : vector<8x128xf32>
    %569 = arith.mulf %564, %568 : vector<8x128xf32>
    %570 = arith.index_cast %c7_i32_160 : i32 to index
    %c0_167 = arith.constant 0 : index
    %c0_168 = arith.constant 0 : index
    %571 = vector.load %arg11[%570, %c0_167, %c0_168] : memref<8x8x128xf32, #tpu.memory_space<vmem>>, vector<1x8x128xf32>
    %572 = vector.shape_cast %571 : vector<1x8x128xf32> to vector<8x128xf32>
    %573 = vector.shape_cast %569 : vector<8x128xf32> to vector<1x8x128xf32>
    tpu.vector_store %arg11[%570, %c0_167, %c0_168], %573 {strides = array<i32>} : memref<8x8x128xf32, #tpu.memory_space<vmem>>, vector<1x8x128xf32>,
    %c8_i32_169 = arith.constant 8 : i32
    %c0_170 = arith.constant 0 : index
    %c0_171 = arith.constant 0 : index
    %574 = vector.load %arg5[%c0_170, %c0_171] : memref<128x128xf32, #tpu.memory_space<vmem>>, vector<128x128xf32>
    %c0_172 = arith.constant 0 : index
    %c0_173 = arith.constant 0 : index
    %575 = vector.load %arg6[%c0_172, %c0_173] : memref<1x128xf32, #tpu.memory_space<vmem>>, vector<1x128xf32>
    %c0_174 = arith.constant 0 : index
    %c0_175 = arith.constant 0 : index
    %576 = vector.load %arg7[%c0_174, %c0_175] : memref<1x128xf32, #tpu.memory_space<vmem>>, vector<1x128xf32>
    %c0_176 = arith.constant 0 : index
    %c0_177 = arith.constant 0 : index
    %c0_178 = arith.constant 0 : index
    %577 = vector.load %arg11[%c0_176, %c0_177, %c0_178] : memref<8x8x128xf32, #tpu.memory_space<vmem>>, vector<8x8x128xf32>
    %578 = vector.shape_cast %577 : vector<8x8x128xf32> to vector<64x128xf32>
    %cst_179 = arith.constant dense<0.000000e+00> : vector<64x128xf32>
    %579 = tpu.matmul %578, %574, %cst_179 {dimension_numbers = #tpu.dot_dimension_numbers<[1], [0], [0], [1], [0, 0, 1, 1], [], []>} : vector<64x128xf32>, vector<128x128xf32>, vector<64x128xf32> -> vector<64x128xf32>
    %580 = vector.broadcast %575 : vector<1x128xf32> to vector<64x128xf32>
    %581 = arith.addf %579, %580 : vector<64x128xf32>
    %582 = math.tanh %581 : vector<64x128xf32>
    %583 = vector.shape_cast %582 : vector<64x128xf32> to vector<8x8x128xf32>
    %584 = vector.shape_cast %576 : vector<1x128xf32> to vector<1x1x128xf32>
    %585 = vector.broadcast %584 : vector<1x1x128xf32> to vector<8x8x128xf32>
    %586 = arith.mulf %583, %585 : vector<8x8x128xf32>
    %cst_180 = arith.constant dense<0.000000e+00> : vector<8x8xf32>
    %587 = vector.multi_reduction <add>, %586, %cst_180 [2] : vector<8x8x128xf32> to vector<8x8xf32>
    %588 = vector.shape_cast %587 : vector<8x8xf32> to vector<8x8x1xf32>
    %cst_181 = arith.constant dense<0xFF800000> : vector<8x1xf32>
    %589 = vector.multi_reduction <maximumf>, %588, %cst_181 [0] : vector<8x8x1xf32> to vector<8x1xf32>
    %590 = vector.shape_cast %589 : vector<8x1xf32> to vector<1x8x1xf32>
    %591 = vector.broadcast %590 : vector<1x8x1xf32> to vector<8x8x1xf32>
    %592 = arith.subf %588, %591 : vector<8x8x1xf32>
    %593 = math.exp %592 : vector<8x8x1xf32>
    %cst_182 = arith.constant dense<0.000000e+00> : vector<8x1xf32>
    %594 = vector.multi_reduction <add>, %593, %cst_182 [0] : vector<8x8x1xf32> to vector<8x1xf32>
    %595 = vector.shape_cast %594 : vector<8x1xf32> to vector<1x8x1xf32>
    %596 = vector.broadcast %595 : vector<1x8x1xf32> to vector<8x8x1xf32>
    %597 = arith.divf %593, %596 : vector<8x8x1xf32>
    %cst_183 = arith.constant 0.000000e+00 : f32
    %598 = vector.broadcast %cst_183 : f32 to vector<8x128xf32>
    %599 = vector.extract_strided_slice %597 {offsets = [0, 0, 0], sizes = [1, 8, 1], strides = [1, 1, 1]} : vector<8x8x1xf32> to vector<1x8x1xf32>
    %600 = vector.shape_cast %599 : vector<1x8x1xf32> to vector<8x1xf32>
    %c0_184 = arith.constant 0 : index
    %c0_185 = arith.constant 0 : index
    %c0_186 = arith.constant 0 : index
    %601 = vector.load %arg11[%c0_184, %c0_185, %c0_186] : memref<8x8x128xf32, #tpu.memory_space<vmem>>, vector<1x8x128xf32>
    %602 = vector.shape_cast %601 : vector<1x8x128xf32> to vector<8x128xf32>
    %603 = vector.broadcast %600 : vector<8x1xf32> to vector<8x128xf32>
    %604 = arith.mulf %603, %602 : vector<8x128xf32>
    %605 = arith.addf %598, %604 : vector<8x128xf32>
    %606 = vector.extract_strided_slice %597 {offsets = [1, 0, 0], sizes = [1, 8, 1], strides = [1, 1, 1]} : vector<8x8x1xf32> to vector<1x8x1xf32>
    %607 = vector.shape_cast %606 : vector<1x8x1xf32> to vector<8x1xf32>
    %c1_187 = arith.constant 1 : index
    %c0_188 = arith.constant 0 : index
    %c0_189 = arith.constant 0 : index
    %608 = vector.load %arg11[%c1_187, %c0_188, %c0_189] : memref<8x8x128xf32, #tpu.memory_space<vmem>>, vector<1x8x128xf32>
    %609 = vector.shape_cast %608 : vector<1x8x128xf32> to vector<8x128xf32>
    %610 = vector.broadcast %607 : vector<8x1xf32> to vector<8x128xf32>
    %611 = arith.mulf %610, %609 : vector<8x128xf32>
    %612 = arith.addf %605, %611 : vector<8x128xf32>
    %613 = vector.extract_strided_slice %597 {offsets = [2, 0, 0], sizes = [1, 8, 1], strides = [1, 1, 1]} : vector<8x8x1xf32> to vector<1x8x1xf32>
    %614 = vector.shape_cast %613 : vector<1x8x1xf32> to vector<8x1xf32>
    %c2 = arith.constant 2 : index
    %c0_190 = arith.constant 0 : index
    %c0_191 = arith.constant 0 : index
    %615 = vector.load %arg11[%c2, %c0_190, %c0_191] : memref<8x8x128xf32, #tpu.memory_space<vmem>>, vector<1x8x128xf32>
    %616 = vector.shape_cast %615 : vector<1x8x128xf32> to vector<8x128xf32>
    %617 = vector.broadcast %614 : vector<8x1xf32> to vector<8x128xf32>
    %618 = arith.mulf %617, %616 : vector<8x128xf32>
    %619 = arith.addf %612, %618 : vector<8x128xf32>
    %620 = vector.extract_strided_slice %597 {offsets = [3, 0, 0], sizes = [1, 8, 1], strides = [1, 1, 1]} : vector<8x8x1xf32> to vector<1x8x1xf32>
    %621 = vector.shape_cast %620 : vector<1x8x1xf32> to vector<8x1xf32>
    %c3 = arith.constant 3 : index
    %c0_192 = arith.constant 0 : index
    %c0_193 = arith.constant 0 : index
    %622 = vector.load %arg11[%c3, %c0_192, %c0_193] : memref<8x8x128xf32, #tpu.memory_space<vmem>>, vector<1x8x128xf32>
    %623 = vector.shape_cast %622 : vector<1x8x128xf32> to vector<8x128xf32>
    %624 = vector.broadcast %621 : vector<8x1xf32> to vector<8x128xf32>
    %625 = arith.mulf %624, %623 : vector<8x128xf32>
    %626 = arith.addf %619, %625 : vector<8x128xf32>
    %627 = vector.extract_strided_slice %597 {offsets = [4, 0, 0], sizes = [1, 8, 1], strides = [1, 1, 1]} : vector<8x8x1xf32> to vector<1x8x1xf32>
    %628 = vector.shape_cast %627 : vector<1x8x1xf32> to vector<8x1xf32>
    %c4 = arith.constant 4 : index
    %c0_194 = arith.constant 0 : index
    %c0_195 = arith.constant 0 : index
    %629 = vector.load %arg11[%c4, %c0_194, %c0_195] : memref<8x8x128xf32, #tpu.memory_space<vmem>>, vector<1x8x128xf32>
    %630 = vector.shape_cast %629 : vector<1x8x128xf32> to vector<8x128xf32>
    %631 = vector.broadcast %628 : vector<8x1xf32> to vector<8x128xf32>
    %632 = arith.mulf %631, %630 : vector<8x128xf32>
    %633 = arith.addf %626, %632 : vector<8x128xf32>
    %634 = vector.extract_strided_slice %597 {offsets = [5, 0, 0], sizes = [1, 8, 1], strides = [1, 1, 1]} : vector<8x8x1xf32> to vector<1x8x1xf32>
    %635 = vector.shape_cast %634 : vector<1x8x1xf32> to vector<8x1xf32>
    %c5 = arith.constant 5 : index
    %c0_196 = arith.constant 0 : index
    %c0_197 = arith.constant 0 : index
    %636 = vector.load %arg11[%c5, %c0_196, %c0_197] : memref<8x8x128xf32, #tpu.memory_space<vmem>>, vector<1x8x128xf32>
    %637 = vector.shape_cast %636 : vector<1x8x128xf32> to vector<8x128xf32>
    %638 = vector.broadcast %635 : vector<8x1xf32> to vector<8x128xf32>
    %639 = arith.mulf %638, %637 : vector<8x128xf32>
    %640 = arith.addf %633, %639 : vector<8x128xf32>
    %641 = vector.extract_strided_slice %597 {offsets = [6, 0, 0], sizes = [1, 8, 1], strides = [1, 1, 1]} : vector<8x8x1xf32> to vector<1x8x1xf32>
    %642 = vector.shape_cast %641 : vector<1x8x1xf32> to vector<8x1xf32>
    %c6 = arith.constant 6 : index
    %c0_198 = arith.constant 0 : index
    %c0_199 = arith.constant 0 : index
    %643 = vector.load %arg11[%c6, %c0_198, %c0_199] : memref<8x8x128xf32, #tpu.memory_space<vmem>>, vector<1x8x128xf32>
    %644 = vector.shape_cast %643 : vector<1x8x128xf32> to vector<8x128xf32>
    %645 = vector.broadcast %642 : vector<8x1xf32> to vector<8x128xf32>
    %646 = arith.mulf %645, %644 : vector<8x128xf32>
    %647 = arith.addf %640, %646 : vector<8x128xf32>
    %648 = vector.extract_strided_slice %597 {offsets = [7, 0, 0], sizes = [1, 8, 1], strides = [1, 1, 1]} : vector<8x8x1xf32> to vector<1x8x1xf32>
    %649 = vector.shape_cast %648 : vector<1x8x1xf32> to vector<8x1xf32>
    %c7 = arith.constant 7 : index
    %c0_200 = arith.constant 0 : index
    %c0_201 = arith.constant 0 : index
    %650 = vector.load %arg11[%c7, %c0_200, %c0_201] : memref<8x8x128xf32, #tpu.memory_space<vmem>>, vector<1x8x128xf32>
    %651 = vector.shape_cast %650 : vector<1x8x128xf32> to vector<8x128xf32>
    %652 = vector.broadcast %649 : vector<8x1xf32> to vector<8x128xf32>
    %653 = arith.mulf %652, %651 : vector<8x128xf32>
    %654 = arith.addf %647, %653 : vector<8x128xf32>
    %c0_202 = arith.constant 0 : index
    %c0_203 = arith.constant 0 : index
    %655 = vector.load %arg8[%c0_202, %c0_203] : memref<128x128xf32, #tpu.memory_space<vmem>>, vector<128x128xf32>
    %cst_204 = arith.constant dense<0.000000e+00> : vector<8x128xf32>
    %656 = tpu.matmul %654, %655, %cst_204 {dimension_numbers = #tpu.dot_dimension_numbers<[1], [0], [0], [1], [0, 0, 1, 1], [], []>} : vector<8x128xf32>, vector<128x128xf32>, vector<8x128xf32> -> vector<8x128xf32>
    %c0_205 = arith.constant 0 : index
    %c0_206 = arith.constant 0 : index
    %657 = vector.load %arg9[%c0_205, %c0_206] : memref<1x128xf32, #tpu.memory_space<vmem>>, vector<1x128xf32>
    %658 = vector.broadcast %657 : vector<1x128xf32> to vector<8x128xf32>
    %659 = arith.addf %656, %658 : vector<8x128xf32>
    %c0_207 = arith.constant 0 : index
    %c0_208 = arith.constant 0 : index
    %660 = vector.load %arg10[%c0_207, %c0_208] : memref<8x128xf32, #tpu.memory_space<vmem>>, vector<8x128xf32>
    tpu.vector_store %arg10[%c0_207, %c0_208], %659 {strides = array<i32>} : memref<8x128xf32, #tpu.memory_space<vmem>>, vector<8x128xf32>,
    return
  }
  func.func @transform_0(%arg0: i32) -> (i32, i32, i32) {
    %c0_i32 = arith.constant 0 : i32
    %c0_i32_0 = arith.constant 0 : i32
    %c0_i32_1 = arith.constant 0 : i32
    return %c0_i32, %arg0, %c0_i32_0 : i32, i32, i32
  }
  func.func @transform_1(%arg0: i32) -> (i32, i32, i32) {
    %c0_i32 = arith.constant 0 : i32
    %c0_i32_0 = arith.constant 0 : i32
    %c0_i32_1 = arith.constant 0 : i32
    %c0_i32_2 = arith.constant 0 : i32
    return %c0_i32, %c0_i32_0, %c0_i32_1 : i32, i32, i32
  }
  func.func @transform_2(%arg0: i32) -> (i32, i32, i32) {
    %c0_i32 = arith.constant 0 : i32
    %c0_i32_0 = arith.constant 0 : i32
    %c0_i32_1 = arith.constant 0 : i32
    %c0_i32_2 = arith.constant 0 : i32
    return %c0_i32, %c0_i32_0, %c0_i32_1 : i32, i32, i32
  }
  func.func @transform_3(%arg0: i32) -> (i32, i32, i32) {
    %c0_i32 = arith.constant 0 : i32
    %c0_i32_0 = arith.constant 0 : i32
    %c0_i32_1 = arith.constant 0 : i32
    %c0_i32_2 = arith.constant 0 : i32
    return %c0_i32, %c0_i32_0, %c0_i32_1 : i32, i32, i32
  }
  func.func @transform_4(%arg0: i32) -> (i32, i32) {
    %c0_i32 = arith.constant 0 : i32
    %c0_i32_0 = arith.constant 0 : i32
    %c0_i32_1 = arith.constant 0 : i32
    return %c0_i32, %c0_i32_0 : i32, i32
  }
  func.func @transform_5(%arg0: i32) -> (i32, i32) {
    %c0_i32 = arith.constant 0 : i32
    %c0_i32_0 = arith.constant 0 : i32
    %c0_i32_1 = arith.constant 0 : i32
    return %c0_i32, %c0_i32_0 : i32, i32
  }
  func.func @transform_6(%arg0: i32) -> (i32, i32) {
    %c0_i32 = arith.constant 0 : i32
    %c0_i32_0 = arith.constant 0 : i32
    %c0_i32_1 = arith.constant 0 : i32
    return %c0_i32, %c0_i32_0 : i32, i32
  }
  func.func @transform_7(%arg0: i32) -> (i32, i32) {
    %c0_i32 = arith.constant 0 : i32
    %c0_i32_0 = arith.constant 0 : i32
    %c0_i32_1 = arith.constant 0 : i32
    return %c0_i32, %c0_i32_0 : i32, i32
  }
  func.func @transform_8(%arg0: i32) -> (i32, i32) {
    %c0_i32 = arith.constant 0 : i32
    %c0_i32_0 = arith.constant 0 : i32
    %c0_i32_1 = arith.constant 0 : i32
    return %c0_i32, %c0_i32_0 : i32, i32
  }
  func.func @transform_9(%arg0: i32) -> (i32, i32) {
    %c0_i32 = arith.constant 0 : i32
    %c0_i32_0 = arith.constant 0 : i32
    return %arg0, %c0_i32 : i32, i32
  }
}

</mosaic_0001>

<llo_original>
// kernel: attention_lstm_forward.1
$region0: #{attention_lstm_forward.1}
  #allocation0 [shape = 'u32[]', space=smem, size = 0x4, offset = 0x4, fixed_abs, tag = 'smem constant byte address 0x4 - core index']
  #allocation1 [shape = 'u32[144,128]{1,0:T(1,128)}', space=vmem, size = 0x12000, scoped, tag = 'internal scratch']
  #allocation2 [shape = 'f32[8,8,128]{2,1,0:T(8,128)}', space=vmem, size = 0x8000, scoped, tag = 'scratch operand']
  #allocation3 [shape = 'f32[8,8,512]{2,1,0:T(8,128)}', space=vmem, size = 0x20000, scoped, tag = 'scratch operand']
  %s0 = inlined_call_operand.vmem [shape: f32[8,8,128], index: 0, kind: input, shape index: {}]
  %s1 = inlined_call_operand.vmem [shape: f32[2,128,512], index: 1, kind: input, shape index: {}]
  %s2 = inlined_call_operand.vmem [shape: f32[2,128,512], index: 2, kind: input, shape index: {}]
  %s3 = inlined_call_operand.vmem [shape: f32[2,1,512], index: 3, kind: input, shape index: {}]
  %s4 = inlined_call_operand.vmem [shape: f32[128,128], index: 4, kind: input, shape index: {}]
  %s5 = inlined_call_operand.vmem [shape: f32[1,128], index: 5, kind: input, shape index: {}]
  %s6 = inlined_call_operand.vmem [shape: f32[1,128], index: 6, kind: input, shape index: {}]
  %s7 = inlined_call_operand.vmem [shape: f32[128,128], index: 7, kind: input, shape index: {}]
  %s8 = inlined_call_operand.vmem [shape: f32[1,128], index: 8, kind: input, shape index: {}]
  %s9 = inlined_call_operand.vmem [shape: f32[8,128], index: 9, kind: output, shape index: {}]
  %s10 = sld [smem:[#allocation0]]
  $region46: #{attention_lstm_forward.1} parent=0
    _
  %s12 = ssub.s32 1, %s10
  %s13 = scalar_select 0, %s12, %s10
  // Predicated region
  $region2: #{attention_lstm_forward.1} parent=0 // pred_check
    _
  $region3: #{attention_lstm_forward.1} parent=0 // pred_check_branch
    %15 = sbr.rel (0) target = $region5
  $region4: #{attention_lstm_forward.1} parent=0 // pred_region
    _
  $region5: #{attention_lstm_forward.1} parent=0 // pred_fallthru
    _
  // Predicated region
  $region6: #{attention_lstm_forward.1} parent=0 // pred_check
    _
  $region7: #{attention_lstm_forward.1} parent=0 // pred_check_branch
    %17 = sbr.rel (0) target = $region9
  $region8: #{attention_lstm_forward.1} parent=0 // pred_region
    _
  $region9: #{attention_lstm_forward.1} parent=0 // pred_fallthru
    _
  // Predicated region
  $region10: #{attention_lstm_forward.1} parent=0 // pred_check
    _
  $region11: #{attention_lstm_forward.1} parent=0 // pred_check_branch
    %19 = sbr.rel (0) target = $region13
  $region12: #{attention_lstm_forward.1} parent=0 // pred_region
    _
  $region13: #{attention_lstm_forward.1} parent=0 // pred_fallthru
    _
  // Predicated region
  $region14: #{attention_lstm_forward.1} parent=0 // pred_check
    _
  $region15: #{attention_lstm_forward.1} parent=0 // pred_check_branch
    %21 = sbr.rel (0) target = $region17
  $region16: #{attention_lstm_forward.1} parent=0 // pred_region
    _
  $region17: #{attention_lstm_forward.1} parent=0 // pred_fallthru
    _
  // Predicated region
  $region18: #{attention_lstm_forward.1} parent=0 // pred_check
    _
  $region19: #{attention_lstm_forward.1} parent=0 // pred_check_branch
    %23 = sbr.rel (0) target = $region21
  $region20: #{attention_lstm_forward.1} parent=0 // pred_region
    _
  $region21: #{attention_lstm_forward.1} parent=0 // pred_fallthru
    _
  // Predicated region
  $region22: #{attention_lstm_forward.1} parent=0 // pred_check
    _
  $region23: #{attention_lstm_forward.1} parent=0 // pred_check_branch
    %25 = sbr.rel (0) target = $region25
  $region24: #{attention_lstm_forward.1} parent=0 // pred_region
    _
  $region25: #{attention_lstm_forward.1} parent=0 // pred_fallthru
    _
  // Predicated region
  $region26: #{attention_lstm_forward.1} parent=0 // pred_check
    _
  $region27: #{attention_lstm_forward.1} parent=0 // pred_check_branch
    %27 = sbr.rel (0) target = $region29
  $region28: #{attention_lstm_forward.1} parent=0 // pred_region
    _
  $region29: #{attention_lstm_forward.1} parent=0 // pred_fallthru
    _
  // Predicated region
  $region30: #{attention_lstm_forward.1} parent=0 // pred_check
    _
  $region31: #{attention_lstm_forward.1} parent=0 // pred_check_branch
    %29 = sbr.rel (0) target = $region33
  $region32: #{attention_lstm_forward.1} parent=0 // pred_region
    _
  $region33: #{attention_lstm_forward.1} parent=0 // pred_fallthru
    _
  // Predicated region
  $region34: #{attention_lstm_forward.1} parent=0 // pred_check
    _
  $region35: #{attention_lstm_forward.1} parent=0 // pred_check_branch
    %31 = sbr.rel (0) target = $region37
  $region36: #{attention_lstm_forward.1} parent=0 // pred_region
    _
  $region37: #{attention_lstm_forward.1} parent=0 // pred_fallthru
    _
  %v32 = vld [vmem:[%s1] sm:$0xff]
  %v33 = vld [vmem:[%s1 + $0x8] sm:$0xff]
  %v34 = vld [vmem:[%s1 + $0x10] sm:$0xff]
  %v35 = vld [vmem:[%s1 + $0x18] sm:$0xff]
  %v36 = vld [vmem:[%s1 + $0x20] sm:$0xff]
  %v37 = vld [vmem:[%s1 + $0x28] sm:$0xff]
  %v38 = vld [vmem:[%s1 + $0x30] sm:$0xff]
  %v39 = vld [vmem:[%s1 + $0x38] sm:$0xff]
  %v40 = vld [vmem:[%s1 + $0x40] sm:$0xff]
  %v41 = vld [vmem:[%s1 + $0x48] sm:$0xff]
  %v42 = vld [vmem:[%s1 + $0x50] sm:$0xff]
  %v43 = vld [vmem:[%s1 + $0x58] sm:$0xff]
  %v44 = vld [vmem:[%s1 + $0x60] sm:$0xff]
  %v45 = vld [vmem:[%s1 + $0x68] sm:$0xff]
  %v46 = vld [vmem:[%s1 + $0x70] sm:$0xff]
  %v47 = vld [vmem:[%s1 + $0x78] sm:$0xff]
  %v48 = vld [vmem:[%s1 + $0x80] sm:$0xff]
  %v49 = vld [vmem:[%s1 + $0x88] sm:$0xff]
  %v50 = vld [vmem:[%s1 + $0x90] sm:$0xff]
  %v51 = vld [vmem:[%s1 + $0x98] sm:$0xff]
  %v52 = vld [vmem:[%s1 + $0xa0] sm:$0xff]
  %v53 = vld [vmem:[%s1 + $0xa8] sm:$0xff]
  %v54 = vld [vmem:[%s1 + $0xb0] sm:$0xff]
  %v55 = vld [vmem:[%s1 + $0xb8] sm:$0xff]
  %v56 = vld [vmem:[%s1 + $0xc0] sm:$0xff]
  %v57 = vld [vmem:[%s1 + $0xc8] sm:$0xff]
  %v58 = vld [vmem:[%s1 + $0xd0] sm:$0xff]
  %v59 = vld [vmem:[%s1 + $0xd8] sm:$0xff]
  %v60 = vld [vmem:[%s1 + $0xe0] sm:$0xff]
  %v61 = vld [vmem:[%s1 + $0xe8] sm:$0xff]
  %v62 = vld [vmem:[%s1 + $0xf0] sm:$0xff]
  %v63 = vld [vmem:[%s1 + $0xf8] sm:$0xff]
  %v64 = vld [vmem:[%s1 + $0x100] sm:$0xff]
  %v65 = vld [vmem:[%s1 + $0x108] sm:$0xff]
  %v66 = vld [vmem:[%s1 + $0x110] sm:$0xff]
  %v67 = vld [vmem:[%s1 + $0x118] sm:$0xff]
  %v68 = vld [vmem:[%s1 + $0x120] sm:$0xff]
  %v69 = vld [vmem:[%s1 + $0x128] sm:$0xff]
  %v70 = vld [vmem:[%s1 + $0x130] sm:$0xff]
  %v71 = vld [vmem:[%s1 + $0x138] sm:$0xff]
  %v72 = vld [vmem:[%s1 + $0x140] sm:$0xff]
  %v73 = vld [vmem:[%s1 + $0x148] sm:$0xff]
  %v74 = vld [vmem:[%s1 + $0x150] sm:$0xff]
  %v75 = vld [vmem:[%s1 + $0x158] sm:$0xff]
  %v76 = vld [vmem:[%s1 + $0x160] sm:$0xff]
  %v77 = vld [vmem:[%s1 + $0x168] sm:$0xff]
  %v78 = vld [vmem:[%s1 + $0x170] sm:$0xff]
  %v79 = vld [vmem:[%s1 + $0x178] sm:$0xff]
  %v80 = vld [vmem:[%s1 + $0x180] sm:$0xff]
  %v81 = vld [vmem:[%s1 + $0x188] sm:$0xff]
  %v82 = vld [vmem:[%s1 + $0x190] sm:$0xff]
  %v83 = vld [vmem:[%s1 + $0x198] sm:$0xff]
  %v84 = vld [vmem:[%s1 + $0x1a0] sm:$0xff]
  %v85 = vld [vmem:[%s1 + $0x1a8] sm:$0xff]
  %v86 = vld [vmem:[%s1 + $0x1b0] sm:$0xff]
  %v87 = vld [vmem:[%s1 + $0x1b8] sm:$0xff]
  %v88 = vld [vmem:[%s1 + $0x1c0] sm:$0xff]
  %v89 = vld [vmem:[%s1 + $0x1c8] sm:$0xff]
  %v90 = vld [vmem:[%s1 + $0x1d0] sm:$0xff]
  %v91 = vld [vmem:[%s1 + $0x1d8] sm:$0xff]
  %v92 = vld [vmem:[%s1 + $0x1e0] sm:$0xff]
  %v93 = vld [vmem:[%s1 + $0x1e8] sm:$0xff]
  %v94 = vld [vmem:[%s1 + $0x1f0] sm:$0xff]
  %v95 = vld [vmem:[%s1 + $0x1f8] sm:$0xff]
  %v96 = vld [vmem:[%s2] sm:$0xff]
  %v97 = vld [vmem:[%s2 + $0x8] sm:$0xff]
  %v98 = vld [vmem:[%s2 + $0x10] sm:$0xff]
  %v99 = vld [vmem:[%s2 + $0x18] sm:$0xff]
  %v100 = vld [vmem:[%s2 + $0x20] sm:$0xff]
  %v101 = vld [vmem:[%s2 + $0x28] sm:$0xff]
  %v102 = vld [vmem:[%s2 + $0x30] sm:$0xff]
  %v103 = vld [vmem:[%s2 + $0x38] sm:$0xff]
  %v104 = vld [vmem:[%s2 + $0x40] sm:$0xff]
  %v105 = vld [vmem:[%s2 + $0x48] sm:$0xff]
  %v106 = vld [vmem:[%s2 + $0x50] sm:$0xff]
  %v107 = vld [vmem:[%s2 + $0x58] sm:$0xff]
  %v108 = vld [vmem:[%s2 + $0x60] sm:$0xff]
  %v109 = vld [vmem:[%s2 + $0x68] sm:$0xff]
  %v110 = vld [vmem:[%s2 + $0x70] sm:$0xff]
  %v111 = vld [vmem:[%s2 + $0x78] sm:$0xff]
  %v112 = vld [vmem:[%s2 + $0x80] sm:$0xff]
  %v113 = vld [vmem:[%s2 + $0x88] sm:$0xff]
  %v114 = vld [vmem:[%s2 + $0x90] sm:$0xff]
  %v115 = vld [vmem:[%s2 + $0x98] sm:$0xff]
  %v116 = vld [vmem:[%s2 + $0xa0] sm:$0xff]
  %v117 = vld [vmem:[%s2 + $0xa8] sm:$0xff]
  %v118 = vld [vmem:[%s2 + $0xb0] sm:$0xff]
  %v119 = vld [vmem:[%s2 + $0xb8] sm:$0xff]
  %v120 = vld [vmem:[%s2 + $0xc0] sm:$0xff]
  %v121 = vld [vmem:[%s2 + $0xc8] sm:$0xff]
  %v122 = vld [vmem:[%s2 + $0xd0] sm:$0xff]
  %v123 = vld [vmem:[%s2 + $0xd8] sm:$0xff]
  %v124 = vld [vmem:[%s2 + $0xe0] sm:$0xff]
  %v125 = vld [vmem:[%s2 + $0xe8] sm:$0xff]
  %v126 = vld [vmem:[%s2 + $0xf0] sm:$0xff]
  %v127 = vld [vmem:[%s2 + $0xf8] sm:$0xff]
  %v128 = vld [vmem:[%s2 + $0x100] sm:$0xff]
  %v129 = vld [vmem:[%s2 + $0x108] sm:$0xff]
  %v130 = vld [vmem:[%s2 + $0x110] sm:$0xff]
  %v131 = vld [vmem:[%s2 + $0x118] sm:$0xff]
  %v132 = vld [vmem:[%s2 + $0x120] sm:$0xff]
  %v133 = vld [vmem:[%s2 + $0x128] sm:$0xff]
  %v134 = vld [vmem:[%s2 + $0x130] sm:$0xff]
  %v135 = vld [vmem:[%s2 + $0x138] sm:$0xff]
  %v136 = vld [vmem:[%s2 + $0x140] sm:$0xff]
  %v137 = vld [vmem:[%s2 + $0x148] sm:$0xff]
  %v138 = vld [vmem:[%s2 + $0x150] sm:$0xff]
  %v139 = vld [vmem:[%s2 + $0x158] sm:$0xff]
  %v140 = vld [vmem:[%s2 + $0x160] sm:$0xff]
  %v141 = vld [vmem:[%s2 + $0x168] sm:$0xff]
  %v142 = vld [vmem:[%s2 + $0x170] sm:$0xff]
  %v143 = vld [vmem:[%s2 + $0x178] sm:$0xff]
  %v144 = vld [vmem:[%s2 + $0x180] sm:$0xff]
  %v145 = vld [vmem:[%s2 + $0x188] sm:$0xff]
  %v146 = vld [vmem:[%s2 + $0x190] sm:$0xff]
  %v147 = vld [vmem:[%s2 + $0x198] sm:$0xff]
  %v148 = vld [vmem:[%s2 + $0x1a0] sm:$0xff]
  %v149 = vld [vmem:[%s2 + $0x1a8] sm:$0xff]
  %v150 = vld [vmem:[%s2 + $0x1b0] sm:$0xff]
  %v151 = vld [vmem:[%s2 + $0x1b8] sm:$0xff]
  %v152 = vld [vmem:[%s2 + $0x1c0] sm:$0xff]
  %v153 = vld [vmem:[%s2 + $0x1c8] sm:$0xff]
  %v154 = vld [vmem:[%s2 + $0x1d0] sm:$0xff]
  %v155 = vld [vmem:[%s2 + $0x1d8] sm:$0xff]
  %v156 = vld [vmem:[%s2 + $0x1e0] sm:$0xff]
  %v157 = vld [vmem:[%s2 + $0x1e8] sm:$0xff]
  %v158 = vld [vmem:[%s2 + $0x1f0] sm:$0xff]
  %v159 = vld [vmem:[%s2 + $0x1f8] sm:$0xff]
  %v160 = vld [vmem:[%s3] sm:$0xf]
  %v161 = vld [vmem:[%s0] sm:$0xff]
  %v162 = vld [vmem:[%s0 + $0x8] sm:$0xff]
  %v163 = vld [vmem:[%s0 + $0x10] sm:$0xff]
  %v164 = vld [vmem:[%s0 + $0x18] sm:$0xff]
  %v165 = vld [vmem:[%s0 + $0x20] sm:$0xff]
  %v166 = vld [vmem:[%s0 + $0x28] sm:$0xff]
  %v167 = vld [vmem:[%s0 + $0x30] sm:$0xff]
  %v168 = vld [vmem:[%s0 + $0x38] sm:$0xff]
  %v170 = vlaneseq
  %v171 = vshrl.u32 %v170, 7
  %v172 = vsub.s32 0, %v171
  %v173 = vrot.slane %v160, %v172
  %v174 = vlaneseq
  %v175 = vshrl.u32 %v174, 7
  %v176 = vsub.s32 1, %v175
  %v177 = vrot.slane %v160, %v176
  %v178 = vlaneseq
  %v179 = vshrl.u32 %v178, 7
  %v180 = vsub.s32 2, %v179
  %v181 = vrot.slane %v160, %v180
  %v182 = vlaneseq
  %v183 = vshrl.u32 %v182, 7
  %v184 = vsub.s32 3, %v183
  %v185 = vrot.slane %v160, %v184
  %190 = vmatprep.subr.mxu0 %v33
  %191 = vmatpush1.msra.mxu0 %v32
  %192 = vmatprep.subr.mxu0 %v37
  %193 = vmatpush1.msra.mxu0 %v36
  %194 = vmatprep.subr.mxu0 %v41
  %195 = vmatpush1.msra.mxu0 %v40
  %196 = vmatprep.subr.mxu0 %v45
  %197 = vmatpush1.msra.mxu0 %v44
  %198 = vmatprep.subr.mxu0 %v49
  %199 = vmatpush1.msra.mxu0 %v48
  %200 = vmatprep.subr.mxu0 %v53
  %201 = vmatpush1.msra.mxu0 %v52
  %202 = vmatprep.subr.mxu0 %v57
  %203 = vmatpush1.msra.mxu0 %v56
  %204 = vmatprep.subr.mxu0 %v61
  %205 = vmatpush1.msra.mxu0 %v60
  %206 = vmatprep.subr.mxu0 %v65
  %207 = vmatpush1.msra.mxu0 %v64
  %208 = vmatprep.subr.mxu0 %v69
  %209 = vmatpush1.msra.mxu0 %v68
  %210 = vmatprep.subr.mxu0 %v73
  %211 = vmatpush1.msra.mxu0 %v72
  %212 = vmatprep.subr.mxu0 %v77
  %213 = vmatpush1.msra.mxu0 %v76
  %214 = vmatprep.subr.mxu0 %v81
  %215 = vmatpush1.msra.mxu0 %v80
  %216 = vmatprep.subr.mxu0 %v85
  %217 = vmatpush1.msra.mxu0 %v84
  %218 = vmatprep.subr.mxu0 %v89
  %219 = vmatpush1.msra.mxu0 %v88
  %220 = vmatprep.subr.mxu0 %v93
  %221 = vmatpush1.msra.mxu0 %v92
  %222 = vmatprep.subr.mxu0 0.0
  %223 = vmatpush1.msra.mxu0 0.0
  %224 = vmatprep.subr.mxu0 0.0
  %225 = vmatpush1.msra.mxu0 0.0
  %226 = vmatprep.subr.mxu0 0.0
  %227 = vmatpush1.msra.mxu0 0.0
  %228 = vmatprep.subr.mxu0 0.0
  %229 = vmatpush1.msra.mxu0 0.0
  %230 = vmatprep.subr.mxu0 0.0
  %231 = vmatpush1.msra.mxu0 0.0
  %232 = vmatprep.subr.mxu0 0.0
  %233 = vmatpush1.msra.mxu0 0.0
  %234 = vmatprep.subr.mxu0 0.0
  %235 = vmatpush1.msra.mxu0 0.0
  %236 = vmatprep.subr.mxu0 0.0
  %237 = vmatpush1.msra.mxu0 0.0
  %238 = vmatprep.subr.mxu0 0.0
  %239 = vmatpush1.msra.mxu0 0.0
  %240 = vmatprep.subr.mxu0 0.0
  %241 = vmatpush1.msra.mxu0 0.0
  %242 = vmatprep.subr.mxu0 0.0
  %243 = vmatpush1.msra.mxu0 0.0
  %244 = vmatprep.subr.mxu0 0.0
  %245 = vmatpush1.msra.mxu0 0.0
  %246 = vmatprep.subr.mxu0 0.0
  %247 = vmatpush1.msra.mxu0 0.0
  %248 = vmatprep.subr.mxu0 0.0
  %249 = vmatpush1.msra.mxu0 0.0
  %250 = vmatprep.subr.mxu0 0.0
  %251 = vmatpush1.msra.mxu0 0.0
  %252 = vmatprep.subr.mxu0 0.0
  %253 = vmatpush1.msra.mxu0 0.0
  %254 = vmatprep.mubr.f32.mxu0 0.0
  %255 = vmatmul.mubr.f32.gmra.mrb[0].mxu0 %v161
  %v256 = vpop.f32.mrb[0].mxu0
  %v257 = vadd.f32 %v173, %v256
  %v258 = vpop.f32.mrb[0].mxu0
  %v259 = vadd.f32 %v177, %v258
  %260 = vmatprep.mubr.f32.mxu0 0.0
  %261 = vmatmul.mubr.f32.gmra.mrb[0].mxu0 %v162
  %v262 = vpop.f32.mrb[0].mxu0
  %v263 = vadd.f32 %v173, %v262
  %v264 = vpop.f32.mrb[0].mxu0
  %v265 = vadd.f32 %v177, %v264
  %266 = vmatprep.mubr.f32.mxu0 0.0
  %267 = vmatmul.mubr.f32.gmra.mrb[0].mxu0 %v163
  %v268 = vpop.f32.mrb[0].mxu0
  %v269 = vadd.f32 %v173, %v268
  %v270 = vpop.f32.mrb[0].mxu0
  %v271 = vadd.f32 %v177, %v270
  %272 = vmatprep.mubr.f32.mxu0 0.0
  %273 = vmatmul.mubr.f32.gmra.mrb[0].mxu0 %v164
  %v274 = vpop.f32.mrb[0].mxu0
  %v275 = vadd.f32 %v173, %v274
  %v276 = vpop.f32.mrb[0].mxu0
  %v277 = vadd.f32 %v177, %v276
  %278 = vmatprep.mubr.f32.mxu0 0.0
  %279 = vmatmul.mubr.f32.gmra.mrb[0].mxu0 %v165
  %v280 = vpop.f32.mrb[0].mxu0
  %v281 = vadd.f32 %v173, %v280
  %v282 = vpop.f32.mrb[0].mxu0
  %v283 = vadd.f32 %v177, %v282
  %284 = vmatprep.mubr.f32.mxu0 0.0
  %285 = vmatmul.mubr.f32.gmra.mrb[0].mxu0 %v166
  %v286 = vpop.f32.mrb[0].mxu0
  %v287 = vadd.f32 %v173, %v286
  %v288 = vpop.f32.mrb[0].mxu0
  %v289 = vadd.f32 %v177, %v288
  %290 = vmatprep.mubr.f32.mxu0 0.0
  %291 = vmatmul.mubr.f32.gmra.mrb[0].mxu0 %v167
  %v292 = vpop.f32.mrb[0].mxu0
  %v293 = vadd.f32 %v173, %v292
  %v294 = vpop.f32.mrb[0].mxu0
  %v295 = vadd.f32 %v177, %v294
  %296 = vmatprep.mubr.f32.mxu0 0.0
  %297 = vmatmul.mubr.f32.gmra.mrb[0].mxu0 %v168
  %v298 = vpop.f32.mrb[0].mxu0
  %v299 = vadd.f32 %v173, %v298
  %v300 = vpop.f32.mrb[0].mxu0
  %v301 = vadd.f32 %v177, %v300
  %302 = vdwg.mxu0
  %303 = vmatprep.subr.mxu0 %v35
  %304 = vmatpush1.msra.mxu0 %v34
  %305 = vmatprep.subr.mxu0 %v39
  %306 = vmatpush1.msra.mxu0 %v38
  %307 = vmatprep.subr.mxu0 %v43
  %308 = vmatpush1.msra.mxu0 %v42
  %309 = vmatprep.subr.mxu0 %v47
  %310 = vmatpush1.msra.mxu0 %v46
  %311 = vmatprep.subr.mxu0 %v51
  %312 = vmatpush1.msra.mxu0 %v50
  %313 = vmatprep.subr.mxu0 %v55
  %314 = vmatpush1.msra.mxu0 %v54
  %315 = vmatprep.subr.mxu0 %v59
  %316 = vmatpush1.msra.mxu0 %v58
  %317 = vmatprep.subr.mxu0 %v63
  %318 = vmatpush1.msra.mxu0 %v62
  %319 = vmatprep.subr.mxu0 %v67
  %320 = vmatpush1.msra.mxu0 %v66
  %321 = vmatprep.subr.mxu0 %v71
  %322 = vmatpush1.msra.mxu0 %v70
  %323 = vmatprep.subr.mxu0 %v75
  %324 = vmatpush1.msra.mxu0 %v74
  %325 = vmatprep.subr.mxu0 %v79
  %326 = vmatpush1.msra.mxu0 %v78
  %327 = vmatprep.subr.mxu0 %v83
  %328 = vmatpush1.msra.mxu0 %v82
  %329 = vmatprep.subr.mxu0 %v87
  %330 = vmatpush1.msra.mxu0 %v86
  %331 = vmatprep.subr.mxu0 %v91
  %332 = vmatpush1.msra.mxu0 %v90
  %333 = vmatprep.subr.mxu0 %v95
  %334 = vmatpush1.msra.mxu0 %v94
  %335 = vmatprep.subr.mxu0 0.0
  %336 = vmatpush1.msra.mxu0 0.0
  %337 = vmatprep.subr.mxu0 0.0
  %338 = vmatpush1.msra.mxu0 0.0
  %339 = vmatprep.subr.mxu0 0.0
  %340 = vmatpush1.msra.mxu0 0.0
  %341 = vmatprep.subr.mxu0 0.0
  %342 = vmatpush1.msra.mxu0 0.0
  %343 = vmatprep.subr.mxu0 0.0
  %344 = vmatpush1.msra.mxu0 0.0
  %345 = vmatprep.subr.mxu0 0.0
  %346 = vmatpush1.msra.mxu0 0.0
  %347 = vmatprep.subr.mxu0 0.0
  %348 = vmatpush1.msra.mxu0 0.0
  %349 = vmatprep.subr.mxu0 0.0
  %350 = vmatpush1.msra.mxu0 0.0
  %351 = vmatprep.subr.mxu0 0.0
  %352 = vmatpush1.msra.mxu0 0.0
  %353 = vmatprep.subr.mxu0 0.0
  %354 = vmatpush1.msra.mxu0 0.0
  %355 = vmatprep.subr.mxu0 0.0
  %356 = vmatpush1.msra.mxu0 0.0
  %357 = vmatprep.subr.mxu0 0.0
  %358 = vmatpush1.msra.mxu0 0.0
  %359 = vmatprep.subr.mxu0 0.0
  %360 = vmatpush1.msra.mxu0 0.0
  %361 = vmatprep.subr.mxu0 0.0
  %362 = vmatpush1.msra.mxu0 0.0
  %363 = vmatprep.subr.mxu0 0.0
  %364 = vmatpush1.msra.mxu0 0.0
  %365 = vmatprep.subr.mxu0 0.0
  %366 = vmatpush1.msra.mxu0 0.0
  %367 = vmatprep.mubr.f32.mxu0 0.0
  %368 = vmatmul.mubr.f32.gmra.mrb[0].mxu0 %v161
  %v369 = vpop.f32.mrb[0].mxu0
  %v370 = vadd.f32 %v181, %v369
  %v371 = vpop.f32.mrb[0].mxu0
  %v372 = vadd.f32 %v185, %v371
  %373 = vmatprep.mubr.f32.mxu0 0.0
  %374 = vmatmul.mubr.f32.gmra.mrb[0].mxu0 %v162
  %v375 = vpop.f32.mrb[0].mxu0
  %v376 = vadd.f32 %v181, %v375
  %v377 = vpop.f32.mrb[0].mxu0
  %v378 = vadd.f32 %v185, %v377
  %379 = vmatprep.mubr.f32.mxu0 0.0
  %380 = vmatmul.mubr.f32.gmra.mrb[0].mxu0 %v163
  %v381 = vpop.f32.mrb[0].mxu0
  %v382 = vadd.f32 %v181, %v381
  %v383 = vpop.f32.mrb[0].mxu0
  %v384 = vadd.f32 %v185, %v383
  %385 = vmatprep.mubr.f32.mxu0 0.0
  %386 = vmatmul.mubr.f32.gmra.mrb[0].mxu0 %v164
  %v387 = vpop.f32.mrb[0].mxu0
  %v388 = vadd.f32 %v181, %v387
  %v389 = vpop.f32.mrb[0].mxu0
  %v390 = vadd.f32 %v185, %v389
  %391 = vmatprep.mubr.f32.mxu0 0.0
  %392 = vmatmul.mubr.f32.gmra.mrb[0].mxu0 %v165
  %v393 = vpop.f32.mrb[0].mxu0
  %v394 = vadd.f32 %v181, %v393
  %v395 = vpop.f32.mrb[0].mxu0
  %v396 = vadd.f32 %v185, %v395
  %397 = vmatprep.mubr.f32.mxu0 0.0
  %398 = vmatmul.mubr.f32.gmra.mrb[0].mxu0 %v166
  %v399 = vpop.f32.mrb[0].mxu0
  %v400 = vadd.f32 %v181, %v399
  %v401 = vpop.f32.mrb[0].mxu0
  %v402 = vadd.f32 %v185, %v401
  %403 = vmatprep.mubr.f32.mxu0 0.0
  %404 = vmatmul.mubr.f32.gmra.mrb[0].mxu0 %v167
  %v405 = vpop.f32.mrb[0].mxu0
  %v406 = vadd.f32 %v181, %v405
  %v407 = vpop.f32.mrb[0].mxu0
  %v408 = vadd.f32 %v185, %v407
  %409 = vmatprep.mubr.f32.mxu0 0.0
  %410 = vmatmul.mubr.f32.gmra.mrb[0].mxu0 %v168
  %v411 = vpop.f32.mrb[0].mxu0
  %v412 = vadd.f32 %v181, %v411
  %v413 = vpop.f32.mrb[0].mxu0
  %v414 = vadd.f32 %v185, %v413
  %415 = vdwg.mxu0
  %416 = vst [vmem:[#allocation3] sm:$0xff] %v257
  %417 = vst [vmem:[#allocation3 + $0x8] sm:$0xff] %v259
  %418 = vst [vmem:[#allocation3 + $0x10] sm:$0xff] %v370
  %419 = vst [vmem:[#allocation3 + $0x18] sm:$0xff] %v372
  %420 = vst [vmem:[#allocation3 + $0x20] sm:$0xff] %v263
  %421 = vst [vmem:[#allocation3 + $0x28] sm:$0xff] %v265
  %422 = vst [vmem:[#allocation3 + $0x30] sm:$0xff] %v376
  %423 = vst [vmem:[#allocation3 + $0x38] sm:$0xff] %v378
  %424 = vst [vmem:[#allocation3 + $0x40] sm:$0xff] %v269
  %425 = vst [vmem:[#allocation3 + $0x48] sm:$0xff] %v271
  %426 = vst [vmem:[#allocation3 + $0x50] sm:$0xff] %v382
  %427 = vst [vmem:[#allocation3 + $0x58] sm:$0xff] %v384
  %428 = vst [vmem:[#allocation3 + $0x60] sm:$0xff] %v275
  %429 = vst [vmem:[#allocation3 + $0x68] sm:$0xff] %v277
  %430 = vst [vmem:[#allocation3 + $0x70] sm:$0xff] %v388
  %431 = vst [vmem:[#allocation3 + $0x78] sm:$0xff] %v390
  %432 = vst [vmem:[#allocation3 + $0x80] sm:$0xff] %v281
  %433 = vst [vmem:[#allocation3 + $0x88] sm:$0xff] %v283
  %434 = vst [vmem:[#allocation3 + $0x90] sm:$0xff] %v394
  %435 = vst [vmem:[#allocation3 + $0x98] sm:$0xff] %v396
  %436 = vst [vmem:[#allocation3 + $0xa0] sm:$0xff] %v287
  %437 = vst [vmem:[#allocation3 + $0xa8] sm:$0xff] %v289
  %438 = vst [vmem:[#allocation3 + $0xb0] sm:$0xff] %v400
  %439 = vst [vmem:[#allocation3 + $0xb8] sm:$0xff] %v402
  %440 = vst [vmem:[#allocation3 + $0xc0] sm:$0xff] %v293
  %441 = vst [vmem:[#allocation3 + $0xc8] sm:$0xff] %v295
  %442 = vst [vmem:[#allocation3 + $0xd0] sm:$0xff] %v406
  %443 = vst [vmem:[#allocation3 + $0xd8] sm:$0xff] %v408
  %444 = vst [vmem:[#allocation3 + $0xe0] sm:$0xff] %v299
  %445 = vst [vmem:[#allocation3 + $0xe8] sm:$0xff] %v301
  %446 = vst [vmem:[#allocation3 + $0xf0] sm:$0xff] %v412
  %447 = vst [vmem:[#allocation3 + $0xf8] sm:$0xff] %v414
  %v448 = vld [vmem:[#allocation3] sm:$0xff]
  %v449 = vld [vmem:[#allocation3 + $0x8] sm:$0xff]
  %v450 = vld [vmem:[#allocation3 + $0x10] sm:$0xff]
  %v451 = vld [vmem:[#allocation3 + $0x18] sm:$0xff]
  %452 = vmatprep.subr.mxu0 %v97
  %453 = vmatpush1.msra.mxu0 %v96
  %454 = vmatprep.subr.mxu0 %v101
  %455 = vmatpush1.msra.mxu0 %v100
  %456 = vmatprep.subr.mxu0 %v105
  %457 = vmatpush1.msra.mxu0 %v104
  %458 = vmatprep.subr.mxu0 %v109
  %459 = vmatpush1.msra.mxu0 %v108
  %460 = vmatprep.subr.mxu0 %v113
  %461 = vmatpush1.msra.mxu0 %v112
  %462 = vmatprep.subr.mxu0 %v117
  %463 = vmatpush1.msra.mxu0 %v116
  %464 = vmatprep.subr.mxu0 %v121
  %465 = vmatpush1.msra.mxu0 %v120
  %466 = vmatprep.subr.mxu0 %v125
  %467 = vmatpush1.msra.mxu0 %v124
  %468 = vmatprep.subr.mxu0 %v129
  %469 = vmatpush1.msra.mxu0 %v128
  %470 = vmatprep.subr.mxu0 %v133
  %471 = vmatpush1.msra.mxu0 %v132
  %472 = vmatprep.subr.mxu0 %v137
  %473 = vmatpush1.msra.mxu0 %v136
  %474 = vmatprep.subr.mxu0 %v141
  %475 = vmatpush1.msra.mxu0 %v140
  %476 = vmatprep.subr.mxu0 %v145
  %477 = vmatpush1.msra.mxu0 %v144
  %478 = vmatprep.subr.mxu0 %v149
  %479 = vmatpush1.msra.mxu0 %v148
  %480 = vmatprep.subr.mxu0 %v153
  %481 = vmatpush1.msra.mxu0 %v152
  %482 = vmatprep.subr.mxu0 %v157
  %483 = vmatpush1.msra.mxu0 %v156
  %484 = vmatprep.subr.mxu0 0.0
  %485 = vmatpush1.msra.mxu0 0.0
  %486 = vmatprep.subr.mxu0 0.0
  %487 = vmatpush1.msra.mxu0 0.0
  %488 = vmatprep.subr.mxu0 0.0
  %489 = vmatpush1.msra.mxu0 0.0
  %490 = vmatprep.subr.mxu0 0.0
  %491 = vmatpush1.msra.mxu0 0.0
  %492 = vmatprep.subr.mxu0 0.0
  %493 = vmatpush1.msra.mxu0 0.0
  %494 = vmatprep.subr.mxu0 0.0
  %495 = vmatpush1.msra.mxu0 0.0
  %496 = vmatprep.subr.mxu0 0.0
  %497 = vmatpush1.msra.mxu0 0.0
  %498 = vmatprep.subr.mxu0 0.0
  %499 = vmatpush1.msra.mxu0 0.0
  %500 = vmatprep.subr.mxu0 0.0
  %501 = vmatpush1.msra.mxu0 0.0
  %502 = vmatprep.subr.mxu0 0.0
  %503 = vmatpush1.msra.mxu0 0.0
  %504 = vmatprep.subr.mxu0 0.0
  %505 = vmatpush1.msra.mxu0 0.0
  %506 = vmatprep.subr.mxu0 0.0
  %507 = vmatpush1.msra.mxu0 0.0
  %508 = vmatprep.subr.mxu0 0.0
  %509 = vmatpush1.msra.mxu0 0.0
  %510 = vmatprep.subr.mxu0 0.0
  %511 = vmatpush1.msra.mxu0 0.0
  %512 = vmatprep.subr.mxu0 0.0
  %513 = vmatpush1.msra.mxu0 0.0
  %514 = vmatprep.subr.mxu0 0.0
  %515 = vmatpush1.msra.mxu0 0.0
  %516 = vmatprep.mubr.f32.mxu0 0.0
  %517 = vmatmul.mubr.f32.gmra.mrb[0].mxu0 0.0
  %v518 = vpop.f32.mrb[0].mxu0
  %v519 = vadd.f32 0.0, %v518
  %v520 = vpop.f32.mrb[0].mxu0
  %v521 = vadd.f32 0.0, %v520
  %522 = vdwg.mxu0
  %523 = vmatprep.subr.mxu0 %v99
  %524 = vmatpush1.msra.mxu0 %v98
  %525 = vmatprep.subr.mxu0 %v103
  %526 = vmatpush1.msra.mxu0 %v102
  %527 = vmatprep.subr.mxu0 %v107
  %528 = vmatpush1.msra.mxu0 %v106
  %529 = vmatprep.subr.mxu0 %v111
  %530 = vmatpush1.msra.mxu0 %v110
  %531 = vmatprep.subr.mxu0 %v115
  %532 = vmatpush1.msra.mxu0 %v114
  %533 = vmatprep.subr.mxu0 %v119
  %534 = vmatpush1.msra.mxu0 %v118
  %535 = vmatprep.subr.mxu0 %v123
  %536 = vmatpush1.msra.mxu0 %v122
  %537 = vmatprep.subr.mxu0 %v127
  %538 = vmatpush1.msra.mxu0 %v126
  %539 = vmatprep.subr.mxu0 %v131
  %540 = vmatpush1.msra.mxu0 %v130
  %541 = vmatprep.subr.mxu0 %v135
  %542 = vmatpush1.msra.mxu0 %v134
  %543 = vmatprep.subr.mxu0 %v139
  %544 = vmatpush1.msra.mxu0 %v138
  %545 = vmatprep.subr.mxu0 %v143
  %546 = vmatpush1.msra.mxu0 %v142
  %547 = vmatprep.subr.mxu0 %v147
  %548 = vmatpush1.msra.mxu0 %v146
  %549 = vmatprep.subr.mxu0 %v151
  %550 = vmatpush1.msra.mxu0 %v150
  %551 = vmatprep.subr.mxu0 %v155
  %552 = vmatpush1.msra.mxu0 %v154
  %553 = vmatprep.subr.mxu0 %v159
  %554 = vmatpush1.msra.mxu0 %v158
  %555 = vmatprep.subr.mxu0 0.0
  %556 = vmatpush1.msra.mxu0 0.0
  %557 = vmatprep.subr.mxu0 0.0
  %558 = vmatpush1.msra.mxu0 0.0
  %559 = vmatprep.subr.mxu0 0.0
  %560 = vmatpush1.msra.mxu0 0.0
  %561 = vmatprep.subr.mxu0 0.0
  %562 = vmatpush1.msra.mxu0 0.0
  %563 = vmatprep.subr.mxu0 0.0
  %564 = vmatpush1.msra.mxu0 0.0
  %565 = vmatprep.subr.mxu0 0.0
  %566 = vmatpush1.msra.mxu0 0.0
  %567 = vmatprep.subr.mxu0 0.0
  %568 = vmatpush1.msra.mxu0 0.0
  %569 = vmatprep.subr.mxu0 0.0
  %570 = vmatpush1.msra.mxu0 0.0
  %571 = vmatprep.subr.mxu0 0.0
  %572 = vmatpush1.msra.mxu0 0.0
  %573 = vmatprep.subr.mxu0 0.0
  %574 = vmatpush1.msra.mxu0 0.0
  %575 = vmatprep.subr.mxu0 0.0
  %576 = vmatpush1.msra.mxu0 0.0
  %577 = vmatprep.subr.mxu0 0.0
  %578 = vmatpush1.msra.mxu0 0.0
  %579 = vmatprep.subr.mxu0 0.0
  %580 = vmatpush1.msra.mxu0 0.0
  %581 = vmatprep.subr.mxu0 0.0
  %582 = vmatpush1.msra.mxu0 0.0
  %583 = vmatprep.subr.mxu0 0.0
  %584 = vmatpush1.msra.mxu0 0.0
  %585 = vmatprep.subr.mxu0 0.0
  %586 = vmatpush1.msra.mxu0 0.0
  %587 = vmatprep.mubr.f32.mxu0 0.0
  %588 = vmatmul.mubr.f32.gmra.mrb[0].mxu0 0.0
  %v589 = vpop.f32.mrb[0].mxu0
  %v590 = vadd.f32 0.0, %v589
  %v591 = vpop.f32.mrb[0].mxu0
  %v592 = vadd.f32 0.0, %v591
  %593 = vdwg.mxu0
  %v594 = vadd.f32 %v448, %v519
  %v595 = vadd.f32 %v449, %v521
  %v596 = vadd.f32 %v450, %v590
  %v597 = vadd.f32 %v451, %v592
  %v598 = vxor.u32 %v594, 2147483648
  %v599 = vmul.f32 %v598, 1.442695
  %v600 = vpow.pop %v599
  %v601 = vadd.f32 %v600, 1.0
  %v602 = vrcp.pop %v601
  %v603 = vmul.f32 1.0, %v602
  %v604 = vxor.u32 %v595, 2147483648
  %v605 = vmul.f32 %v604, 1.442695
  %v606 = vpow.pop %v605
  %v607 = vadd.f32 %v606, 1.0
  %v608 = vrcp.pop %v607
  %v609 = vmul.f32 1.0, %v608
  %v610 = vtanh.pop %v596
  %v611 = vxor.u32 %v597, 2147483648
  %v612 = vmul.f32 %v611, 1.442695
  %v613 = vpow.pop %v612
  %v614 = vadd.f32 %v613, 1.0
  %v615 = vrcp.pop %v614
  %v616 = vmul.f32 1.0, %v615
  %v617 = vmul.f32 %v609, 0.0
  %v618 = vmul.f32 %v603, %v610
  %v619 = vadd.f32 %v617, %v618
  %v620 = vtanh.pop %v619
  %v621 = vmul.f32 %v616, %v620
  %622 = vst [vmem:[#allocation2] sm:$0xff] %v621
  %s623 = scalar_lea.vmem [#allocation3], 32
  %v624 = vld [vmem:[%s623] sm:$0xff]
  %v625 = vld [vmem:[%s623 + $0x8] sm:$0xff]
  %v626 = vld [vmem:[%s623 + $0x10] sm:$0xff]
  %v627 = vld [vmem:[%s623 + $0x18] sm:$0xff]
  %628 = vmatprep.subr.mxu0 %v97
  %629 = vmatpush1.msra.mxu0 %v96
  %630 = vmatprep.subr.mxu0 %v101
  %631 = vmatpush1.msra.mxu0 %v100
  %632 = vmatprep.subr.mxu0 %v105
  %633 = vmatpush1.msra.mxu0 %v104
  %634 = vmatprep.subr.mxu0 %v109
  %635 = vmatpush1.msra.mxu0 %v108
  %636 = vmatprep.subr.mxu0 %v113
  %637 = vmatpush1.msra.mxu0 %v112
  %638 = vmatprep.subr.mxu0 %v117
  %639 = vmatpush1.msra.mxu0 %v116
  %640 = vmatprep.subr.mxu0 %v121
  %641 = vmatpush1.msra.mxu0 %v120
  %642 = vmatprep.subr.mxu0 %v125
  %643 = vmatpush1.msra.mxu0 %v124
  %644 = vmatprep.subr.mxu0 %v129
  %645 = vmatpush1.msra.mxu0 %v128
  %646 = vmatprep.subr.mxu0 %v133
  %647 = vmatpush1.msra.mxu0 %v132
  %648 = vmatprep.subr.mxu0 %v137
  %649 = vmatpush1.msra.mxu0 %v136
  %650 = vmatprep.subr.mxu0 %v141
  %651 = vmatpush1.msra.mxu0 %v140
  %652 = vmatprep.subr.mxu0 %v145
  %653 = vmatpush1.msra.mxu0 %v144
  %654 = vmatprep.subr.mxu0 %v149
  %655 = vmatpush1.msra.mxu0 %v148
  %656 = vmatprep.subr.mxu0 %v153
  %657 = vmatpush1.msra.mxu0 %v152
  %658 = vmatprep.subr.mxu0 %v157
  %659 = vmatpush1.msra.mxu0 %v156
  %660 = vmatprep.subr.mxu0 0.0
  %661 = vmatpush1.msra.mxu0 0.0
  %662 = vmatprep.subr.mxu0 0.0
  %663 = vmatpush1.msra.mxu0 0.0
  %664 = vmatprep.subr.mxu0 0.0
  %665 = vmatpush1.msra.mxu0 0.0
  %666 = vmatprep.subr.mxu0 0.0
  %667 = vmatpush1.msra.mxu0 0.0
  %668 = vmatprep.subr.mxu0 0.0
  %669 = vmatpush1.msra.mxu0 0.0
  %670 = vmatprep.subr.mxu0 0.0
  %671 = vmatpush1.msra.mxu0 0.0
  %672 = vmatprep.subr.mxu0 0.0
  %673 = vmatpush1.msra.mxu0 0.0
  %674 = vmatprep.subr.mxu0 0.0
  %675 = vmatpush1.msra.mxu0 0.0
  %676 = vmatprep.subr.mxu0 0.0
  %677 = vmatpush1.msra.mxu0 0.0
  %678 = vmatprep.subr.mxu0 0.0
  %679 = vmatpush1.msra.mxu0 0.0
  %680 = vmatprep.subr.mxu0 0.0
  %681 = vmatpush1.msra.mxu0 0.0
  %682 = vmatprep.subr.mxu0 0.0
  %683 = vmatpush1.msra.mxu0 0.0
  %684 = vmatprep.subr.mxu0 0.0
  %685 = vmatpush1.msra.mxu0 0.0
  %686 = vmatprep.subr.mxu0 0.0
  %687 = vmatpush1.msra.mxu0 0.0
  %688 = vmatprep.subr.mxu0 0.0
  %689 = vmatpush1.msra.mxu0 0.0
  %690 = vmatprep.subr.mxu0 0.0
  %691 = vmatpush1.msra.mxu0 0.0
  %692 = vmatprep.mubr.f32.mxu0 0.0
  %693 = vmatmul.mubr.f32.gmra.mrb[0].mxu0 %v621
  %v694 = vpop.f32.mrb[0].mxu0
  %v695 = vadd.f32 0.0, %v694
  %v696 = vpop.f32.mrb[0].mxu0
  %v697 = vadd.f32 0.0, %v696
  %698 = vdwg.mxu0
  %699 = vmatprep.subr.mxu0 %v99
  %700 = vmatpush1.msra.mxu0 %v98
  %701 = vmatprep.subr.mxu0 %v103
  %702 = vmatpush1.msra.mxu0 %v102
  %703 = vmatprep.subr.mxu0 %v107
  %704 = vmatpush1.msra.mxu0 %v106
  %705 = vmatprep.subr.mxu0 %v111
  %706 = vmatpush1.msra.mxu0 %v110
  %707 = vmatprep.subr.mxu0 %v115
  %708 = vmatpush1.msra.mxu0 %v114
  %709 = vmatprep.subr.mxu0 %v119
  %710 = vmatpush1.msra.mxu0 %v118
  %711 = vmatprep.subr.mxu0 %v123
  %712 = vmatpush1.msra.mxu0 %v122
  %713 = vmatprep.subr.mxu0 %v127
  %714 = vmatpush1.msra.mxu0 %v126
  %715 = vmatprep.subr.mxu0 %v131
  %716 = vmatpush1.msra.mxu0 %v130
  %717 = vmatprep.subr.mxu0 %v135
  %718 = vmatpush1.msra.mxu0 %v134
  %719 = vmatprep.subr.mxu0 %v139
  %720 = vmatpush1.msra.mxu0 %v138
  %721 = vmatprep.subr.mxu0 %v143
  %722 = vmatpush1.msra.mxu0 %v142
  %723 = vmatprep.subr.mxu0 %v147
  %724 = vmatpush1.msra.mxu0 %v146
  %725 = vmatprep.subr.mxu0 %v151
  %726 = vmatpush1.msra.mxu0 %v150
  %727 = vmatprep.subr.mxu0 %v155
  %728 = vmatpush1.msra.mxu0 %v154
  %729 = vmatprep.subr.mxu0 %v159
  %730 = vmatpush1.msra.mxu0 %v158
  %731 = vmatprep.subr.mxu0 0.0
  %732 = vmatpush1.msra.mxu0 0.0
  %733 = vmatprep.subr.mxu0 0.0
  %734 = vmatpush1.msra.mxu0 0.0
  %735 = vmatprep.subr.mxu0 0.0
  %736 = vmatpush1.msra.mxu0 0.0
  %737 = vmatprep.subr.mxu0 0.0
  %738 = vmatpush1.msra.mxu0 0.0
  %739 = vmatprep.subr.mxu0 0.0
  %740 = vmatpush1.msra.mxu0 0.0
  %741 = vmatprep.subr.mxu0 0.0
  %742 = vmatpush1.msra.mxu0 0.0
  %743 = vmatprep.subr.mxu0 0.0
  %744 = vmatpush1.msra.mxu0 0.0
  %745 = vmatprep.subr.mxu0 0.0
  %746 = vmatpush1.msra.mxu0 0.0
  %747 = vmatprep.subr.mxu0 0.0
  %748 = vmatpush1.msra.mxu0 0.0
  %749 = vmatprep.subr.mxu0 0.0
  %750 = vmatpush1.msra.mxu0 0.0
  %751 = vmatprep.subr.mxu0 0.0
  %752 = vmatpush1.msra.mxu0 0.0
  %753 = vmatprep.subr.mxu0 0.0
  %754 = vmatpush1.msra.mxu0 0.0
  %755 = vmatprep.subr.mxu0 0.0
  %756 = vmatpush1.msra.mxu0 0.0
  %757 = vmatprep.subr.mxu0 0.0
  %758 = vmatpush1.msra.mxu0 0.0
  %759 = vmatprep.subr.mxu0 0.0
  %760 = vmatpush1.msra.mxu0 0.0
  %761 = vmatprep.subr.mxu0 0.0
  %762 = vmatpush1.msra.mxu0 0.0
  %763 = vmatprep.mubr.f32.mxu0 0.0
  %764 = vmatmul.mubr.f32.gmra.mrb[0].mxu0 %v621
  %v765 = vpop.f32.mrb[0].mxu0
  %v766 = vadd.f32 0.0, %v765
  %v767 = vpop.f32.mrb[0].mxu0
  %v768 = vadd.f32 0.0, %v767
  %769 = vdwg.mxu0
  %v770 = vadd.f32 %v624, %v695
  %v771 = vadd.f32 %v625, %v697
  %v772 = vadd.f32 %v626, %v766
  %v773 = vadd.f32 %v627, %v768
  %v774 = vxor.u32 %v770, 2147483648
  %v775 = vmul.f32 %v774, 1.442695
  %v776 = vpow.pop %v775
  %v777 = vadd.f32 %v776, 1.0
  %v778 = vrcp.pop %v777
  %v779 = vmul.f32 1.0, %v778
  %v780 = vxor.u32 %v771, 2147483648
  %v781 = vmul.f32 %v780, 1.442695
  %v782 = vpow.pop %v781
  %v783 = vadd.f32 %v782, 1.0
  %v784 = vrcp.pop %v783
  %v785 = vmul.f32 1.0, %v784
  %v786 = vtanh.pop %v772
  %v787 = vxor.u32 %v773, 2147483648
  %v788 = vmul.f32 %v787, 1.442695
  %v789 = vpow.pop %v788
  %v790 = vadd.f32 %v789, 1.0
  %v791 = vrcp.pop %v790
  %v792 = vmul.f32 1.0, %v791
  %v793 = vmul.f32 %v785, %v619
  %v794 = vmul.f32 %v779, %v786
  %v795 = vadd.f32 %v793, %v794
  %v796 = vtanh.pop %v795
  %v797 = vmul.f32 %v792, %v796
  %s798 = scalar_lea.vmem [#allocation2], 8
  %799 = vst [vmem:[%s798] sm:$0xff] %v797
  %s800 = scalar_lea.vmem [#allocation3], 64
  %v801 = vld [vmem:[%s800] sm:$0xff]
  %v802 = vld [vmem:[%s800 + $0x8] sm:$0xff]
  %v803 = vld [vmem:[%s800 + $0x10] sm:$0xff]
  %v804 = vld [vmem:[%s800 + $0x18] sm:$0xff]
  %805 = vmatprep.subr.mxu0 %v97
  %806 = vmatpush1.msra.mxu0 %v96
  %807 = vmatprep.subr.mxu0 %v101
  %808 = vmatpush1.msra.mxu0 %v100
  %809 = vmatprep.subr.mxu0 %v105
  %810 = vmatpush1.msra.mxu0 %v104
  %811 = vmatprep.subr.mxu0 %v109
  %812 = vmatpush1.msra.mxu0 %v108
  %813 = vmatprep.subr.mxu0 %v113
  %814 = vmatpush1.msra.mxu0 %v112
  %815 = vmatprep.subr.mxu0 %v117
  %816 = vmatpush1.msra.mxu0 %v116
  %817 = vmatprep.subr.mxu0 %v121
  %818 = vmatpush1.msra.mxu0 %v120
  %819 = vmatprep.subr.mxu0 %v125
  %820 = vmatpush1.msra.mxu0 %v124
  %821 = vmatprep.subr.mxu0 %v129
  %822 = vmatpush1.msra.mxu0 %v128
  %823 = vmatprep.subr.mxu0 %v133
  %824 = vmatpush1.msra.mxu0 %v132
  %825 = vmatprep.subr.mxu0 %v137
  %826 = vmatpush1.msra.mxu0 %v136
  %827 = vmatprep.subr.mxu0 %v141
  %828 = vmatpush1.msra.mxu0 %v140
  %829 = vmatprep.subr.mxu0 %v145
  %830 = vmatpush1.msra.mxu0 %v144
  %831 = vmatprep.subr.mxu0 %v149
  %832 = vmatpush1.msra.mxu0 %v148
  %833 = vmatprep.subr.mxu0 %v153
  %834 = vmatpush1.msra.mxu0 %v152
  %835 = vmatprep.subr.mxu0 %v157
  %836 = vmatpush1.msra.mxu0 %v156
  %837 = vmatprep.subr.mxu0 0.0
  %838 = vmatpush1.msra.mxu0 0.0
  %839 = vmatprep.subr.mxu0 0.0
  %840 = vmatpush1.msra.mxu0 0.0
  %841 = vmatprep.subr.mxu0 0.0
  %842 = vmatpush1.msra.mxu0 0.0
  %843 = vmatprep.subr.mxu0 0.0
  %844 = vmatpush1.msra.mxu0 0.0
  %845 = vmatprep.subr.mxu0 0.0
  %846 = vmatpush1.msra.mxu0 0.0
  %847 = vmatprep.subr.mxu0 0.0
  %848 = vmatpush1.msra.mxu0 0.0
  %849 = vmatprep.subr.mxu0 0.0
  %850 = vmatpush1.msra.mxu0 0.0
  %851 = vmatprep.subr.mxu0 0.0
  %852 = vmatpush1.msra.mxu0 0.0
  %853 = vmatprep.subr.mxu0 0.0
  %854 = vmatpush1.msra.mxu0 0.0
  %855 = vmatprep.subr.mxu0 0.0
  %856 = vmatpush1.msra.mxu0 0.0
  %857 = vmatprep.subr.mxu0 0.0
  %858 = vmatpush1.msra.mxu0 0.0
  %859 = vmatprep.subr.mxu0 0.0
  %860 = vmatpush1.msra.mxu0 0.0
  %861 = vmatprep.subr.mxu0 0.0
  %862 = vmatpush1.msra.mxu0 0.0
  %863 = vmatprep.subr.mxu0 0.0
  %864 = vmatpush1.msra.mxu0 0.0
  %865 = vmatprep.subr.mxu0 0.0
  %866 = vmatpush1.msra.mxu0 0.0
  %867 = vmatprep.subr.mxu0 0.0
  %868 = vmatpush1.msra.mxu0 0.0
  %869 = vmatprep.mubr.f32.mxu0 0.0
  %870 = vmatmul.mubr.f32.gmra.mrb[0].mxu0 %v797
  %v871 = vpop.f32.mrb[0].mxu0
  %v872 = vadd.f32 0.0, %v871
  %v873 = vpop.f32.mrb[0].mxu0
  %v874 = vadd.f32 0.0, %v873
  %875 = vdwg.mxu0
  %876 = vmatprep.subr.mxu0 %v99
  %877 = vmatpush1.msra.mxu0 %v98
  %878 = vmatprep.subr.mxu0 %v103
  %879 = vmatpush1.msra.mxu0 %v102
  %880 = vmatprep.subr.mxu0 %v107
  %881 = vmatpush1.msra.mxu0 %v106
  %882 = vmatprep.subr.mxu0 %v111
  %883 = vmatpush1.msra.mxu0 %v110
  %884 = vmatprep.subr.mxu0 %v115
  %885 = vmatpush1.msra.mxu0 %v114
  %886 = vmatprep.subr.mxu0 %v119
  %887 = vmatpush1.msra.mxu0 %v118
  %888 = vmatprep.subr.mxu0 %v123
  %889 = vmatpush1.msra.mxu0 %v122
  %890 = vmatprep.subr.mxu0 %v127
  %891 = vmatpush1.msra.mxu0 %v126
  %892 = vmatprep.subr.mxu0 %v131
  %893 = vmatpush1.msra.mxu0 %v130
  %894 = vmatprep.subr.mxu0 %v135
  %895 = vmatpush1.msra.mxu0 %v134
  %896 = vmatprep.subr.mxu0 %v139
  %897 = vmatpush1.msra.mxu0 %v138
  %898 = vmatprep.subr.mxu0 %v143
  %899 = vmatpush1.msra.mxu0 %v142
  %900 = vmatprep.subr.mxu0 %v147
  %901 = vmatpush1.msra.mxu0 %v146
  %902 = vmatprep.subr.mxu0 %v151
  %903 = vmatpush1.msra.mxu0 %v150
  %904 = vmatprep.subr.mxu0 %v155
  %905 = vmatpush1.msra.mxu0 %v154
  %906 = vmatprep.subr.mxu0 %v159
  %907 = vmatpush1.msra.mxu0 %v158
  %908 = vmatprep.subr.mxu0 0.0
  %909 = vmatpush1.msra.mxu0 0.0
  %910 = vmatprep.subr.mxu0 0.0
  %911 = vmatpush1.msra.mxu0 0.0
  %912 = vmatprep.subr.mxu0 0.0
  %913 = vmatpush1.msra.mxu0 0.0
  %914 = vmatprep.subr.mxu0 0.0
  %915 = vmatpush1.msra.mxu0 0.0
  %916 = vmatprep.subr.mxu0 0.0
  %917 = vmatpush1.msra.mxu0 0.0
  %918 = vmatprep.subr.mxu0 0.0
  %919 = vmatpush1.msra.mxu0 0.0
  %920 = vmatprep.subr.mxu0 0.0
  %921 = vmatpush1.msra.mxu0 0.0
  %922 = vmatprep.subr.mxu0 0.0
  %923 = vmatpush1.msra.mxu0 0.0
  %924 = vmatprep.subr.mxu0 0.0
  %925 = vmatpush1.msra.mxu0 0.0
  %926 = vmatprep.subr.mxu0 0.0
  %927 = vmatpush1.msra.mxu0 0.0
  %928 = vmatprep.subr.mxu0 0.0
  %929 = vmatpush1.msra.mxu0 0.0
  %930 = vmatprep.subr.mxu0 0.0
  %931 = vmatpush1.msra.mxu0 0.0
  %932 = vmatprep.subr.mxu0 0.0
  %933 = vmatpush1.msra.mxu0 0.0
  %934 = vmatprep.subr.mxu0 0.0
  %935 = vmatpush1.msra.mxu0 0.0
  %936 = vmatprep.subr.mxu0 0.0
  %937 = vmatpush1.msra.mxu0 0.0
  %938 = vmatprep.subr.mxu0 0.0
  %939 = vmatpush1.msra.mxu0 0.0
  %940 = vmatprep.mubr.f32.mxu0 0.0
  %941 = vmatmul.mubr.f32.gmra.mrb[0].mxu0 %v797
  %v942 = vpop.f32.mrb[0].mxu0
  %v943 = vadd.f32 0.0, %v942
  %v944 = vpop.f32.mrb[0].mxu0
  %v945 = vadd.f32 0.0, %v944
  %946 = vdwg.mxu0
  %v947 = vadd.f32 %v801, %v872
  %v948 = vadd.f32 %v802, %v874
  %v949 = vadd.f32 %v803, %v943
  %v950 = vadd.f32 %v804, %v945
  %v951 = vxor.u32 %v947, 2147483648
  %v952 = vmul.f32 %v951, 1.442695
  %v953 = vpow.pop %v952
  %v954 = vadd.f32 %v953, 1.0
  %v955 = vrcp.pop %v954
  %v956 = vmul.f32 1.0, %v955
  %v957 = vxor.u32 %v948, 2147483648
  %v958 = vmul.f32 %v957, 1.442695
  %v959 = vpow.pop %v958
  %v960 = vadd.f32 %v959, 1.0
  %v961 = vrcp.pop %v960
  %v962 = vmul.f32 1.0, %v961
  %v963 = vtanh.pop %v949
  %v964 = vxor.u32 %v950, 2147483648
  %v965 = vmul.f32 %v964, 1.442695
  %v966 = vpow.pop %v965
  %v967 = vadd.f32 %v966, 1.0
  %v968 = vrcp.pop %v967
  %v969 = vmul.f32 1.0, %v968
  %v970 = vmul.f32 %v962, %v795
  %v971 = vmul.f32 %v956, %v963
  %v972 = vadd.f32 %v970, %v971
  %v973 = vtanh.pop %v972
  %v974 = vmul.f32 %v969, %v973
  %s975 = scalar_lea.vmem [#allocation2], 16
  %976 = vst [vmem:[%s975] sm:$0xff] %v974
  %s977 = scalar_lea.vmem [#allocation3], 96
  %v978 = vld [vmem:[%s977] sm:$0xff]
  %v979 = vld [vmem:[%s977 + $0x8] sm:$0xff]
  %v980 = vld [vmem:[%s977 + $0x10] sm:$0xff]
  %v981 = vld [vmem:[%s977 + $0x18] sm:$0xff]
  %982 = vmatprep.subr.mxu0 %v97
  %983 = vmatpush1.msra.mxu0 %v96
  %984 = vmatprep.subr.mxu0 %v101
  %985 = vmatpush1.msra.mxu0 %v100
  %986 = vmatprep.subr.mxu0 %v105
  %987 = vmatpush1.msra.mxu0 %v104
  %988 = vmatprep.subr.mxu0 %v109
  %989 = vmatpush1.msra.mxu0 %v108
  %990 = vmatprep.subr.mxu0 %v113
  %991 = vmatpush1.msra.mxu0 %v112
  %992 = vmatprep.subr.mxu0 %v117
  %993 = vmatpush1.msra.mxu0 %v116
  %994 = vmatprep.subr.mxu0 %v121
  %995 = vmatpush1.msra.mxu0 %v120
  %996 = vmatprep.subr.mxu0 %v125
  %997 = vmatpush1.msra.mxu0 %v124
  %998 = vmatprep.subr.mxu0 %v129
  %999 = vmatpush1.msra.mxu0 %v128
  %1000 = vmatprep.subr.mxu0 %v133
  %1001 = vmatpush1.msra.mxu0 %v132
  %1002 = vmatprep.subr.mxu0 %v137
  %1003 = vmatpush1.msra.mxu0 %v136
  %1004 = vmatprep.subr.mxu0 %v141
  %1005 = vmatpush1.msra.mxu0 %v140
  %1006 = vmatprep.subr.mxu0 %v145
  %1007 = vmatpush1.msra.mxu0 %v144
  %1008 = vmatprep.subr.mxu0 %v149
  %1009 = vmatpush1.msra.mxu0 %v148
  %1010 = vmatprep.subr.mxu0 %v153
  %1011 = vmatpush1.msra.mxu0 %v152
  %1012 = vmatprep.subr.mxu0 %v157
  %1013 = vmatpush1.msra.mxu0 %v156
  %1014 = vmatprep.subr.mxu0 0.0
  %1015 = vmatpush1.msra.mxu0 0.0
  %1016 = vmatprep.subr.mxu0 0.0
  %1017 = vmatpush1.msra.mxu0 0.0
  %1018 = vmatprep.subr.mxu0 0.0
  %1019 = vmatpush1.msra.mxu0 0.0
  %1020 = vmatprep.subr.mxu0 0.0
  %1021 = vmatpush1.msra.mxu0 0.0
  %1022 = vmatprep.subr.mxu0 0.0
  %1023 = vmatpush1.msra.mxu0 0.0
  %1024 = vmatprep.subr.mxu0 0.0
  %1025 = vmatpush1.msra.mxu0 0.0
  %1026 = vmatprep.subr.mxu0 0.0
  %1027 = vmatpush1.msra.mxu0 0.0
  %1028 = vmatprep.subr.mxu0 0.0
  %1029 = vmatpush1.msra.mxu0 0.0
  %1030 = vmatprep.subr.mxu0 0.0
  %1031 = vmatpush1.msra.mxu0 0.0
  %1032 = vmatprep.subr.mxu0 0.0
  %1033 = vmatpush1.msra.mxu0 0.0
  %1034 = vmatprep.subr.mxu0 0.0
  %1035 = vmatpush1.msra.mxu0 0.0
  %1036 = vmatprep.subr.mxu0 0.0
  %1037 = vmatpush1.msra.mxu0 0.0
  %1038 = vmatprep.subr.mxu0 0.0
  %1039 = vmatpush1.msra.mxu0 0.0
  %1040 = vmatprep.subr.mxu0 0.0
  %1041 = vmatpush1.msra.mxu0 0.0
  %1042 = vmatprep.subr.mxu0 0.0
  %1043 = vmatpush1.msra.mxu0 0.0
  %1044 = vmatprep.subr.mxu0 0.0
  %1045 = vmatpush1.msra.mxu0 0.0
  %1046 = vmatprep.mubr.f32.mxu0 0.0
  %1047 = vmatmul.mubr.f32.gmra.mrb[0].mxu0 %v974
  %v1048 = vpop.f32.mrb[0].mxu0
  %v1049 = vadd.f32 0.0, %v1048
  %v1050 = vpop.f32.mrb[0].mxu0
  %v1051 = vadd.f32 0.0, %v1050
  %1052 = vdwg.mxu0
  %1053 = vmatprep.subr.mxu0 %v99
  %1054 = vmatpush1.msra.mxu0 %v98
  %1055 = vmatprep.subr.mxu0 %v103
  %1056 = vmatpush1.msra.mxu0 %v102
  %1057 = vmatprep.subr.mxu0 %v107
  %1058 = vmatpush1.msra.mxu0 %v106
  %1059 = vmatprep.subr.mxu0 %v111
  %1060 = vmatpush1.msra.mxu0 %v110
  %1061 = vmatprep.subr.mxu0 %v115
  %1062 = vmatpush1.msra.mxu0 %v114
  %1063 = vmatprep.subr.mxu0 %v119
  %1064 = vmatpush1.msra.mxu0 %v118
  %1065 = vmatprep.subr.mxu0 %v123
  %1066 = vmatpush1.msra.mxu0 %v122
  %1067 = vmatprep.subr.mxu0 %v127
  %1068 = vmatpush1.msra.mxu0 %v126
  %1069 = vmatprep.subr.mxu0 %v131
  %1070 = vmatpush1.msra.mxu0 %v130
  %1071 = vmatprep.subr.mxu0 %v135
  %1072 = vmatpush1.msra.mxu0 %v134
  %1073 = vmatprep.subr.mxu0 %v139
  %1074 = vmatpush1.msra.mxu0 %v138
  %1075 = vmatprep.subr.mxu0 %v143
  %1076 = vmatpush1.msra.mxu0 %v142
  %1077 = vmatprep.subr.mxu0 %v147
  %1078 = vmatpush1.msra.mxu0 %v146
  %1079 = vmatprep.subr.mxu0 %v151
  %1080 = vmatpush1.msra.mxu0 %v150
  %1081 = vmatprep.subr.mxu0 %v155
  %1082 = vmatpush1.msra.mxu0 %v154
  %1083 = vmatprep.subr.mxu0 %v159
  %1084 = vmatpush1.msra.mxu0 %v158
  %1085 = vmatprep.subr.mxu0 0.0
  %1086 = vmatpush1.msra.mxu0 0.0
  %1087 = vmatprep.subr.mxu0 0.0
  %1088 = vmatpush1.msra.mxu0 0.0
  %1089 = vmatprep.subr.mxu0 0.0
  %1090 = vmatpush1.msra.mxu0 0.0
  %1091 = vmatprep.subr.mxu0 0.0
  %1092 = vmatpush1.msra.mxu0 0.0
  %1093 = vmatprep.subr.mxu0 0.0
  %1094 = vmatpush1.msra.mxu0 0.0
  %1095 = vmatprep.subr.mxu0 0.0
  %1096 = vmatpush1.msra.mxu0 0.0
  %1097 = vmatprep.subr.mxu0 0.0
  %1098 = vmatpush1.msra.mxu0 0.0
  %1099 = vmatprep.subr.mxu0 0.0
  %1100 = vmatpush1.msra.mxu0 0.0
  %1101 = vmatprep.subr.mxu0 0.0
  %1102 = vmatpush1.msra.mxu0 0.0
  %1103 = vmatprep.subr.mxu0 0.0
  %1104 = vmatpush1.msra.mxu0 0.0
  %1105 = vmatprep.subr.mxu0 0.0
  %1106 = vmatpush1.msra.mxu0 0.0
  %1107 = vmatprep.subr.mxu0 0.0
  %1108 = vmatpush1.msra.mxu0 0.0
  %1109 = vmatprep.subr.mxu0 0.0
  %1110 = vmatpush1.msra.mxu0 0.0
  %1111 = vmatprep.subr.mxu0 0.0
  %1112 = vmatpush1.msra.mxu0 0.0
  %1113 = vmatprep.subr.mxu0 0.0
  %1114 = vmatpush1.msra.mxu0 0.0
  %1115 = vmatprep.subr.mxu0 0.0
  %1116 = vmatpush1.msra.mxu0 0.0
  %1117 = vmatprep.mubr.f32.mxu0 0.0
  %1118 = vmatmul.mubr.f32.gmra.mrb[0].mxu0 %v974
  %v1119 = vpop.f32.mrb[0].mxu0
  %v1120 = vadd.f32 0.0, %v1119
  %v1121 = vpop.f32.mrb[0].mxu0
  %v1122 = vadd.f32 0.0, %v1121
  %1123 = vdwg.mxu0
  %v1124 = vadd.f32 %v978, %v1049
  %v1125 = vadd.f32 %v979, %v1051
  %v1126 = vadd.f32 %v980, %v1120
  %v1127 = vadd.f32 %v981, %v1122
  %v1128 = vxor.u32 %v1124, 2147483648
  %v1129 = vmul.f32 %v1128, 1.442695
  %v1130 = vpow.pop %v1129
  %v1131 = vadd.f32 %v1130, 1.0
  %v1132 = vrcp.pop %v1131
  %v1133 = vmul.f32 1.0, %v1132
  %v1134 = vxor.u32 %v1125, 2147483648
  %v1135 = vmul.f32 %v1134, 1.442695
  %v1136 = vpow.pop %v1135
  %v1137 = vadd.f32 %v1136, 1.0
  %v1138 = vrcp.pop %v1137
  %v1139 = vmul.f32 1.0, %v1138
  %v1140 = vtanh.pop %v1126
  %v1141 = vxor.u32 %v1127, 2147483648
  %v1142 = vmul.f32 %v1141, 1.442695
  %v1143 = vpow.pop %v1142
  %v1144 = vadd.f32 %v1143, 1.0
  %v1145 = vrcp.pop %v1144
  %v1146 = vmul.f32 1.0, %v1145
  %v1147 = vmul.f32 %v1139, %v972
  %v1148 = vmul.f32 %v1133, %v1140
  %v1149 = vadd.f32 %v1147, %v1148
  %v1150 = vtanh.pop %v1149
  %v1151 = vmul.f32 %v1146, %v1150
  %s1152 = scalar_lea.vmem [#allocation2], 24
  %1153 = vst [vmem:[%s1152] sm:$0xff] %v1151
  %s1154 = scalar_lea.vmem [#allocation3], 128
  %v1155 = vld [vmem:[%s1154] sm:$0xff]
  %v1156 = vld [vmem:[%s1154 + $0x8] sm:$0xff]
  %v1157 = vld [vmem:[%s1154 + $0x10] sm:$0xff]
  %v1158 = vld [vmem:[%s1154 + $0x18] sm:$0xff]
  %1159 = vmatprep.subr.mxu0 %v97
  %1160 = vmatpush1.msra.mxu0 %v96
  %1161 = vmatprep.subr.mxu0 %v101
  %1162 = vmatpush1.msra.mxu0 %v100
  %1163 = vmatprep.subr.mxu0 %v105
  %1164 = vmatpush1.msra.mxu0 %v104
  %1165 = vmatprep.subr.mxu0 %v109
  %1166 = vmatpush1.msra.mxu0 %v108
  %1167 = vmatprep.subr.mxu0 %v113
  %1168 = vmatpush1.msra.mxu0 %v112
  %1169 = vmatprep.subr.mxu0 %v117
  %1170 = vmatpush1.msra.mxu0 %v116
  %1171 = vmatprep.subr.mxu0 %v121
  %1172 = vmatpush1.msra.mxu0 %v120
  %1173 = vmatprep.subr.mxu0 %v125
  %1174 = vmatpush1.msra.mxu0 %v124
  %1175 = vmatprep.subr.mxu0 %v129
  %1176 = vmatpush1.msra.mxu0 %v128
  %1177 = vmatprep.subr.mxu0 %v133
  %1178 = vmatpush1.msra.mxu0 %v132
  %1179 = vmatprep.subr.mxu0 %v137
  %1180 = vmatpush1.msra.mxu0 %v136
  %1181 = vmatprep.subr.mxu0 %v141
  %1182 = vmatpush1.msra.mxu0 %v140
  %1183 = vmatprep.subr.mxu0 %v145
  %1184 = vmatpush1.msra.mxu0 %v144
  %1185 = vmatprep.subr.mxu0 %v149
  %1186 = vmatpush1.msra.mxu0 %v148
  %1187 = vmatprep.subr.mxu0 %v153
  %1188 = vmatpush1.msra.mxu0 %v152
  %1189 = vmatprep.subr.mxu0 %v157
  %1190 = vmatpush1.msra.mxu0 %v156
  %1191 = vmatprep.subr.mxu0 0.0
  %1192 = vmatpush1.msra.mxu0 0.0
  %1193 = vmatprep.subr.mxu0 0.0
  %1194 = vmatpush1.msra.mxu0 0.0
  %1195 = vmatprep.subr.mxu0 0.0
  %1196 = vmatpush1.msra.mxu0 0.0
  %1197 = vmatprep.subr.mxu0 0.0
  %1198 = vmatpush1.msra.mxu0 0.0
  %1199 = vmatprep.subr.mxu0 0.0
  %1200 = vmatpush1.msra.mxu0 0.0
  %1201 = vmatprep.subr.mxu0 0.0
  %1202 = vmatpush1.msra.mxu0 0.0
  %1203 = vmatprep.subr.mxu0 0.0
  %1204 = vmatpush1.msra.mxu0 0.0
  %1205 = vmatprep.subr.mxu0 0.0
  %1206 = vmatpush1.msra.mxu0 0.0
  %1207 = vmatprep.subr.mxu0 0.0
  %1208 = vmatpush1.msra.mxu0 0.0
  %1209 = vmatprep.subr.mxu0 0.0
  %1210 = vmatpush1.msra.mxu0 0.0
  %1211 = vmatprep.subr.mxu0 0.0
  %1212 = vmatpush1.msra.mxu0 0.0
  %1213 = vmatprep.subr.mxu0 0.0
  %1214 = vmatpush1.msra.mxu0 0.0
  %1215 = vmatprep.subr.mxu0 0.0
  %1216 = vmatpush1.msra.mxu0 0.0
  %1217 = vmatprep.subr.mxu0 0.0
  %1218 = vmatpush1.msra.mxu0 0.0
  %1219 = vmatprep.subr.mxu0 0.0
  %1220 = vmatpush1.msra.mxu0 0.0
  %1221 = vmatprep.subr.mxu0 0.0
  %1222 = vmatpush1.msra.mxu0 0.0
  %1223 = vmatprep.mubr.f32.mxu0 0.0
  %1224 = vmatmul.mubr.f32.gmra.mrb[0].mxu0 %v1151
  %v1225 = vpop.f32.mrb[0].mxu0
  %v1226 = vadd.f32 0.0, %v1225
  %v1227 = vpop.f32.mrb[0].mxu0
  %v1228 = vadd.f32 0.0, %v1227
  %1229 = vdwg.mxu0
  %1230 = vmatprep.subr.mxu0 %v99
  %1231 = vmatpush1.msra.mxu0 %v98
  %1232 = vmatprep.subr.mxu0 %v103
  %1233 = vmatpush1.msra.mxu0 %v102
  %1234 = vmatprep.subr.mxu0 %v107
  %1235 = vmatpush1.msra.mxu0 %v106
  %1236 = vmatprep.subr.mxu0 %v111
  %1237 = vmatpush1.msra.mxu0 %v110
  %1238 = vmatprep.subr.mxu0 %v115
  %1239 = vmatpush1.msra.mxu0 %v114
  %1240 = vmatprep.subr.mxu0 %v119
  %1241 = vmatpush1.msra.mxu0 %v118
  %1242 = vmatprep.subr.mxu0 %v123
  %1243 = vmatpush1.msra.mxu0 %v122
  %1244 = vmatprep.subr.mxu0 %v127
  %1245 = vmatpush1.msra.mxu0 %v126
  %1246 = vmatprep.subr.mxu0 %v131
  %1247 = vmatpush1.msra.mxu0 %v130
  %1248 = vmatprep.subr.mxu0 %v135
  %1249 = vmatpush1.msra.mxu0 %v134
  %1250 = vmatprep.subr.mxu0 %v139
  %1251 = vmatpush1.msra.mxu0 %v138
  %1252 = vmatprep.subr.mxu0 %v143
  %1253 = vmatpush1.msra.mxu0 %v142
  %1254 = vmatprep.subr.mxu0 %v147
  %1255 = vmatpush1.msra.mxu0 %v146
  %1256 = vmatprep.subr.mxu0 %v151
  %1257 = vmatpush1.msra.mxu0 %v150
  %1258 = vmatprep.subr.mxu0 %v155
  %1259 = vmatpush1.msra.mxu0 %v154
  %1260 = vmatprep.subr.mxu0 %v159
  %1261 = vmatpush1.msra.mxu0 %v158
  %1262 = vmatprep.subr.mxu0 0.0
  %1263 = vmatpush1.msra.mxu0 0.0
  %1264 = vmatprep.subr.mxu0 0.0
  %1265 = vmatpush1.msra.mxu0 0.0
  %1266 = vmatprep.subr.mxu0 0.0
  %1267 = vmatpush1.msra.mxu0 0.0
  %1268 = vmatprep.subr.mxu0 0.0
  %1269 = vmatpush1.msra.mxu0 0.0
  %1270 = vmatprep.subr.mxu0 0.0
  %1271 = vmatpush1.msra.mxu0 0.0
  %1272 = vmatprep.subr.mxu0 0.0
  %1273 = vmatpush1.msra.mxu0 0.0
  %1274 = vmatprep.subr.mxu0 0.0
  %1275 = vmatpush1.msra.mxu0 0.0
  %1276 = vmatprep.subr.mxu0 0.0
  %1277 = vmatpush1.msra.mxu0 0.0
  %1278 = vmatprep.subr.mxu0 0.0
  %1279 = vmatpush1.msra.mxu0 0.0
  %1280 = vmatprep.subr.mxu0 0.0
  %1281 = vmatpush1.msra.mxu0 0.0
  %1282 = vmatprep.subr.mxu0 0.0
  %1283 = vmatpush1.msra.mxu0 0.0
  %1284 = vmatprep.subr.mxu0 0.0
  %1285 = vmatpush1.msra.mxu0 0.0
  %1286 = vmatprep.subr.mxu0 0.0
  %1287 = vmatpush1.msra.mxu0 0.0
  %1288 = vmatprep.subr.mxu0 0.0
  %1289 = vmatpush1.msra.mxu0 0.0
  %1290 = vmatprep.subr.mxu0 0.0
  %1291 = vmatpush1.msra.mxu0 0.0
  %1292 = vmatprep.subr.mxu0 0.0
  %1293 = vmatpush1.msra.mxu0 0.0
  %1294 = vmatprep.mubr.f32.mxu0 0.0
  %1295 = vmatmul.mubr.f32.gmra.mrb[0].mxu0 %v1151
  %v1296 = vpop.f32.mrb[0].mxu0
  %v1297 = vadd.f32 0.0, %v1296
  %v1298 = vpop.f32.mrb[0].mxu0
  %v1299 = vadd.f32 0.0, %v1298
  %1300 = vdwg.mxu0
  %v1301 = vadd.f32 %v1155, %v1226
  %v1302 = vadd.f32 %v1156, %v1228
  %v1303 = vadd.f32 %v1157, %v1297
  %v1304 = vadd.f32 %v1158, %v1299
  %v1305 = vxor.u32 %v1301, 2147483648
  %v1306 = vmul.f32 %v1305, 1.442695
  %v1307 = vpow.pop %v1306
  %v1308 = vadd.f32 %v1307, 1.0
  %v1309 = vrcp.pop %v1308
  %v1310 = vmul.f32 1.0, %v1309
  %v1311 = vxor.u32 %v1302, 2147483648
  %v1312 = vmul.f32 %v1311, 1.442695
  %v1313 = vpow.pop %v1312
  %v1314 = vadd.f32 %v1313, 1.0
  %v1315 = vrcp.pop %v1314
  %v1316 = vmul.f32 1.0, %v1315
  %v1317 = vtanh.pop %v1303
  %v1318 = vxor.u32 %v1304, 2147483648
  %v1319 = vmul.f32 %v1318, 1.442695
  %v1320 = vpow.pop %v1319
  %v1321 = vadd.f32 %v1320, 1.0
  %v1322 = vrcp.pop %v1321
  %v1323 = vmul.f32 1.0, %v1322
  %v1324 = vmul.f32 %v1316, %v1149
  %v1325 = vmul.f32 %v1310, %v1317
  %v1326 = vadd.f32 %v1324, %v1325
  %v1327 = vtanh.pop %v1326
  %v1328 = vmul.f32 %v1323, %v1327
  %s1329 = scalar_lea.vmem [#allocation2], 32
  %1330 = vst [vmem:[%s1329] sm:$0xff] %v1328
  %s1331 = scalar_lea.vmem [#allocation3], 160
  %v1332 = vld [vmem:[%s1331] sm:$0xff]
  %v1333 = vld [vmem:[%s1331 + $0x8] sm:$0xff]
  %v1334 = vld [vmem:[%s1331 + $0x10] sm:$0xff]
  %v1335 = vld [vmem:[%s1331 + $0x18] sm:$0xff]
  %1336 = vmatprep.subr.mxu0 %v97
  %1337 = vmatpush1.msra.mxu0 %v96
  %1338 = vmatprep.subr.mxu0 %v101
  %1339 = vmatpush1.msra.mxu0 %v100
  %1340 = vmatprep.subr.mxu0 %v105
  %1341 = vmatpush1.msra.mxu0 %v104
  %1342 = vmatprep.subr.mxu0 %v109
  %1343 = vmatpush1.msra.mxu0 %v108
  %1344 = vmatprep.subr.mxu0 %v113
  %1345 = vmatpush1.msra.mxu0 %v112
  %1346 = vmatprep.subr.mxu0 %v117
  %1347 = vmatpush1.msra.mxu0 %v116
  %1348 = vmatprep.subr.mxu0 %v121
  %1349 = vmatpush1.msra.mxu0 %v120
  %1350 = vmatprep.subr.mxu0 %v125
  %1351 = vmatpush1.msra.mxu0 %v124
  %1352 = vmatprep.subr.mxu0 %v129
  %1353 = vmatpush1.msra.mxu0 %v128
  %1354 = vmatprep.subr.mxu0 %v133
  %1355 = vmatpush1.msra.mxu0 %v132
  %1356 = vmatprep.subr.mxu0 %v137
  %1357 = vmatpush1.msra.mxu0 %v136
  %1358 = vmatprep.subr.mxu0 %v141
  %1359 = vmatpush1.msra.mxu0 %v140
  %1360 = vmatprep.subr.mxu0 %v145
  %1361 = vmatpush1.msra.mxu0 %v144
  %1362 = vmatprep.subr.mxu0 %v149
  %1363 = vmatpush1.msra.mxu0 %v148
  %1364 = vmatprep.subr.mxu0 %v153
  %1365 = vmatpush1.msra.mxu0 %v152
  %1366 = vmatprep.subr.mxu0 %v157
  %1367 = vmatpush1.msra.mxu0 %v156
  %1368 = vmatprep.subr.mxu0 0.0
  %1369 = vmatpush1.msra.mxu0 0.0
  %1370 = vmatprep.subr.mxu0 0.0
  %1371 = vmatpush1.msra.mxu0 0.0
  %1372 = vmatprep.subr.mxu0 0.0
  %1373 = vmatpush1.msra.mxu0 0.0
  %1374 = vmatprep.subr.mxu0 0.0
  %1375 = vmatpush1.msra.mxu0 0.0
  %1376 = vmatprep.subr.mxu0 0.0
  %1377 = vmatpush1.msra.mxu0 0.0
  %1378 = vmatprep.subr.mxu0 0.0
  %1379 = vmatpush1.msra.mxu0 0.0
  %1380 = vmatprep.subr.mxu0 0.0
  %1381 = vmatpush1.msra.mxu0 0.0
  %1382 = vmatprep.subr.mxu0 0.0
  %1383 = vmatpush1.msra.mxu0 0.0
  %1384 = vmatprep.subr.mxu0 0.0
  %1385 = vmatpush1.msra.mxu0 0.0
  %1386 = vmatprep.subr.mxu0 0.0
  %1387 = vmatpush1.msra.mxu0 0.0
  %1388 = vmatprep.subr.mxu0 0.0
  %1389 = vmatpush1.msra.mxu0 0.0
  %1390 = vmatprep.subr.mxu0 0.0
  %1391 = vmatpush1.msra.mxu0 0.0
  %1392 = vmatprep.subr.mxu0 0.0
  %1393 = vmatpush1.msra.mxu0 0.0
  %1394 = vmatprep.subr.mxu0 0.0
  %1395 = vmatpush1.msra.mxu0 0.0
  %1396 = vmatprep.subr.mxu0 0.0
  %1397 = vmatpush1.msra.mxu0 0.0
  %1398 = vmatprep.subr.mxu0 0.0
  %1399 = vmatpush1.msra.mxu0 0.0
  %1400 = vmatprep.mubr.f32.mxu0 0.0
  %1401 = vmatmul.mubr.f32.gmra.mrb[0].mxu0 %v1328
  %v1402 = vpop.f32.mrb[0].mxu0
  %v1403 = vadd.f32 0.0, %v1402
  %v1404 = vpop.f32.mrb[0].mxu0
  %v1405 = vadd.f32 0.0, %v1404
  %1406 = vdwg.mxu0
  %1407 = vmatprep.subr.mxu0 %v99
  %1408 = vmatpush1.msra.mxu0 %v98
  %1409 = vmatprep.subr.mxu0 %v103
  %1410 = vmatpush1.msra.mxu0 %v102
  %1411 = vmatprep.subr.mxu0 %v107
  %1412 = vmatpush1.msra.mxu0 %v106
  %1413 = vmatprep.subr.mxu0 %v111
  %1414 = vmatpush1.msra.mxu0 %v110
  %1415 = vmatprep.subr.mxu0 %v115
  %1416 = vmatpush1.msra.mxu0 %v114
  %1417 = vmatprep.subr.mxu0 %v119
  %1418 = vmatpush1.msra.mxu0 %v118
  %1419 = vmatprep.subr.mxu0 %v123
  %1420 = vmatpush1.msra.mxu0 %v122
  %1421 = vmatprep.subr.mxu0 %v127
  %1422 = vmatpush1.msra.mxu0 %v126
  %1423 = vmatprep.subr.mxu0 %v131
  %1424 = vmatpush1.msra.mxu0 %v130
  %1425 = vmatprep.subr.mxu0 %v135
  %1426 = vmatpush1.msra.mxu0 %v134
  %1427 = vmatprep.subr.mxu0 %v139
  %1428 = vmatpush1.msra.mxu0 %v138
  %1429 = vmatprep.subr.mxu0 %v143
  %1430 = vmatpush1.msra.mxu0 %v142
  %1431 = vmatprep.subr.mxu0 %v147
  %1432 = vmatpush1.msra.mxu0 %v146
  %1433 = vmatprep.subr.mxu0 %v151
  %1434 = vmatpush1.msra.mxu0 %v150
  %1435 = vmatprep.subr.mxu0 %v155
  %1436 = vmatpush1.msra.mxu0 %v154
  %1437 = vmatprep.subr.mxu0 %v159
  %1438 = vmatpush1.msra.mxu0 %v158
  %1439 = vmatprep.subr.mxu0 0.0
  %1440 = vmatpush1.msra.mxu0 0.0
  %1441 = vmatprep.subr.mxu0 0.0
  %1442 = vmatpush1.msra.mxu0 0.0
  %1443 = vmatprep.subr.mxu0 0.0
  %1444 = vmatpush1.msra.mxu0 0.0
  %1445 = vmatprep.subr.mxu0 0.0
  %1446 = vmatpush1.msra.mxu0 0.0
  %1447 = vmatprep.subr.mxu0 0.0
  %1448 = vmatpush1.msra.mxu0 0.0
  %1449 = vmatprep.subr.mxu0 0.0
  %1450 = vmatpush1.msra.mxu0 0.0
  %1451 = vmatprep.subr.mxu0 0.0
  %1452 = vmatpush1.msra.mxu0 0.0
  %1453 = vmatprep.subr.mxu0 0.0
  %1454 = vmatpush1.msra.mxu0 0.0
  %1455 = vmatprep.subr.mxu0 0.0
  %1456 = vmatpush1.msra.mxu0 0.0
  %1457 = vmatprep.subr.mxu0 0.0
  %1458 = vmatpush1.msra.mxu0 0.0
  %1459 = vmatprep.subr.mxu0 0.0
  %1460 = vmatpush1.msra.mxu0 0.0
  %1461 = vmatprep.subr.mxu0 0.0
  %1462 = vmatpush1.msra.mxu0 0.0
  %1463 = vmatprep.subr.mxu0 0.0
  %1464 = vmatpush1.msra.mxu0 0.0
  %1465 = vmatprep.subr.mxu0 0.0
  %1466 = vmatpush1.msra.mxu0 0.0
  %1467 = vmatprep.subr.mxu0 0.0
  %1468 = vmatpush1.msra.mxu0 0.0
  %1469 = vmatprep.subr.mxu0 0.0
  %1470 = vmatpush1.msra.mxu0 0.0
  %1471 = vmatprep.mubr.f32.mxu0 0.0
  %1472 = vmatmul.mubr.f32.gmra.mrb[0].mxu0 %v1328
  %v1473 = vpop.f32.mrb[0].mxu0
  %v1474 = vadd.f32 0.0, %v1473
  %v1475 = vpop.f32.mrb[0].mxu0
  %v1476 = vadd.f32 0.0, %v1475
  %1477 = vdwg.mxu0
  %v1478 = vadd.f32 %v1332, %v1403
  %v1479 = vadd.f32 %v1333, %v1405
  %v1480 = vadd.f32 %v1334, %v1474
  %v1481 = vadd.f32 %v1335, %v1476
  %v1482 = vxor.u32 %v1478, 2147483648
  %v1483 = vmul.f32 %v1482, 1.442695
  %v1484 = vpow.pop %v1483
  %v1485 = vadd.f32 %v1484, 1.0
  %v1486 = vrcp.pop %v1485
  %v1487 = vmul.f32 1.0, %v1486
  %v1488 = vxor.u32 %v1479, 2147483648
  %v1489 = vmul.f32 %v1488, 1.442695
  %v1490 = vpow.pop %v1489
  %v1491 = vadd.f32 %v1490, 1.0
  %v1492 = vrcp.pop %v1491
  %v1493 = vmul.f32 1.0, %v1492
  %v1494 = vtanh.pop %v1480
  %v1495 = vxor.u32 %v1481, 2147483648
  %v1496 = vmul.f32 %v1495, 1.442695
  %v1497 = vpow.pop %v1496
  %v1498 = vadd.f32 %v1497, 1.0
  %v1499 = vrcp.pop %v1498
  %v1500 = vmul.f32 1.0, %v1499
  %v1501 = vmul.f32 %v1493, %v1326
  %v1502 = vmul.f32 %v1487, %v1494
  %v1503 = vadd.f32 %v1501, %v1502
  %v1504 = vtanh.pop %v1503
  %v1505 = vmul.f32 %v1500, %v1504
  %s1506 = scalar_lea.vmem [#allocation2], 40
  %1507 = vst [vmem:[%s1506] sm:$0xff] %v1505
  %s1508 = scalar_lea.vmem [#allocation3], 192
  %v1509 = vld [vmem:[%s1508] sm:$0xff]
  %v1510 = vld [vmem:[%s1508 + $0x8] sm:$0xff]
  %v1511 = vld [vmem:[%s1508 + $0x10] sm:$0xff]
  %v1512 = vld [vmem:[%s1508 + $0x18] sm:$0xff]
  %1513 = vmatprep.subr.mxu0 %v97
  %1514 = vmatpush1.msra.mxu0 %v96
  %1515 = vmatprep.subr.mxu0 %v101
  %1516 = vmatpush1.msra.mxu0 %v100
  %1517 = vmatprep.subr.mxu0 %v105
  %1518 = vmatpush1.msra.mxu0 %v104
  %1519 = vmatprep.subr.mxu0 %v109
  %1520 = vmatpush1.msra.mxu0 %v108
  %1521 = vmatprep.subr.mxu0 %v113
  %1522 = vmatpush1.msra.mxu0 %v112
  %1523 = vmatprep.subr.mxu0 %v117
  %1524 = vmatpush1.msra.mxu0 %v116
  %1525 = vmatprep.subr.mxu0 %v121
  %1526 = vmatpush1.msra.mxu0 %v120
  %1527 = vmatprep.subr.mxu0 %v125
  %1528 = vmatpush1.msra.mxu0 %v124
  %1529 = vmatprep.subr.mxu0 %v129
  %1530 = vmatpush1.msra.mxu0 %v128
  %1531 = vmatprep.subr.mxu0 %v133
  %1532 = vmatpush1.msra.mxu0 %v132
  %1533 = vmatprep.subr.mxu0 %v137
  %1534 = vmatpush1.msra.mxu0 %v136
  %1535 = vmatprep.subr.mxu0 %v141
  %1536 = vmatpush1.msra.mxu0 %v140
  %1537 = vmatprep.subr.mxu0 %v145
  %1538 = vmatpush1.msra.mxu0 %v144
  %1539 = vmatprep.subr.mxu0 %v149
  %1540 = vmatpush1.msra.mxu0 %v148
  %1541 = vmatprep.subr.mxu0 %v153
  %1542 = vmatpush1.msra.mxu0 %v152
  %1543 = vmatprep.subr.mxu0 %v157
  %1544 = vmatpush1.msra.mxu0 %v156
  %1545 = vmatprep.subr.mxu0 0.0
  %1546 = vmatpush1.msra.mxu0 0.0
  %1547 = vmatprep.subr.mxu0 0.0
  %1548 = vmatpush1.msra.mxu0 0.0
  %1549 = vmatprep.subr.mxu0 0.0
  %1550 = vmatpush1.msra.mxu0 0.0
  %1551 = vmatprep.subr.mxu0 0.0
  %1552 = vmatpush1.msra.mxu0 0.0
  %1553 = vmatprep.subr.mxu0 0.0
  %1554 = vmatpush1.msra.mxu0 0.0
  %1555 = vmatprep.subr.mxu0 0.0
  %1556 = vmatpush1.msra.mxu0 0.0
  %1557 = vmatprep.subr.mxu0 0.0
  %1558 = vmatpush1.msra.mxu0 0.0
  %1559 = vmatprep.subr.mxu0 0.0
  %1560 = vmatpush1.msra.mxu0 0.0
  %1561 = vmatprep.subr.mxu0 0.0
  %1562 = vmatpush1.msra.mxu0 0.0
  %1563 = vmatprep.subr.mxu0 0.0
  %1564 = vmatpush1.msra.mxu0 0.0
  %1565 = vmatprep.subr.mxu0 0.0
  %1566 = vmatpush1.msra.mxu0 0.0
  %1567 = vmatprep.subr.mxu0 0.0
  %1568 = vmatpush1.msra.mxu0 0.0
  %1569 = vmatprep.subr.mxu0 0.0
  %1570 = vmatpush1.msra.mxu0 0.0
  %1571 = vmatprep.subr.mxu0 0.0
  %1572 = vmatpush1.msra.mxu0 0.0
  %1573 = vmatprep.subr.mxu0 0.0
  %1574 = vmatpush1.msra.mxu0 0.0
  %1575 = vmatprep.subr.mxu0 0.0
  %1576 = vmatpush1.msra.mxu0 0.0
  %1577 = vmatprep.mubr.f32.mxu0 0.0
  %1578 = vmatmul.mubr.f32.gmra.mrb[0].mxu0 %v1505
  %v1579 = vpop.f32.mrb[0].mxu0
  %v1580 = vadd.f32 0.0, %v1579
  %v1581 = vpop.f32.mrb[0].mxu0
  %v1582 = vadd.f32 0.0, %v1581
  %1583 = vdwg.mxu0
  %1584 = vmatprep.subr.mxu0 %v99
  %1585 = vmatpush1.msra.mxu0 %v98
  %1586 = vmatprep.subr.mxu0 %v103
  %1587 = vmatpush1.msra.mxu0 %v102
  %1588 = vmatprep.subr.mxu0 %v107
  %1589 = vmatpush1.msra.mxu0 %v106
  %1590 = vmatprep.subr.mxu0 %v111
  %1591 = vmatpush1.msra.mxu0 %v110
  %1592 = vmatprep.subr.mxu0 %v115
  %1593 = vmatpush1.msra.mxu0 %v114
  %1594 = vmatprep.subr.mxu0 %v119
  %1595 = vmatpush1.msra.mxu0 %v118
  %1596 = vmatprep.subr.mxu0 %v123
  %1597 = vmatpush1.msra.mxu0 %v122
  %1598 = vmatprep.subr.mxu0 %v127
  %1599 = vmatpush1.msra.mxu0 %v126
  %1600 = vmatprep.subr.mxu0 %v131
  %1601 = vmatpush1.msra.mxu0 %v130
  %1602 = vmatprep.subr.mxu0 %v135
  %1603 = vmatpush1.msra.mxu0 %v134
  %1604 = vmatprep.subr.mxu0 %v139
  %1605 = vmatpush1.msra.mxu0 %v138
  %1606 = vmatprep.subr.mxu0 %v143
  %1607 = vmatpush1.msra.mxu0 %v142
  %1608 = vmatprep.subr.mxu0 %v147
  %1609 = vmatpush1.msra.mxu0 %v146
  %1610 = vmatprep.subr.mxu0 %v151
  %1611 = vmatpush1.msra.mxu0 %v150
  %1612 = vmatprep.subr.mxu0 %v155
  %1613 = vmatpush1.msra.mxu0 %v154
  %1614 = vmatprep.subr.mxu0 %v159
  %1615 = vmatpush1.msra.mxu0 %v158
  %1616 = vmatprep.subr.mxu0 0.0
  %1617 = vmatpush1.msra.mxu0 0.0
  %1618 = vmatprep.subr.mxu0 0.0
  %1619 = vmatpush1.msra.mxu0 0.0
  %1620 = vmatprep.subr.mxu0 0.0
  %1621 = vmatpush1.msra.mxu0 0.0
  %1622 = vmatprep.subr.mxu0 0.0
  %1623 = vmatpush1.msra.mxu0 0.0
  %1624 = vmatprep.subr.mxu0 0.0
  %1625 = vmatpush1.msra.mxu0 0.0
  %1626 = vmatprep.subr.mxu0 0.0
  %1627 = vmatpush1.msra.mxu0 0.0
  %1628 = vmatprep.subr.mxu0 0.0
  %1629 = vmatpush1.msra.mxu0 0.0
  %1630 = vmatprep.subr.mxu0 0.0
  %1631 = vmatpush1.msra.mxu0 0.0
  %1632 = vmatprep.subr.mxu0 0.0
  %1633 = vmatpush1.msra.mxu0 0.0
  %1634 = vmatprep.subr.mxu0 0.0
  %1635 = vmatpush1.msra.mxu0 0.0
  %1636 = vmatprep.subr.mxu0 0.0
  %1637 = vmatpush1.msra.mxu0 0.0
  %1638 = vmatprep.subr.mxu0 0.0
  %1639 = vmatpush1.msra.mxu0 0.0
  %1640 = vmatprep.subr.mxu0 0.0
  %1641 = vmatpush1.msra.mxu0 0.0
  %1642 = vmatprep.subr.mxu0 0.0
  %1643 = vmatpush1.msra.mxu0 0.0
  %1644 = vmatprep.subr.mxu0 0.0
  %1645 = vmatpush1.msra.mxu0 0.0
  %1646 = vmatprep.subr.mxu0 0.0
  %1647 = vmatpush1.msra.mxu0 0.0
  %1648 = vmatprep.mubr.f32.mxu0 0.0
  %1649 = vmatmul.mubr.f32.gmra.mrb[0].mxu0 %v1505
  %v1650 = vpop.f32.mrb[0].mxu0
  %v1651 = vadd.f32 0.0, %v1650
  %v1652 = vpop.f32.mrb[0].mxu0
  %v1653 = vadd.f32 0.0, %v1652
  %1654 = vdwg.mxu0
  %v1655 = vadd.f32 %v1509, %v1580
  %v1656 = vadd.f32 %v1510, %v1582
  %v1657 = vadd.f32 %v1511, %v1651
  %v1658 = vadd.f32 %v1512, %v1653
  %v1659 = vxor.u32 %v1655, 2147483648
  %v1660 = vmul.f32 %v1659, 1.442695
  %v1661 = vpow.pop %v1660
  %v1662 = vadd.f32 %v1661, 1.0
  %v1663 = vrcp.pop %v1662
  %v1664 = vmul.f32 1.0, %v1663
  %v1665 = vxor.u32 %v1656, 2147483648
  %v1666 = vmul.f32 %v1665, 1.442695
  %v1667 = vpow.pop %v1666
  %v1668 = vadd.f32 %v1667, 1.0
  %v1669 = vrcp.pop %v1668
  %v1670 = vmul.f32 1.0, %v1669
  %v1671 = vtanh.pop %v1657
  %v1672 = vxor.u32 %v1658, 2147483648
  %v1673 = vmul.f32 %v1672, 1.442695
  %v1674 = vpow.pop %v1673
  %v1675 = vadd.f32 %v1674, 1.0
  %v1676 = vrcp.pop %v1675
  %v1677 = vmul.f32 1.0, %v1676
  %v1678 = vmul.f32 %v1670, %v1503
  %v1679 = vmul.f32 %v1664, %v1671
  %v1680 = vadd.f32 %v1678, %v1679
  %v1681 = vtanh.pop %v1680
  %v1682 = vmul.f32 %v1677, %v1681
  %s1683 = scalar_lea.vmem [#allocation2], 48
  %1684 = vst [vmem:[%s1683] sm:$0xff] %v1682
  %s1685 = scalar_lea.vmem [#allocation3], 224
  %v1686 = vld [vmem:[%s1685] sm:$0xff]
  %v1687 = vld [vmem:[%s1685 + $0x8] sm:$0xff]
  %v1688 = vld [vmem:[%s1685 + $0x10] sm:$0xff]
  %v1689 = vld [vmem:[%s1685 + $0x18] sm:$0xff]
  %1690 = vmatprep.subr.mxu0 %v97
  %1691 = vmatpush1.msra.mxu0 %v96
  %1692 = vmatprep.subr.mxu0 %v101
  %1693 = vmatpush1.msra.mxu0 %v100
  %1694 = vmatprep.subr.mxu0 %v105
  %1695 = vmatpush1.msra.mxu0 %v104
  %1696 = vmatprep.subr.mxu0 %v109
  %1697 = vmatpush1.msra.mxu0 %v108
  %1698 = vmatprep.subr.mxu0 %v113
  %1699 = vmatpush1.msra.mxu0 %v112
  %1700 = vmatprep.subr.mxu0 %v117
  %1701 = vmatpush1.msra.mxu0 %v116
  %1702 = vmatprep.subr.mxu0 %v121
  %1703 = vmatpush1.msra.mxu0 %v120
  %1704 = vmatprep.subr.mxu0 %v125
  %1705 = vmatpush1.msra.mxu0 %v124
  %1706 = vmatprep.subr.mxu0 %v129
  %1707 = vmatpush1.msra.mxu0 %v128
  %1708 = vmatprep.subr.mxu0 %v133
  %1709 = vmatpush1.msra.mxu0 %v132
  %1710 = vmatprep.subr.mxu0 %v137
  %1711 = vmatpush1.msra.mxu0 %v136
  %1712 = vmatprep.subr.mxu0 %v141
  %1713 = vmatpush1.msra.mxu0 %v140
  %1714 = vmatprep.subr.mxu0 %v145
  %1715 = vmatpush1.msra.mxu0 %v144
  %1716 = vmatprep.subr.mxu0 %v149
  %1717 = vmatpush1.msra.mxu0 %v148
  %1718 = vmatprep.subr.mxu0 %v153
  %1719 = vmatpush1.msra.mxu0 %v152
  %1720 = vmatprep.subr.mxu0 %v157
  %1721 = vmatpush1.msra.mxu0 %v156
  %1722 = vmatprep.subr.mxu0 0.0
  %1723 = vmatpush1.msra.mxu0 0.0
  %1724 = vmatprep.subr.mxu0 0.0
  %1725 = vmatpush1.msra.mxu0 0.0
  %1726 = vmatprep.subr.mxu0 0.0
  %1727 = vmatpush1.msra.mxu0 0.0
  %1728 = vmatprep.subr.mxu0 0.0
  %1729 = vmatpush1.msra.mxu0 0.0
  %1730 = vmatprep.subr.mxu0 0.0
  %1731 = vmatpush1.msra.mxu0 0.0
  %1732 = vmatprep.subr.mxu0 0.0
  %1733 = vmatpush1.msra.mxu0 0.0
  %1734 = vmatprep.subr.mxu0 0.0
  %1735 = vmatpush1.msra.mxu0 0.0
  %1736 = vmatprep.subr.mxu0 0.0
  %1737 = vmatpush1.msra.mxu0 0.0
  %1738 = vmatprep.subr.mxu0 0.0
  %1739 = vmatpush1.msra.mxu0 0.0
  %1740 = vmatprep.subr.mxu0 0.0
  %1741 = vmatpush1.msra.mxu0 0.0
  %1742 = vmatprep.subr.mxu0 0.0
  %1743 = vmatpush1.msra.mxu0 0.0
  %1744 = vmatprep.subr.mxu0 0.0
  %1745 = vmatpush1.msra.mxu0 0.0
  %1746 = vmatprep.subr.mxu0 0.0
  %1747 = vmatpush1.msra.mxu0 0.0
  %1748 = vmatprep.subr.mxu0 0.0
  %1749 = vmatpush1.msra.mxu0 0.0
  %1750 = vmatprep.subr.mxu0 0.0
  %1751 = vmatpush1.msra.mxu0 0.0
  %1752 = vmatprep.subr.mxu0 0.0
  %1753 = vmatpush1.msra.mxu0 0.0
  %1754 = vmatprep.mubr.f32.mxu0 0.0
  %1755 = vmatmul.mubr.f32.gmra.mrb[0].mxu0 %v1682
  %v1756 = vpop.f32.mrb[0].mxu0
  %v1757 = vadd.f32 0.0, %v1756
  %v1758 = vpop.f32.mrb[0].mxu0
  %v1759 = vadd.f32 0.0, %v1758
  %1760 = vdwg.mxu0
  %1761 = vmatprep.subr.mxu0 %v99
  %1762 = vmatpush1.msra.mxu0 %v98
  %1763 = vmatprep.subr.mxu0 %v103
  %1764 = vmatpush1.msra.mxu0 %v102
  %1765 = vmatprep.subr.mxu0 %v107
  %1766 = vmatpush1.msra.mxu0 %v106
  %1767 = vmatprep.subr.mxu0 %v111
  %1768 = vmatpush1.msra.mxu0 %v110
  %1769 = vmatprep.subr.mxu0 %v115
  %1770 = vmatpush1.msra.mxu0 %v114
  %1771 = vmatprep.subr.mxu0 %v119
  %1772 = vmatpush1.msra.mxu0 %v118
  %1773 = vmatprep.subr.mxu0 %v123
  %1774 = vmatpush1.msra.mxu0 %v122
  %1775 = vmatprep.subr.mxu0 %v127
  %1776 = vmatpush1.msra.mxu0 %v126
  %1777 = vmatprep.subr.mxu0 %v131
  %1778 = vmatpush1.msra.mxu0 %v130
  %1779 = vmatprep.subr.mxu0 %v135
  %1780 = vmatpush1.msra.mxu0 %v134
  %1781 = vmatprep.subr.mxu0 %v139
  %1782 = vmatpush1.msra.mxu0 %v138
  %1783 = vmatprep.subr.mxu0 %v143
  %1784 = vmatpush1.msra.mxu0 %v142
  %1785 = vmatprep.subr.mxu0 %v147
  %1786 = vmatpush1.msra.mxu0 %v146
  %1787 = vmatprep.subr.mxu0 %v151
  %1788 = vmatpush1.msra.mxu0 %v150
  %1789 = vmatprep.subr.mxu0 %v155
  %1790 = vmatpush1.msra.mxu0 %v154
  %1791 = vmatprep.subr.mxu0 %v159
  %1792 = vmatpush1.msra.mxu0 %v158
  %1793 = vmatprep.subr.mxu0 0.0
  %1794 = vmatpush1.msra.mxu0 0.0
  %1795 = vmatprep.subr.mxu0 0.0
  %1796 = vmatpush1.msra.mxu0 0.0
  %1797 = vmatprep.subr.mxu0 0.0
  %1798 = vmatpush1.msra.mxu0 0.0
  %1799 = vmatprep.subr.mxu0 0.0
  %1800 = vmatpush1.msra.mxu0 0.0
  %1801 = vmatprep.subr.mxu0 0.0
  %1802 = vmatpush1.msra.mxu0 0.0
  %1803 = vmatprep.subr.mxu0 0.0
  %1804 = vmatpush1.msra.mxu0 0.0
  %1805 = vmatprep.subr.mxu0 0.0
  %1806 = vmatpush1.msra.mxu0 0.0
  %1807 = vmatprep.subr.mxu0 0.0
  %1808 = vmatpush1.msra.mxu0 0.0
  %1809 = vmatprep.subr.mxu0 0.0
  %1810 = vmatpush1.msra.mxu0 0.0
  %1811 = vmatprep.subr.mxu0 0.0
  %1812 = vmatpush1.msra.mxu0 0.0
  %1813 = vmatprep.subr.mxu0 0.0
  %1814 = vmatpush1.msra.mxu0 0.0
  %1815 = vmatprep.subr.mxu0 0.0
  %1816 = vmatpush1.msra.mxu0 0.0
  %1817 = vmatprep.subr.mxu0 0.0
  %1818 = vmatpush1.msra.mxu0 0.0
  %1819 = vmatprep.subr.mxu0 0.0
  %1820 = vmatpush1.msra.mxu0 0.0
  %1821 = vmatprep.subr.mxu0 0.0
  %1822 = vmatpush1.msra.mxu0 0.0
  %1823 = vmatprep.subr.mxu0 0.0
  %1824 = vmatpush1.msra.mxu0 0.0
  %1825 = vmatprep.mubr.f32.mxu0 0.0
  %1826 = vmatmul.mubr.f32.gmra.mrb[0].mxu0 %v1682
  %v1827 = vpop.f32.mrb[0].mxu0
  %v1828 = vadd.f32 0.0, %v1827
  %v1829 = vpop.f32.mrb[0].mxu0
  %v1830 = vadd.f32 0.0, %v1829
  %1831 = vdwg.mxu0
  %v1832 = vadd.f32 %v1686, %v1757
  %v1833 = vadd.f32 %v1687, %v1759
  %v1834 = vadd.f32 %v1688, %v1828
  %v1835 = vadd.f32 %v1689, %v1830
  %v1836 = vxor.u32 %v1832, 2147483648
  %v1837 = vmul.f32 %v1836, 1.442695
  %v1838 = vpow.pop %v1837
  %v1839 = vadd.f32 %v1838, 1.0
  %v1840 = vrcp.pop %v1839
  %v1841 = vmul.f32 1.0, %v1840
  %v1842 = vxor.u32 %v1833, 2147483648
  %v1843 = vmul.f32 %v1842, 1.442695
  %v1844 = vpow.pop %v1843
  %v1845 = vadd.f32 %v1844, 1.0
  %v1846 = vrcp.pop %v1845
  %v1847 = vmul.f32 1.0, %v1846
  %v1848 = vtanh.pop %v1834
  %v1849 = vxor.u32 %v1835, 2147483648
  %v1850 = vmul.f32 %v1849, 1.442695
  %v1851 = vpow.pop %v1850
  %v1852 = vadd.f32 %v1851, 1.0
  %v1853 = vrcp.pop %v1852
  %v1854 = vmul.f32 1.0, %v1853
  %v1855 = vmul.f32 %v1847, %v1680
  %v1856 = vmul.f32 %v1841, %v1848
  %v1857 = vadd.f32 %v1855, %v1856
  %v1858 = vtanh.pop %v1857
  %v1859 = vmul.f32 %v1854, %v1858
  %s1860 = scalar_lea.vmem [#allocation2], 56
  %1861 = vst [vmem:[%s1860] sm:$0xff] %v1859
  %s1862 = scalar_lea.vmem %s1, 512
  %v1863 = vld [vmem:[%s1862] sm:$0xff]
  %v1864 = vld [vmem:[%s1862 + $0x8] sm:$0xff]
  %v1865 = vld [vmem:[%s1862 + $0x10] sm:$0xff]
  %v1866 = vld [vmem:[%s1862 + $0x18] sm:$0xff]
  %v1867 = vld [vmem:[%s1862 + $0x20] sm:$0xff]
  %v1868 = vld [vmem:[%s1862 + $0x28] sm:$0xff]
  %v1869 = vld [vmem:[%s1862 + $0x30] sm:$0xff]
  %v1870 = vld [vmem:[%s1862 + $0x38] sm:$0xff]
  %v1871 = vld [vmem:[%s1862 + $0x40] sm:$0xff]
  %v1872 = vld [vmem:[%s1862 + $0x48] sm:$0xff]
  %v1873 = vld [vmem:[%s1862 + $0x50] sm:$0xff]
  %v1874 = vld [vmem:[%s1862 + $0x58] sm:$0xff]
  %v1875 = vld [vmem:[%s1862 + $0x60] sm:$0xff]
  %v1876 = vld [vmem:[%s1862 + $0x68] sm:$0xff]
  %v1877 = vld [vmem:[%s1862 + $0x70] sm:$0xff]
  %v1878 = vld [vmem:[%s1862 + $0x78] sm:$0xff]
  %v1879 = vld [vmem:[%s1862 + $0x80] sm:$0xff]
  %v1880 = vld [vmem:[%s1862 + $0x88] sm:$0xff]
  %v1881 = vld [vmem:[%s1862 + $0x90] sm:$0xff]
  %v1882 = vld [vmem:[%s1862 + $0x98] sm:$0xff]
  %v1883 = vld [vmem:[%s1862 + $0xa0] sm:$0xff]
  %v1884 = vld [vmem:[%s1862 + $0xa8] sm:$0xff]
  %v1885 = vld [vmem:[%s1862 + $0xb0] sm:$0xff]
  %v1886 = vld [vmem:[%s1862 + $0xb8] sm:$0xff]
  %v1887 = vld [vmem:[%s1862 + $0xc0] sm:$0xff]
  %v1888 = vld [vmem:[%s1862 + $0xc8] sm:$0xff]
  %v1889 = vld [vmem:[%s1862 + $0xd0] sm:$0xff]
  %v1890 = vld [vmem:[%s1862 + $0xd8] sm:$0xff]
  %v1891 = vld [vmem:[%s1862 + $0xe0] sm:$0xff]
  %v1892 = vld [vmem:[%s1862 + $0xe8] sm:$0xff]
  %v1893 = vld [vmem:[%s1862 + $0xf0] sm:$0xff]
  %v1894 = vld [vmem:[%s1862 + $0xf8] sm:$0xff]
  %v1895 = vld [vmem:[%s1862 + $0x100] sm:$0xff]
  %v1896 = vld [vmem:[%s1862 + $0x108] sm:$0xff]
  %v1897 = vld [vmem:[%s1862 + $0x110] sm:$0xff]
  %v1898 = vld [vmem:[%s1862 + $0x118] sm:$0xff]
  %v1899 = vld [vmem:[%s1862 + $0x120] sm:$0xff]
  %v1900 = vld [vmem:[%s1862 + $0x128] sm:$0xff]
  %v1901 = vld [vmem:[%s1862 + $0x130] sm:$0xff]
  %v1902 = vld [vmem:[%s1862 + $0x138] sm:$0xff]
  %v1903 = vld [vmem:[%s1862 + $0x140] sm:$0xff]
  %v1904 = vld [vmem:[%s1862 + $0x148] sm:$0xff]
  %v1905 = vld [vmem:[%s1862 + $0x150] sm:$0xff]
  %v1906 = vld [vmem:[%s1862 + $0x158] sm:$0xff]
  %v1907 = vld [vmem:[%s1862 + $0x160] sm:$0xff]
  %v1908 = vld [vmem:[%s1862 + $0x168] sm:$0xff]
  %v1909 = vld [vmem:[%s1862 + $0x170] sm:$0xff]
  %v1910 = vld [vmem:[%s1862 + $0x178] sm:$0xff]
  %v1911 = vld [vmem:[%s1862 + $0x180] sm:$0xff]
  %v1912 = vld [vmem:[%s1862 + $0x188] sm:$0xff]
  %v1913 = vld [vmem:[%s1862 + $0x190] sm:$0xff]
  %v1914 = vld [vmem:[%s1862 + $0x198] sm:$0xff]
  %v1915 = vld [vmem:[%s1862 + $0x1a0] sm:$0xff]
  %v1916 = vld [vmem:[%s1862 + $0x1a8] sm:$0xff]
  %v1917 = vld [vmem:[%s1862 + $0x1b0] sm:$0xff]
  %v1918 = vld [vmem:[%s1862 + $0x1b8] sm:$0xff]
  %v1919 = vld [vmem:[%s1862 + $0x1c0] sm:$0xff]
  %v1920 = vld [vmem:[%s1862 + $0x1c8] sm:$0xff]
  %v1921 = vld [vmem:[%s1862 + $0x1d0] sm:$0xff]
  %v1922 = vld [vmem:[%s1862 + $0x1d8] sm:$0xff]
  %v1923 = vld [vmem:[%s1862 + $0x1e0] sm:$0xff]
  %v1924 = vld [vmem:[%s1862 + $0x1e8] sm:$0xff]
  %v1925 = vld [vmem:[%s1862 + $0x1f0] sm:$0xff]
  %v1926 = vld [vmem:[%s1862 + $0x1f8] sm:$0xff]
  %s1927 = scalar_lea.vmem %s2, 512
  %v1928 = vld [vmem:[%s1927] sm:$0xff]
  %v1929 = vld [vmem:[%s1927 + $0x8] sm:$0xff]
  %v1930 = vld [vmem:[%s1927 + $0x10] sm:$0xff]
  %v1931 = vld [vmem:[%s1927 + $0x18] sm:$0xff]
  %v1932 = vld [vmem:[%s1927 + $0x20] sm:$0xff]
  %v1933 = vld [vmem:[%s1927 + $0x28] sm:$0xff]
  %v1934 = vld [vmem:[%s1927 + $0x30] sm:$0xff]
  %v1935 = vld [vmem:[%s1927 + $0x38] sm:$0xff]
  %v1936 = vld [vmem:[%s1927 + $0x40] sm:$0xff]
  %v1937 = vld [vmem:[%s1927 + $0x48] sm:$0xff]
  %v1938 = vld [vmem:[%s1927 + $0x50] sm:$0xff]
  %v1939 = vld [vmem:[%s1927 + $0x58] sm:$0xff]
  %v1940 = vld [vmem:[%s1927 + $0x60] sm:$0xff]
  %v1941 = vld [vmem:[%s1927 + $0x68] sm:$0xff]
  %v1942 = vld [vmem:[%s1927 + $0x70] sm:$0xff]
  %v1943 = vld [vmem:[%s1927 + $0x78] sm:$0xff]
  %v1944 = vld [vmem:[%s1927 + $0x80] sm:$0xff]
  %v1945 = vld [vmem:[%s1927 + $0x88] sm:$0xff]
  %v1946 = vld [vmem:[%s1927 + $0x90] sm:$0xff]
  %v1947 = vld [vmem:[%s1927 + $0x98] sm:$0xff]
  %v1948 = vld [vmem:[%s1927 + $0xa0] sm:$0xff]
  %v1949 = vld [vmem:[%s1927 + $0xa8] sm:$0xff]
  %v1950 = vld [vmem:[%s1927 + $0xb0] sm:$0xff]
  %v1951 = vld [vmem:[%s1927 + $0xb8] sm:$0xff]
  %v1952 = vld [vmem:[%s1927 + $0xc0] sm:$0xff]
  %v1953 = vld [vmem:[%s1927 + $0xc8] sm:$0xff]
  %v1954 = vld [vmem:[%s1927 + $0xd0] sm:$0xff]
  %v1955 = vld [vmem:[%s1927 + $0xd8] sm:$0xff]
  %v1956 = vld [vmem:[%s1927 + $0xe0] sm:$0xff]
  %v1957 = vld [vmem:[%s1927 + $0xe8] sm:$0xff]
  %v1958 = vld [vmem:[%s1927 + $0xf0] sm:$0xff]
  %v1959 = vld [vmem:[%s1927 + $0xf8] sm:$0xff]
  %v1960 = vld [vmem:[%s1927 + $0x100] sm:$0xff]
  %v1961 = vld [vmem:[%s1927 + $0x108] sm:$0xff]
  %v1962 = vld [vmem:[%s1927 + $0x110] sm:$0xff]
  %v1963 = vld [vmem:[%s1927 + $0x118] sm:$0xff]
  %v1964 = vld [vmem:[%s1927 + $0x120] sm:$0xff]
  %v1965 = vld [vmem:[%s1927 + $0x128] sm:$0xff]
  %v1966 = vld [vmem:[%s1927 + $0x130] sm:$0xff]
  %v1967 = vld [vmem:[%s1927 + $0x138] sm:$0xff]
  %v1968 = vld [vmem:[%s1927 + $0x140] sm:$0xff]
  %v1969 = vld [vmem:[%s1927 + $0x148] sm:$0xff]
  %v1970 = vld [vmem:[%s1927 + $0x150] sm:$0xff]
  %v1971 = vld [vmem:[%s1927 + $0x158] sm:$0xff]
  %v1972 = vld [vmem:[%s1927 + $0x160] sm:$0xff]
  %v1973 = vld [vmem:[%s1927 + $0x168] sm:$0xff]
  %v1974 = vld [vmem:[%s1927 + $0x170] sm:$0xff]
  %v1975 = vld [vmem:[%s1927 + $0x178] sm:$0xff]
  %v1976 = vld [vmem:[%s1927 + $0x180] sm:$0xff]
  %v1977 = vld [vmem:[%s1927 + $0x188] sm:$0xff]
  %v1978 = vld [vmem:[%s1927 + $0x190] sm:$0xff]
  %v1979 = vld [vmem:[%s1927 + $0x198] sm:$0xff]
  %v1980 = vld [vmem:[%s1927 + $0x1a0] sm:$0xff]
  %v1981 = vld [vmem:[%s1927 + $0x1a8] sm:$0xff]
  %v1982 = vld [vmem:[%s1927 + $0x1b0] sm:$0xff]
  %v1983 = vld [vmem:[%s1927 + $0x1b8] sm:$0xff]
  %v1984 = vld [vmem:[%s1927 + $0x1c0] sm:$0xff]
  %v1985 = vld [vmem:[%s1927 + $0x1c8] sm:$0xff]
  %v1986 = vld [vmem:[%s1927 + $0x1d0] sm:$0xff]
  %v1987 = vld [vmem:[%s1927 + $0x1d8] sm:$0xff]
  %v1988 = vld [vmem:[%s1927 + $0x1e0] sm:$0xff]
  %v1989 = vld [vmem:[%s1927 + $0x1e8] sm:$0xff]
  %v1990 = vld [vmem:[%s1927 + $0x1f0] sm:$0xff]
  %v1991 = vld [vmem:[%s1927 + $0x1f8] sm:$0xff]
  %s1992 = scalar_lea.vmem %s3, 4
  %v1993 = vld [vmem:[%s1992] sm:$0xf]
  %v1994 = vld [vmem:[#allocation2] sm:$0xff]
  %v1995 = vld [vmem:[#allocation2 + $0x8] sm:$0xff]
  %v1996 = vld [vmem:[#allocation2 + $0x10] sm:$0xff]
  %v1997 = vld [vmem:[#allocation2 + $0x18] sm:$0xff]
  %v1998 = vld [vmem:[#allocation2 + $0x20] sm:$0xff]
  %v1999 = vld [vmem:[#allocation2 + $0x28] sm:$0xff]
  %v2000 = vld [vmem:[#allocation2 + $0x30] sm:$0xff]
  %v2001 = vld [vmem:[#allocation2 + $0x38] sm:$0xff]
  %v2003 = vlaneseq
  %v2004 = vshrl.u32 %v2003, 7
  %v2005 = vsub.s32 0, %v2004
  %v2006 = vrot.slane %v1993, %v2005
  %v2007 = vlaneseq
  %v2008 = vshrl.u32 %v2007, 7
  %v2009 = vsub.s32 1, %v2008
  %v2010 = vrot.slane %v1993, %v2009
  %v2011 = vlaneseq
  %v2012 = vshrl.u32 %v2011, 7
  %v2013 = vsub.s32 2, %v2012
  %v2014 = vrot.slane %v1993, %v2013
  %v2015 = vlaneseq
  %v2016 = vshrl.u32 %v2015, 7
  %v2017 = vsub.s32 3, %v2016
  %v2018 = vrot.slane %v1993, %v2017
  %2023 = vmatprep.subr.mxu0 %v1864
  %2024 = vmatpush1.msra.mxu0 %v1863
  %2025 = vmatprep.subr.mxu0 %v1868
  %2026 = vmatpush1.msra.mxu0 %v1867
  %2027 = vmatprep.subr.mxu0 %v1872
  %2028 = vmatpush1.msra.mxu0 %v1871
  %2029 = vmatprep.subr.mxu0 %v1876
  %2030 = vmatpush1.msra.mxu0 %v1875
  %2031 = vmatprep.subr.mxu0 %v1880
  %2032 = vmatpush1.msra.mxu0 %v1879
  %2033 = vmatprep.subr.mxu0 %v1884
  %2034 = vmatpush1.msra.mxu0 %v1883
  %2035 = vmatprep.subr.mxu0 %v1888
  %2036 = vmatpush1.msra.mxu0 %v1887
  %2037 = vmatprep.subr.mxu0 %v1892
  %2038 = vmatpush1.msra.mxu0 %v1891
  %2039 = vmatprep.subr.mxu0 %v1896
  %2040 = vmatpush1.msra.mxu0 %v1895
  %2041 = vmatprep.subr.mxu0 %v1900
  %2042 = vmatpush1.msra.mxu0 %v1899
  %2043 = vmatprep.subr.mxu0 %v1904
  %2044 = vmatpush1.msra.mxu0 %v1903
  %2045 = vmatprep.subr.mxu0 %v1908
  %2046 = vmatpush1.msra.mxu0 %v1907
  %2047 = vmatprep.subr.mxu0 %v1912
  %2048 = vmatpush1.msra.mxu0 %v1911
  %2049 = vmatprep.subr.mxu0 %v1916
  %2050 = vmatpush1.msra.mxu0 %v1915
  %2051 = vmatprep.subr.mxu0 %v1920
  %2052 = vmatpush1.msra.mxu0 %v1919
  %2053 = vmatprep.subr.mxu0 %v1924
  %2054 = vmatpush1.msra.mxu0 %v1923
  %2055 = vmatprep.subr.mxu0 0.0
  %2056 = vmatpush1.msra.mxu0 0.0
  %2057 = vmatprep.subr.mxu0 0.0
  %2058 = vmatpush1.msra.mxu0 0.0
  %2059 = vmatprep.subr.mxu0 0.0
  %2060 = vmatpush1.msra.mxu0 0.0
  %2061 = vmatprep.subr.mxu0 0.0
  %2062 = vmatpush1.msra.mxu0 0.0
  %2063 = vmatprep.subr.mxu0 0.0
  %2064 = vmatpush1.msra.mxu0 0.0
  %2065 = vmatprep.subr.mxu0 0.0
  %2066 = vmatpush1.msra.mxu0 0.0
  %2067 = vmatprep.subr.mxu0 0.0
  %2068 = vmatpush1.msra.mxu0 0.0
  %2069 = vmatprep.subr.mxu0 0.0
  %2070 = vmatpush1.msra.mxu0 0.0
  %2071 = vmatprep.subr.mxu0 0.0
  %2072 = vmatpush1.msra.mxu0 0.0
  %2073 = vmatprep.subr.mxu0 0.0
  %2074 = vmatpush1.msra.mxu0 0.0
  %2075 = vmatprep.subr.mxu0 0.0
  %2076 = vmatpush1.msra.mxu0 0.0
  %2077 = vmatprep.subr.mxu0 0.0
  %2078 = vmatpush1.msra.mxu0 0.0
  %2079 = vmatprep.subr.mxu0 0.0
  %2080 = vmatpush1.msra.mxu0 0.0
  %2081 = vmatprep.subr.mxu0 0.0
  %2082 = vmatpush1.msra.mxu0 0.0
  %2083 = vmatprep.subr.mxu0 0.0
  %2084 = vmatpush1.msra.mxu0 0.0
  %2085 = vmatprep.subr.mxu0 0.0
  %2086 = vmatpush1.msra.mxu0 0.0
  %2087 = vmatprep.mubr.f32.mxu0 0.0
  %2088 = vmatmul.mubr.f32.gmra.mrb[0].mxu0 %v1994
  %v2089 = vpop.f32.mrb[0].mxu0
  %v2090 = vadd.f32 %v2006, %v2089
  %v2091 = vpop.f32.mrb[0].mxu0
  %v2092 = vadd.f32 %v2010, %v2091
  %2093 = vmatprep.mubr.f32.mxu0 0.0
  %2094 = vmatmul.mubr.f32.gmra.mrb[0].mxu0 %v1995
  %v2095 = vpop.f32.mrb[0].mxu0
  %v2096 = vadd.f32 %v2006, %v2095
  %v2097 = vpop.f32.mrb[0].mxu0
  %v2098 = vadd.f32 %v2010, %v2097
  %2099 = vmatprep.mubr.f32.mxu0 0.0
  %2100 = vmatmul.mubr.f32.gmra.mrb[0].mxu0 %v1996
  %v2101 = vpop.f32.mrb[0].mxu0
  %v2102 = vadd.f32 %v2006, %v2101
  %v2103 = vpop.f32.mrb[0].mxu0
  %v2104 = vadd.f32 %v2010, %v2103
  %2105 = vmatprep.mubr.f32.mxu0 0.0
  %2106 = vmatmul.mubr.f32.gmra.mrb[0].mxu0 %v1997
  %v2107 = vpop.f32.mrb[0].mxu0
  %v2108 = vadd.f32 %v2006, %v2107
  %v2109 = vpop.f32.mrb[0].mxu0
  %v2110 = vadd.f32 %v2010, %v2109
  %2111 = vmatprep.mubr.f32.mxu0 0.0
  %2112 = vmatmul.mubr.f32.gmra.mrb[0].mxu0 %v1998
  %v2113 = vpop.f32.mrb[0].mxu0
  %v2114 = vadd.f32 %v2006, %v2113
  %v2115 = vpop.f32.mrb[0].mxu0
  %v2116 = vadd.f32 %v2010, %v2115
  %2117 = vmatprep.mubr.f32.mxu0 0.0
  %2118 = vmatmul.mubr.f32.gmra.mrb[0].mxu0 %v1999
  %v2119 = vpop.f32.mrb[0].mxu0
  %v2120 = vadd.f32 %v2006, %v2119
  %v2121 = vpop.f32.mrb[0].mxu0
  %v2122 = vadd.f32 %v2010, %v2121
  %2123 = vmatprep.mubr.f32.mxu0 0.0
  %2124 = vmatmul.mubr.f32.gmra.mrb[0].mxu0 %v2000
  %v2125 = vpop.f32.mrb[0].mxu0
  %v2126 = vadd.f32 %v2006, %v2125
  %v2127 = vpop.f32.mrb[0].mxu0
  %v2128 = vadd.f32 %v2010, %v2127
  %2129 = vmatprep.mubr.f32.mxu0 0.0
  %2130 = vmatmul.mubr.f32.gmra.mrb[0].mxu0 %v2001
  %v2131 = vpop.f32.mrb[0].mxu0
  %v2132 = vadd.f32 %v2006, %v2131
  %v2133 = vpop.f32.mrb[0].mxu0
  %v2134 = vadd.f32 %v2010, %v2133
  %2135 = vdwg.mxu0
  %2136 = vmatprep.subr.mxu0 %v1866
  %2137 = vmatpush1.msra.mxu0 %v1865
  %2138 = vmatprep.subr.mxu0 %v1870
  %2139 = vmatpush1.msra.mxu0 %v1869
  %2140 = vmatprep.subr.mxu0 %v1874
  %2141 = vmatpush1.msra.mxu0 %v1873
  %2142 = vmatprep.subr.mxu0 %v1878
  %2143 = vmatpush1.msra.mxu0 %v1877
  %2144 = vmatprep.subr.mxu0 %v1882
  %2145 = vmatpush1.msra.mxu0 %v1881
  %2146 = vmatprep.subr.mxu0 %v1886
  %2147 = vmatpush1.msra.mxu0 %v1885
  %2148 = vmatprep.subr.mxu0 %v1890
  %2149 = vmatpush1.msra.mxu0 %v1889
  %2150 = vmatprep.subr.mxu0 %v1894
  %2151 = vmatpush1.msra.mxu0 %v1893
  %2152 = vmatprep.subr.mxu0 %v1898
  %2153 = vmatpush1.msra.mxu0 %v1897
  %2154 = vmatprep.subr.mxu0 %v1902
  %2155 = vmatpush1.msra.mxu0 %v1901
  %2156 = vmatprep.subr.mxu0 %v1906
  %2157 = vmatpush1.msra.mxu0 %v1905
  %2158 = vmatprep.subr.mxu0 %v1910
  %2159 = vmatpush1.msra.mxu0 %v1909
  %2160 = vmatprep.subr.mxu0 %v1914
  %2161 = vmatpush1.msra.mxu0 %v1913
  %2162 = vmatprep.subr.mxu0 %v1918
  %2163 = vmatpush1.msra.mxu0 %v1917
  %2164 = vmatprep.subr.mxu0 %v1922
  %2165 = vmatpush1.msra.mxu0 %v1921
  %2166 = vmatprep.subr.mxu0 %v1926
  %2167 = vmatpush1.msra.mxu0 %v1925
  %2168 = vmatprep.subr.mxu0 0.0
  %2169 = vmatpush1.msra.mxu0 0.0
  %2170 = vmatprep.subr.mxu0 0.0
  %2171 = vmatpush1.msra.mxu0 0.0
  %2172 = vmatprep.subr.mxu0 0.0
  %2173 = vmatpush1.msra.mxu0 0.0
  %2174 = vmatprep.subr.mxu0 0.0
  %2175 = vmatpush1.msra.mxu0 0.0
  %2176 = vmatprep.subr.mxu0 0.0
  %2177 = vmatpush1.msra.mxu0 0.0
  %2178 = vmatprep.subr.mxu0 0.0
  %2179 = vmatpush1.msra.mxu0 0.0
  %2180 = vmatprep.subr.mxu0 0.0
  %2181 = vmatpush1.msra.mxu0 0.0
  %2182 = vmatprep.subr.mxu0 0.0
  %2183 = vmatpush1.msra.mxu0 0.0
  %2184 = vmatprep.subr.mxu0 0.0
  %2185 = vmatpush1.msra.mxu0 0.0
  %2186 = vmatprep.subr.mxu0 0.0
  %2187 = vmatpush1.msra.mxu0 0.0
  %2188 = vmatprep.subr.mxu0 0.0
  %2189 = vmatpush1.msra.mxu0 0.0
  %2190 = vmatprep.subr.mxu0 0.0
  %2191 = vmatpush1.msra.mxu0 0.0
  %2192 = vmatprep.subr.mxu0 0.0
  %2193 = vmatpush1.msra.mxu0 0.0
  %2194 = vmatprep.subr.mxu0 0.0
  %2195 = vmatpush1.msra.mxu0 0.0
  %2196 = vmatprep.subr.mxu0 0.0
  %2197 = vmatpush1.msra.mxu0 0.0
  %2198 = vmatprep.subr.mxu0 0.0
  %2199 = vmatpush1.msra.mxu0 0.0
  %2200 = vmatprep.mubr.f32.mxu0 0.0
  %2201 = vmatmul.mubr.f32.gmra.mrb[0].mxu0 %v1994
  %v2202 = vpop.f32.mrb[0].mxu0
  %v2203 = vadd.f32 %v2014, %v2202
  %v2204 = vpop.f32.mrb[0].mxu0
  %v2205 = vadd.f32 %v2018, %v2204
  %2206 = vmatprep.mubr.f32.mxu0 0.0
  %2207 = vmatmul.mubr.f32.gmra.mrb[0].mxu0 %v1995
  %v2208 = vpop.f32.mrb[0].mxu0
  %v2209 = vadd.f32 %v2014, %v2208
  %v2210 = vpop.f32.mrb[0].mxu0
  %v2211 = vadd.f32 %v2018, %v2210
  %2212 = vmatprep.mubr.f32.mxu0 0.0
  %2213 = vmatmul.mubr.f32.gmra.mrb[0].mxu0 %v1996
  %v2214 = vpop.f32.mrb[0].mxu0
  %v2215 = vadd.f32 %v2014, %v2214
  %v2216 = vpop.f32.mrb[0].mxu0
  %v2217 = vadd.f32 %v2018, %v2216
  %2218 = vmatprep.mubr.f32.mxu0 0.0
  %2219 = vmatmul.mubr.f32.gmra.mrb[0].mxu0 %v1997
  %v2220 = vpop.f32.mrb[0].mxu0
  %v2221 = vadd.f32 %v2014, %v2220
  %v2222 = vpop.f32.mrb[0].mxu0
  %v2223 = vadd.f32 %v2018, %v2222
  %2224 = vmatprep.mubr.f32.mxu0 0.0
  %2225 = vmatmul.mubr.f32.gmra.mrb[0].mxu0 %v1998
  %v2226 = vpop.f32.mrb[0].mxu0
  %v2227 = vadd.f32 %v2014, %v2226
  %v2228 = vpop.f32.mrb[0].mxu0
  %v2229 = vadd.f32 %v2018, %v2228
  %2230 = vmatprep.mubr.f32.mxu0 0.0
  %2231 = vmatmul.mubr.f32.gmra.mrb[0].mxu0 %v1999
  %v2232 = vpop.f32.mrb[0].mxu0
  %v2233 = vadd.f32 %v2014, %v2232
  %v2234 = vpop.f32.mrb[0].mxu0
  %v2235 = vadd.f32 %v2018, %v2234
  %2236 = vmatprep.mubr.f32.mxu0 0.0
  %2237 = vmatmul.mubr.f32.gmra.mrb[0].mxu0 %v2000
  %v2238 = vpop.f32.mrb[0].mxu0
  %v2239 = vadd.f32 %v2014, %v2238
  %v2240 = vpop.f32.mrb[0].mxu0
  %v2241 = vadd.f32 %v2018, %v2240
  %2242 = vmatprep.mubr.f32.mxu0 0.0
  %2243 = vmatmul.mubr.f32.gmra.mrb[0].mxu0 %v2001
  %v2244 = vpop.f32.mrb[0].mxu0
  %v2245 = vadd.f32 %v2014, %v2244
  %v2246 = vpop.f32.mrb[0].mxu0
  %v2247 = vadd.f32 %v2018, %v2246
  %2248 = vdwg.mxu0
  %2249 = vst [vmem:[#allocation3] sm:$0xff] %v2090
  %2250 = vst [vmem:[#allocation3 + $0x8] sm:$0xff] %v2092
  %2251 = vst [vmem:[#allocation3 + $0x10] sm:$0xff] %v2203
  %2252 = vst [vmem:[#allocation3 + $0x18] sm:$0xff] %v2205
  %2253 = vst [vmem:[#allocation3 + $0x20] sm:$0xff] %v2096
  %2254 = vst [vmem:[#allocation3 + $0x28] sm:$0xff] %v2098
  %2255 = vst [vmem:[#allocation3 + $0x30] sm:$0xff] %v2209
  %2256 = vst [vmem:[#allocation3 + $0x38] sm:$0xff] %v2211
  %2257 = vst [vmem:[#allocation3 + $0x40] sm:$0xff] %v2102
  %2258 = vst [vmem:[#allocation3 + $0x48] sm:$0xff] %v2104
  %2259 = vst [vmem:[#allocation3 + $0x50] sm:$0xff] %v2215
  %2260 = vst [vmem:[#allocation3 + $0x58] sm:$0xff] %v2217
  %2261 = vst [vmem:[#allocation3 + $0x60] sm:$0xff] %v2108
  %2262 = vst [vmem:[#allocation3 + $0x68] sm:$0xff] %v2110
  %2263 = vst [vmem:[#allocation3 + $0x70] sm:$0xff] %v2221
  %2264 = vst [vmem:[#allocation3 + $0x78] sm:$0xff] %v2223
  %2265 = vst [vmem:[#allocation3 + $0x80] sm:$0xff] %v2114
  %2266 = vst [vmem:[#allocation3 + $0x88] sm:$0xff] %v2116
  %2267 = vst [vmem:[#allocation3 + $0x90] sm:$0xff] %v2227
  %2268 = vst [vmem:[#allocation3 + $0x98] sm:$0xff] %v2229
  %2269 = vst [vmem:[#allocation3 + $0xa0] sm:$0xff] %v2120
  %2270 = vst [vmem:[#allocation3 + $0xa8] sm:$0xff] %v2122
  %2271 = vst [vmem:[#allocation3 + $0xb0] sm:$0xff] %v2233
  %2272 = vst [vmem:[#allocation3 + $0xb8] sm:$0xff] %v2235
  %2273 = vst [vmem:[#allocation3 + $0xc0] sm:$0xff] %v2126
  %2274 = vst [vmem:[#allocation3 + $0xc8] sm:$0xff] %v2128
  %2275 = vst [vmem:[#allocation3 + $0xd0] sm:$0xff] %v2239
  %2276 = vst [vmem:[#allocation3 + $0xd8] sm:$0xff] %v2241
  %2277 = vst [vmem:[#allocation3 + $0xe0] sm:$0xff] %v2132
  %2278 = vst [vmem:[#allocation3 + $0xe8] sm:$0xff] %v2134
  %2279 = vst [vmem:[#allocation3 + $0xf0] sm:$0xff] %v2245
  %2280 = vst [vmem:[#allocation3 + $0xf8] sm:$0xff] %v2247
  %v2281 = vld [vmem:[#allocation3] sm:$0xff]
  %v2282 = vld [vmem:[#allocation3 + $0x8] sm:$0xff]
  %v2283 = vld [vmem:[#allocation3 + $0x10] sm:$0xff]
  %v2284 = vld [vmem:[#allocation3 + $0x18] sm:$0xff]
  %2285 = vmatprep.subr.mxu0 %v1929
  %2286 = vmatpush1.msra.mxu0 %v1928
  %2287 = vmatprep.subr.mxu0 %v1933
  %2288 = vmatpush1.msra.mxu0 %v1932
  %2289 = vmatprep.subr.mxu0 %v1937
  %2290 = vmatpush1.msra.mxu0 %v1936
  %2291 = vmatprep.subr.mxu0 %v1941
  %2292 = vmatpush1.msra.mxu0 %v1940
  %2293 = vmatprep.subr.mxu0 %v1945
  %2294 = vmatpush1.msra.mxu0 %v1944
  %2295 = vmatprep.subr.mxu0 %v1949
  %2296 = vmatpush1.msra.mxu0 %v1948
  %2297 = vmatprep.subr.mxu0 %v1953
  %2298 = vmatpush1.msra.mxu0 %v1952
  %2299 = vmatprep.subr.mxu0 %v1957
  %2300 = vmatpush1.msra.mxu0 %v1956
  %2301 = vmatprep.subr.mxu0 %v1961
  %2302 = vmatpush1.msra.mxu0 %v1960
  %2303 = vmatprep.subr.mxu0 %v1965
  %2304 = vmatpush1.msra.mxu0 %v1964
  %2305 = vmatprep.subr.mxu0 %v1969
  %2306 = vmatpush1.msra.mxu0 %v1968
  %2307 = vmatprep.subr.mxu0 %v1973
  %2308 = vmatpush1.msra.mxu0 %v1972
  %2309 = vmatprep.subr.mxu0 %v1977
  %2310 = vmatpush1.msra.mxu0 %v1976
  %2311 = vmatprep.subr.mxu0 %v1981
  %2312 = vmatpush1.msra.mxu0 %v1980
  %2313 = vmatprep.subr.mxu0 %v1985
  %2314 = vmatpush1.msra.mxu0 %v1984
  %2315 = vmatprep.subr.mxu0 %v1989
  %2316 = vmatpush1.msra.mxu0 %v1988
  %2317 = vmatprep.subr.mxu0 0.0
  %2318 = vmatpush1.msra.mxu0 0.0
  %2319 = vmatprep.subr.mxu0 0.0
  %2320 = vmatpush1.msra.mxu0 0.0
  %2321 = vmatprep.subr.mxu0 0.0
  %2322 = vmatpush1.msra.mxu0 0.0
  %2323 = vmatprep.subr.mxu0 0.0
  %2324 = vmatpush1.msra.mxu0 0.0
  %2325 = vmatprep.subr.mxu0 0.0
  %2326 = vmatpush1.msra.mxu0 0.0
  %2327 = vmatprep.subr.mxu0 0.0
  %2328 = vmatpush1.msra.mxu0 0.0
  %2329 = vmatprep.subr.mxu0 0.0
  %2330 = vmatpush1.msra.mxu0 0.0
  %2331 = vmatprep.subr.mxu0 0.0
  %2332 = vmatpush1.msra.mxu0 0.0
  %2333 = vmatprep.subr.mxu0 0.0
  %2334 = vmatpush1.msra.mxu0 0.0
  %2335 = vmatprep.subr.mxu0 0.0
  %2336 = vmatpush1.msra.mxu0 0.0
  %2337 = vmatprep.subr.mxu0 0.0
  %2338 = vmatpush1.msra.mxu0 0.0
  %2339 = vmatprep.subr.mxu0 0.0
  %2340 = vmatpush1.msra.mxu0 0.0
  %2341 = vmatprep.subr.mxu0 0.0
  %2342 = vmatpush1.msra.mxu0 0.0
  %2343 = vmatprep.subr.mxu0 0.0
  %2344 = vmatpush1.msra.mxu0 0.0
  %2345 = vmatprep.subr.mxu0 0.0
  %2346 = vmatpush1.msra.mxu0 0.0
  %2347 = vmatprep.subr.mxu0 0.0
  %2348 = vmatpush1.msra.mxu0 0.0
  %2349 = vmatprep.mubr.f32.mxu0 0.0
  %2350 = vmatmul.mubr.f32.gmra.mrb[0].mxu0 0.0
  %v2351 = vpop.f32.mrb[0].mxu0
  %v2352 = vadd.f32 0.0, %v2351
  %v2353 = vpop.f32.mrb[0].mxu0
  %v2354 = vadd.f32 0.0, %v2353
  %2355 = vdwg.mxu0
  %2356 = vmatprep.subr.mxu0 %v1931
  %2357 = vmatpush1.msra.mxu0 %v1930
  %2358 = vmatprep.subr.mxu0 %v1935
  %2359 = vmatpush1.msra.mxu0 %v1934
  %2360 = vmatprep.subr.mxu0 %v1939
  %2361 = vmatpush1.msra.mxu0 %v1938
  %2362 = vmatprep.subr.mxu0 %v1943
  %2363 = vmatpush1.msra.mxu0 %v1942
  %2364 = vmatprep.subr.mxu0 %v1947
  %2365 = vmatpush1.msra.mxu0 %v1946
  %2366 = vmatprep.subr.mxu0 %v1951
  %2367 = vmatpush1.msra.mxu0 %v1950
  %2368 = vmatprep.subr.mxu0 %v1955
  %2369 = vmatpush1.msra.mxu0 %v1954
  %2370 = vmatprep.subr.mxu0 %v1959
  %2371 = vmatpush1.msra.mxu0 %v1958
  %2372 = vmatprep.subr.mxu0 %v1963
  %2373 = vmatpush1.msra.mxu0 %v1962
  %2374 = vmatprep.subr.mxu0 %v1967
  %2375 = vmatpush1.msra.mxu0 %v1966
  %2376 = vmatprep.subr.mxu0 %v1971
  %2377 = vmatpush1.msra.mxu0 %v1970
  %2378 = vmatprep.subr.mxu0 %v1975
  %2379 = vmatpush1.msra.mxu0 %v1974
  %2380 = vmatprep.subr.mxu0 %v1979
  %2381 = vmatpush1.msra.mxu0 %v1978
  %2382 = vmatprep.subr.mxu0 %v1983
  %2383 = vmatpush1.msra.mxu0 %v1982
  %2384 = vmatprep.subr.mxu0 %v1987
  %2385 = vmatpush1.msra.mxu0 %v1986
  %2386 = vmatprep.subr.mxu0 %v1991
  %2387 = vmatpush1.msra.mxu0 %v1990
  %2388 = vmatprep.subr.mxu0 0.0
  %2389 = vmatpush1.msra.mxu0 0.0
  %2390 = vmatprep.subr.mxu0 0.0
  %2391 = vmatpush1.msra.mxu0 0.0
  %2392 = vmatprep.subr.mxu0 0.0
  %2393 = vmatpush1.msra.mxu0 0.0
  %2394 = vmatprep.subr.mxu0 0.0
  %2395 = vmatpush1.msra.mxu0 0.0
  %2396 = vmatprep.subr.mxu0 0.0
  %2397 = vmatpush1.msra.mxu0 0.0
  %2398 = vmatprep.subr.mxu0 0.0
  %2399 = vmatpush1.msra.mxu0 0.0
  %2400 = vmatprep.subr.mxu0 0.0
  %2401 = vmatpush1.msra.mxu0 0.0
  %2402 = vmatprep.subr.mxu0 0.0
  %2403 = vmatpush1.msra.mxu0 0.0
  %2404 = vmatprep.subr.mxu0 0.0
  %2405 = vmatpush1.msra.mxu0 0.0
  %2406 = vmatprep.subr.mxu0 0.0
  %2407 = vmatpush1.msra.mxu0 0.0
  %2408 = vmatprep.subr.mxu0 0.0
  %2409 = vmatpush1.msra.mxu0 0.0
  %2410 = vmatprep.subr.mxu0 0.0
  %2411 = vmatpush1.msra.mxu0 0.0
  %2412 = vmatprep.subr.mxu0 0.0
  %2413 = vmatpush1.msra.mxu0 0.0
  %2414 = vmatprep.subr.mxu0 0.0
  %2415 = vmatpush1.msra.mxu0 0.0
  %2416 = vmatprep.subr.mxu0 0.0
  %2417 = vmatpush1.msra.mxu0 0.0
  %2418 = vmatprep.subr.mxu0 0.0
  %2419 = vmatpush1.msra.mxu0 0.0
  %2420 = vmatprep.mubr.f32.mxu0 0.0
  %2421 = vmatmul.mubr.f32.gmra.mrb[0].mxu0 0.0
  %v2422 = vpop.f32.mrb[0].mxu0
  %v2423 = vadd.f32 0.0, %v2422
  %v2424 = vpop.f32.mrb[0].mxu0
  %v2425 = vadd.f32 0.0, %v2424
  %2426 = vdwg.mxu0
  %v2427 = vadd.f32 %v2281, %v2352
  %v2428 = vadd.f32 %v2282, %v2354
  %v2429 = vadd.f32 %v2283, %v2423
  %v2430 = vadd.f32 %v2284, %v2425
  %v2431 = vxor.u32 %v2427, 2147483648
  %v2432 = vmul.f32 %v2431, 1.442695
  %v2433 = vpow.pop %v2432
  %v2434 = vadd.f32 %v2433, 1.0
  %v2435 = vrcp.pop %v2434
  %v2436 = vmul.f32 1.0, %v2435
  %v2437 = vxor.u32 %v2428, 2147483648
  %v2438 = vmul.f32 %v2437, 1.442695
  %v2439 = vpow.pop %v2438
  %v2440 = vadd.f32 %v2439, 1.0
  %v2441 = vrcp.pop %v2440
  %v2442 = vmul.f32 1.0, %v2441
  %v2443 = vtanh.pop %v2429
  %v2444 = vxor.u32 %v2430, 2147483648
  %v2445 = vmul.f32 %v2444, 1.442695
  %v2446 = vpow.pop %v2445
  %v2447 = vadd.f32 %v2446, 1.0
  %v2448 = vrcp.pop %v2447
  %v2449 = vmul.f32 1.0, %v2448
  %v2450 = vmul.f32 %v2442, 0.0
  %v2451 = vmul.f32 %v2436, %v2443
  %v2452 = vadd.f32 %v2450, %v2451
  %v2453 = vtanh.pop %v2452
  %v2454 = vmul.f32 %v2449, %v2453
  %2455 = vst [vmem:[#allocation2] sm:$0xff] %v2454
  %v2456 = vld [vmem:[%s623] sm:$0xff]
  %v2457 = vld [vmem:[%s623 + $0x8] sm:$0xff]
  %v2458 = vld [vmem:[%s623 + $0x10] sm:$0xff]
  %v2459 = vld [vmem:[%s623 + $0x18] sm:$0xff]
  %2460 = vmatprep.subr.mxu0 %v1929
  %2461 = vmatpush1.msra.mxu0 %v1928
  %2462 = vmatprep.subr.mxu0 %v1933
  %2463 = vmatpush1.msra.mxu0 %v1932
  %2464 = vmatprep.subr.mxu0 %v1937
  %2465 = vmatpush1.msra.mxu0 %v1936
  %2466 = vmatprep.subr.mxu0 %v1941
  %2467 = vmatpush1.msra.mxu0 %v1940
  %2468 = vmatprep.subr.mxu0 %v1945
  %2469 = vmatpush1.msra.mxu0 %v1944
  %2470 = vmatprep.subr.mxu0 %v1949
  %2471 = vmatpush1.msra.mxu0 %v1948
  %2472 = vmatprep.subr.mxu0 %v1953
  %2473 = vmatpush1.msra.mxu0 %v1952
  %2474 = vmatprep.subr.mxu0 %v1957
  %2475 = vmatpush1.msra.mxu0 %v1956
  %2476 = vmatprep.subr.mxu0 %v1961
  %2477 = vmatpush1.msra.mxu0 %v1960
  %2478 = vmatprep.subr.mxu0 %v1965
  %2479 = vmatpush1.msra.mxu0 %v1964
  %2480 = vmatprep.subr.mxu0 %v1969
  %2481 = vmatpush1.msra.mxu0 %v1968
  %2482 = vmatprep.subr.mxu0 %v1973
  %2483 = vmatpush1.msra.mxu0 %v1972
  %2484 = vmatprep.subr.mxu0 %v1977
  %2485 = vmatpush1.msra.mxu0 %v1976
  %2486 = vmatprep.subr.mxu0 %v1981
  %2487 = vmatpush1.msra.mxu0 %v1980
  %2488 = vmatprep.subr.mxu0 %v1985
  %2489 = vmatpush1.msra.mxu0 %v1984
  %2490 = vmatprep.subr.mxu0 %v1989
  %2491 = vmatpush1.msra.mxu0 %v1988
  %2492 = vmatprep.subr.mxu0 0.0
  %2493 = vmatpush1.msra.mxu0 0.0
  %2494 = vmatprep.subr.mxu0 0.0
  %2495 = vmatpush1.msra.mxu0 0.0
  %2496 = vmatprep.subr.mxu0 0.0
  %2497 = vmatpush1.msra.mxu0 0.0
  %2498 = vmatprep.subr.mxu0 0.0
  %2499 = vmatpush1.msra.mxu0 0.0
  %2500 = vmatprep.subr.mxu0 0.0
  %2501 = vmatpush1.msra.mxu0 0.0
  %2502 = vmatprep.subr.mxu0 0.0
  %2503 = vmatpush1.msra.mxu0 0.0
  %2504 = vmatprep.subr.mxu0 0.0
  %2505 = vmatpush1.msra.mxu0 0.0
  %2506 = vmatprep.subr.mxu0 0.0
  %2507 = vmatpush1.msra.mxu0 0.0
  %2508 = vmatprep.subr.mxu0 0.0
  %2509 = vmatpush1.msra.mxu0 0.0
  %2510 = vmatprep.subr.mxu0 0.0
  %2511 = vmatpush1.msra.mxu0 0.0
  %2512 = vmatprep.subr.mxu0 0.0
  %2513 = vmatpush1.msra.mxu0 0.0
  %2514 = vmatprep.subr.mxu0 0.0
  %2515 = vmatpush1.msra.mxu0 0.0
  %2516 = vmatprep.subr.mxu0 0.0
  %2517 = vmatpush1.msra.mxu0 0.0
  %2518 = vmatprep.subr.mxu0 0.0
  %2519 = vmatpush1.msra.mxu0 0.0
  %2520 = vmatprep.subr.mxu0 0.0
  %2521 = vmatpush1.msra.mxu0 0.0
  %2522 = vmatprep.subr.mxu0 0.0
  %2523 = vmatpush1.msra.mxu0 0.0
  %2524 = vmatprep.mubr.f32.mxu0 0.0
  %2525 = vmatmul.mubr.f32.gmra.mrb[0].mxu0 %v2454
  %v2526 = vpop.f32.mrb[0].mxu0
  %v2527 = vadd.f32 0.0, %v2526
  %v2528 = vpop.f32.mrb[0].mxu0
  %v2529 = vadd.f32 0.0, %v2528
  %2530 = vdwg.mxu0
  %2531 = vmatprep.subr.mxu0 %v1931
  %2532 = vmatpush1.msra.mxu0 %v1930
  %2533 = vmatprep.subr.mxu0 %v1935
  %2534 = vmatpush1.msra.mxu0 %v1934
  %2535 = vmatprep.subr.mxu0 %v1939
  %2536 = vmatpush1.msra.mxu0 %v1938
  %2537 = vmatprep.subr.mxu0 %v1943
  %2538 = vmatpush1.msra.mxu0 %v1942
  %2539 = vmatprep.subr.mxu0 %v1947
  %2540 = vmatpush1.msra.mxu0 %v1946
  %2541 = vmatprep.subr.mxu0 %v1951
  %2542 = vmatpush1.msra.mxu0 %v1950
  %2543 = vmatprep.subr.mxu0 %v1955
  %2544 = vmatpush1.msra.mxu0 %v1954
  %2545 = vmatprep.subr.mxu0 %v1959
  %2546 = vmatpush1.msra.mxu0 %v1958
  %2547 = vmatprep.subr.mxu0 %v1963
  %2548 = vmatpush1.msra.mxu0 %v1962
  %2549 = vmatprep.subr.mxu0 %v1967
  %2550 = vmatpush1.msra.mxu0 %v1966
  %2551 = vmatprep.subr.mxu0 %v1971
  %2552 = vmatpush1.msra.mxu0 %v1970
  %2553 = vmatprep.subr.mxu0 %v1975
  %2554 = vmatpush1.msra.mxu0 %v1974
  %2555 = vmatprep.subr.mxu0 %v1979
  %2556 = vmatpush1.msra.mxu0 %v1978
  %2557 = vmatprep.subr.mxu0 %v1983
  %2558 = vmatpush1.msra.mxu0 %v1982
  %2559 = vmatprep.subr.mxu0 %v1987
  %2560 = vmatpush1.msra.mxu0 %v1986
  %2561 = vmatprep.subr.mxu0 %v1991
  %2562 = vmatpush1.msra.mxu0 %v1990
  %2563 = vmatprep.subr.mxu0 0.0
  %2564 = vmatpush1.msra.mxu0 0.0
  %2565 = vmatprep.subr.mxu0 0.0
  %2566 = vmatpush1.msra.mxu0 0.0
  %2567 = vmatprep.subr.mxu0 0.0
  %2568 = vmatpush1.msra.mxu0 0.0
  %2569 = vmatprep.subr.mxu0 0.0
  %2570 = vmatpush1.msra.mxu0 0.0
  %2571 = vmatprep.subr.mxu0 0.0
  %2572 = vmatpush1.msra.mxu0 0.0
  %2573 = vmatprep.subr.mxu0 0.0
  %2574 = vmatpush1.msra.mxu0 0.0
  %2575 = vmatprep.subr.mxu0 0.0
  %2576 = vmatpush1.msra.mxu0 0.0
  %2577 = vmatprep.subr.mxu0 0.0
  %2578 = vmatpush1.msra.mxu0 0.0
  %2579 = vmatprep.subr.mxu0 0.0
  %2580 = vmatpush1.msra.mxu0 0.0
  %2581 = vmatprep.subr.mxu0 0.0
  %2582 = vmatpush1.msra.mxu0 0.0
  %2583 = vmatprep.subr.mxu0 0.0
  %2584 = vmatpush1.msra.mxu0 0.0
  %2585 = vmatprep.subr.mxu0 0.0
  %2586 = vmatpush1.msra.mxu0 0.0
  %2587 = vmatprep.subr.mxu0 0.0
  %2588 = vmatpush1.msra.mxu0 0.0
  %2589 = vmatprep.subr.mxu0 0.0
  %2590 = vmatpush1.msra.mxu0 0.0
  %2591 = vmatprep.subr.mxu0 0.0
  %2592 = vmatpush1.msra.mxu0 0.0
  %2593 = vmatprep.subr.mxu0 0.0
  %2594 = vmatpush1.msra.mxu0 0.0
  %2595 = vmatprep.mubr.f32.mxu0 0.0
  %2596 = vmatmul.mubr.f32.gmra.mrb[0].mxu0 %v2454
  %v2597 = vpop.f32.mrb[0].mxu0
  %v2598 = vadd.f32 0.0, %v2597
  %v2599 = vpop.f32.mrb[0].mxu0
  %v2600 = vadd.f32 0.0, %v2599
  %2601 = vdwg.mxu0
  %v2602 = vadd.f32 %v2456, %v2527
  %v2603 = vadd.f32 %v2457, %v2529
  %v2604 = vadd.f32 %v2458, %v2598
  %v2605 = vadd.f32 %v2459, %v2600
  %v2606 = vxor.u32 %v2602, 2147483648
  %v2607 = vmul.f32 %v2606, 1.442695
  %v2608 = vpow.pop %v2607
  %v2609 = vadd.f32 %v2608, 1.0
  %v2610 = vrcp.pop %v2609
  %v2611 = vmul.f32 1.0, %v2610
  %v2612 = vxor.u32 %v2603, 2147483648
  %v2613 = vmul.f32 %v2612, 1.442695
  %v2614 = vpow.pop %v2613
  %v2615 = vadd.f32 %v2614, 1.0
  %v2616 = vrcp.pop %v2615
  %v2617 = vmul.f32 1.0, %v2616
  %v2618 = vtanh.pop %v2604
  %v2619 = vxor.u32 %v2605, 2147483648
  %v2620 = vmul.f32 %v2619, 1.442695
  %v2621 = vpow.pop %v2620
  %v2622 = vadd.f32 %v2621, 1.0
  %v2623 = vrcp.pop %v2622
  %v2624 = vmul.f32 1.0, %v2623
  %v2625 = vmul.f32 %v2617, %v2452
  %v2626 = vmul.f32 %v2611, %v2618
  %v2627 = vadd.f32 %v2625, %v2626
  %v2628 = vtanh.pop %v2627
  %v2629 = vmul.f32 %v2624, %v2628
  %2630 = vst [vmem:[%s798] sm:$0xff] %v2629
  %v2631 = vld [vmem:[%s800] sm:$0xff]
  %v2632 = vld [vmem:[%s800 + $0x8] sm:$0xff]
  %v2633 = vld [vmem:[%s800 + $0x10] sm:$0xff]
  %v2634 = vld [vmem:[%s800 + $0x18] sm:$0xff]
  %2635 = vmatprep.subr.mxu0 %v1929
  %2636 = vmatpush1.msra.mxu0 %v1928
  %2637 = vmatprep.subr.mxu0 %v1933
  %2638 = vmatpush1.msra.mxu0 %v1932
  %2639 = vmatprep.subr.mxu0 %v1937
  %2640 = vmatpush1.msra.mxu0 %v1936
  %2641 = vmatprep.subr.mxu0 %v1941
  %2642 = vmatpush1.msra.mxu0 %v1940
  %2643 = vmatprep.subr.mxu0 %v1945
  %2644 = vmatpush1.msra.mxu0 %v1944
  %2645 = vmatprep.subr.mxu0 %v1949
  %2646 = vmatpush1.msra.mxu0 %v1948
  %2647 = vmatprep.subr.mxu0 %v1953
  %2648 = vmatpush1.msra.mxu0 %v1952
  %2649 = vmatprep.subr.mxu0 %v1957
  %2650 = vmatpush1.msra.mxu0 %v1956
  %2651 = vmatprep.subr.mxu0 %v1961
  %2652 = vmatpush1.msra.mxu0 %v1960
  %2653 = vmatprep.subr.mxu0 %v1965
  %2654 = vmatpush1.msra.mxu0 %v1964
  %2655 = vmatprep.subr.mxu0 %v1969
  %2656 = vmatpush1.msra.mxu0 %v1968
  %2657 = vmatprep.subr.mxu0 %v1973
  %2658 = vmatpush1.msra.mxu0 %v1972
  %2659 = vmatprep.subr.mxu0 %v1977
  %2660 = vmatpush1.msra.mxu0 %v1976
  %2661 = vmatprep.subr.mxu0 %v1981
  %2662 = vmatpush1.msra.mxu0 %v1980
  %2663 = vmatprep.subr.mxu0 %v1985
  %2664 = vmatpush1.msra.mxu0 %v1984
  %2665 = vmatprep.subr.mxu0 %v1989
  %2666 = vmatpush1.msra.mxu0 %v1988
  %2667 = vmatprep.subr.mxu0 0.0
  %2668 = vmatpush1.msra.mxu0 0.0
  %2669 = vmatprep.subr.mxu0 0.0
  %2670 = vmatpush1.msra.mxu0 0.0
  %2671 = vmatprep.subr.mxu0 0.0
  %2672 = vmatpush1.msra.mxu0 0.0
  %2673 = vmatprep.subr.mxu0 0.0
  %2674 = vmatpush1.msra.mxu0 0.0
  %2675 = vmatprep.subr.mxu0 0.0
  %2676 = vmatpush1.msra.mxu0 0.0
  %2677 = vmatprep.subr.mxu0 0.0
  %2678 = vmatpush1.msra.mxu0 0.0
  %2679 = vmatprep.subr.mxu0 0.0
  %2680 = vmatpush1.msra.mxu0 0.0
  %2681 = vmatprep.subr.mxu0 0.0
  %2682 = vmatpush1.msra.mxu0 0.0
  %2683 = vmatprep.subr.mxu0 0.0
  %2684 = vmatpush1.msra.mxu0 0.0
  %2685 = vmatprep.subr.mxu0 0.0
  %2686 = vmatpush1.msra.mxu0 0.0
  %2687 = vmatprep.subr.mxu0 0.0
  %2688 = vmatpush1.msra.mxu0 0.0
  %2689 = vmatprep.subr.mxu0 0.0
  %2690 = vmatpush1.msra.mxu0 0.0
  %2691 = vmatprep.subr.mxu0 0.0
  %2692 = vmatpush1.msra.mxu0 0.0
  %2693 = vmatprep.subr.mxu0 0.0
  %2694 = vmatpush1.msra.mxu0 0.0
  %2695 = vmatprep.subr.mxu0 0.0
  %2696 = vmatpush1.msra.mxu0 0.0
  %2697 = vmatprep.subr.mxu0 0.0
  %2698 = vmatpush1.msra.mxu0 0.0
  %2699 = vmatprep.mubr.f32.mxu0 0.0
  %2700 = vmatmul.mubr.f32.gmra.mrb[0].mxu0 %v2629
  %v2701 = vpop.f32.mrb[0].mxu0
  %v2702 = vadd.f32 0.0, %v2701
  %v2703 = vpop.f32.mrb[0].mxu0
  %v2704 = vadd.f32 0.0, %v2703
  %2705 = vdwg.mxu0
  %2706 = vmatprep.subr.mxu0 %v1931
  %2707 = vmatpush1.msra.mxu0 %v1930
  %2708 = vmatprep.subr.mxu0 %v1935
  %2709 = vmatpush1.msra.mxu0 %v1934
  %2710 = vmatprep.subr.mxu0 %v1939
  %2711 = vmatpush1.msra.mxu0 %v1938
  %2712 = vmatprep.subr.mxu0 %v1943
  %2713 = vmatpush1.msra.mxu0 %v1942
  %2714 = vmatprep.subr.mxu0 %v1947
  %2715 = vmatpush1.msra.mxu0 %v1946
  %2716 = vmatprep.subr.mxu0 %v1951
  %2717 = vmatpush1.msra.mxu0 %v1950
  %2718 = vmatprep.subr.mxu0 %v1955
  %2719 = vmatpush1.msra.mxu0 %v1954
  %2720 = vmatprep.subr.mxu0 %v1959
  %2721 = vmatpush1.msra.mxu0 %v1958
  %2722 = vmatprep.subr.mxu0 %v1963
  %2723 = vmatpush1.msra.mxu0 %v1962
  %2724 = vmatprep.subr.mxu0 %v1967
  %2725 = vmatpush1.msra.mxu0 %v1966
  %2726 = vmatprep.subr.mxu0 %v1971
  %2727 = vmatpush1.msra.mxu0 %v1970
  %2728 = vmatprep.subr.mxu0 %v1975
  %2729 = vmatpush1.msra.mxu0 %v1974
  %2730 = vmatprep.subr.mxu0 %v1979
  %2731 = vmatpush1.msra.mxu0 %v1978
  %2732 = vmatprep.subr.mxu0 %v1983
  %2733 = vmatpush1.msra.mxu0 %v1982
  %2734 = vmatprep.subr.mxu0 %v1987
  %2735 = vmatpush1.msra.mxu0 %v1986
  %2736 = vmatprep.subr.mxu0 %v1991
  %2737 = vmatpush1.msra.mxu0 %v1990
  %2738 = vmatprep.subr.mxu0 0.0
  %2739 = vmatpush1.msra.mxu0 0.0
  %2740 = vmatprep.subr.mxu0 0.0
  %2741 = vmatpush1.msra.mxu0 0.0
  %2742 = vmatprep.subr.mxu0 0.0
  %2743 = vmatpush1.msra.mxu0 0.0
  %2744 = vmatprep.subr.mxu0 0.0
  %2745 = vmatpush1.msra.mxu0 0.0
  %2746 = vmatprep.subr.mxu0 0.0
  %2747 = vmatpush1.msra.mxu0 0.0
  %2748 = vmatprep.subr.mxu0 0.0
  %2749 = vmatpush1.msra.mxu0 0.0
  %2750 = vmatprep.subr.mxu0 0.0
  %2751 = vmatpush1.msra.mxu0 0.0
  %2752 = vmatprep.subr.mxu0 0.0
  %2753 = vmatpush1.msra.mxu0 0.0
  %2754 = vmatprep.subr.mxu0 0.0
  %2755 = vmatpush1.msra.mxu0 0.0
  %2756 = vmatprep.subr.mxu0 0.0
  %2757 = vmatpush1.msra.mxu0 0.0
  %2758 = vmatprep.subr.mxu0 0.0
  %2759 = vmatpush1.msra.mxu0 0.0
  %2760 = vmatprep.subr.mxu0 0.0
  %2761 = vmatpush1.msra.mxu0 0.0
  %2762 = vmatprep.subr.mxu0 0.0
  %2763 = vmatpush1.msra.mxu0 0.0
  %2764 = vmatprep.subr.mxu0 0.0
  %2765 = vmatpush1.msra.mxu0 0.0
  %2766 = vmatprep.subr.mxu0 0.0
  %2767 = vmatpush1.msra.mxu0 0.0
  %2768 = vmatprep.subr.mxu0 0.0
  %2769 = vmatpush1.msra.mxu0 0.0
  %2770 = vmatprep.mubr.f32.mxu0 0.0
  %2771 = vmatmul.mubr.f32.gmra.mrb[0].mxu0 %v2629
  %v2772 = vpop.f32.mrb[0].mxu0
  %v2773 = vadd.f32 0.0, %v2772
  %v2774 = vpop.f32.mrb[0].mxu0
  %v2775 = vadd.f32 0.0, %v2774
  %2776 = vdwg.mxu0
  %v2777 = vadd.f32 %v2631, %v2702
  %v2778 = vadd.f32 %v2632, %v2704
  %v2779 = vadd.f32 %v2633, %v2773
  %v2780 = vadd.f32 %v2634, %v2775
  %v2781 = vxor.u32 %v2777, 2147483648
  %v2782 = vmul.f32 %v2781, 1.442695
  %v2783 = vpow.pop %v2782
  %v2784 = vadd.f32 %v2783, 1.0
  %v2785 = vrcp.pop %v2784
  %v2786 = vmul.f32 1.0, %v2785
  %v2787 = vxor.u32 %v2778, 2147483648
  %v2788 = vmul.f32 %v2787, 1.442695
  %v2789 = vpow.pop %v2788
  %v2790 = vadd.f32 %v2789, 1.0
  %v2791 = vrcp.pop %v2790
  %v2792 = vmul.f32 1.0, %v2791
  %v2793 = vtanh.pop %v2779
  %v2794 = vxor.u32 %v2780, 2147483648
  %v2795 = vmul.f32 %v2794, 1.442695
  %v2796 = vpow.pop %v2795
  %v2797 = vadd.f32 %v2796, 1.0
  %v2798 = vrcp.pop %v2797
  %v2799 = vmul.f32 1.0, %v2798
  %v2800 = vmul.f32 %v2792, %v2627
  %v2801 = vmul.f32 %v2786, %v2793
  %v2802 = vadd.f32 %v2800, %v2801
  %v2803 = vtanh.pop %v2802
  %v2804 = vmul.f32 %v2799, %v2803
  %2805 = vst [vmem:[%s975] sm:$0xff] %v2804
  %v2806 = vld [vmem:[%s977] sm:$0xff]
  %v2807 = vld [vmem:[%s977 + $0x8] sm:$0xff]
  %v2808 = vld [vmem:[%s977 + $0x10] sm:$0xff]
  %v2809 = vld [vmem:[%s977 + $0x18] sm:$0xff]
  %2810 = vmatprep.subr.mxu0 %v1929
  %2811 = vmatpush1.msra.mxu0 %v1928
  %2812 = vmatprep.subr.mxu0 %v1933
  %2813 = vmatpush1.msra.mxu0 %v1932
  %2814 = vmatprep.subr.mxu0 %v1937
  %2815 = vmatpush1.msra.mxu0 %v1936
  %2816 = vmatprep.subr.mxu0 %v1941
  %2817 = vmatpush1.msra.mxu0 %v1940
  %2818 = vmatprep.subr.mxu0 %v1945
  %2819 = vmatpush1.msra.mxu0 %v1944
  %2820 = vmatprep.subr.mxu0 %v1949
  %2821 = vmatpush1.msra.mxu0 %v1948
  %2822 = vmatprep.subr.mxu0 %v1953
  %2823 = vmatpush1.msra.mxu0 %v1952
  %2824 = vmatprep.subr.mxu0 %v1957
  %2825 = vmatpush1.msra.mxu0 %v1956
  %2826 = vmatprep.subr.mxu0 %v1961
  %2827 = vmatpush1.msra.mxu0 %v1960
  %2828 = vmatprep.subr.mxu0 %v1965
  %2829 = vmatpush1.msra.mxu0 %v1964
  %2830 = vmatprep.subr.mxu0 %v1969
  %2831 = vmatpush1.msra.mxu0 %v1968
  %2832 = vmatprep.subr.mxu0 %v1973
  %2833 = vmatpush1.msra.mxu0 %v1972
  %2834 = vmatprep.subr.mxu0 %v1977
  %2835 = vmatpush1.msra.mxu0 %v1976
  %2836 = vmatprep.subr.mxu0 %v1981
  %2837 = vmatpush1.msra.mxu0 %v1980
  %2838 = vmatprep.subr.mxu0 %v1985
  %2839 = vmatpush1.msra.mxu0 %v1984
  %2840 = vmatprep.subr.mxu0 %v1989
  %2841 = vmatpush1.msra.mxu0 %v1988
  %2842 = vmatprep.subr.mxu0 0.0
  %2843 = vmatpush1.msra.mxu0 0.0
  %2844 = vmatprep.subr.mxu0 0.0
  %2845 = vmatpush1.msra.mxu0 0.0
  %2846 = vmatprep.subr.mxu0 0.0
  %2847 = vmatpush1.msra.mxu0 0.0
  %2848 = vmatprep.subr.mxu0 0.0
  %2849 = vmatpush1.msra.mxu0 0.0
  %2850 = vmatprep.subr.mxu0 0.0
  %2851 = vmatpush1.msra.mxu0 0.0
  %2852 = vmatprep.subr.mxu0 0.0
  %2853 = vmatpush1.msra.mxu0 0.0
  %2854 = vmatprep.subr.mxu0 0.0
  %2855 = vmatpush1.msra.mxu0 0.0
  %2856 = vmatprep.subr.mxu0 0.0
  %2857 = vmatpush1.msra.mxu0 0.0
  %2858 = vmatprep.subr.mxu0 0.0
  %2859 = vmatpush1.msra.mxu0 0.0
  %2860 = vmatprep.subr.mxu0 0.0
  %2861 = vmatpush1.msra.mxu0 0.0
  %2862 = vmatprep.subr.mxu0 0.0
  %2863 = vmatpush1.msra.mxu0 0.0
  %2864 = vmatprep.subr.mxu0 0.0
  %2865 = vmatpush1.msra.mxu0 0.0
  %2866 = vmatprep.subr.mxu0 0.0
  %2867 = vmatpush1.msra.mxu0 0.0
  %2868 = vmatprep.subr.mxu0 0.0
  %2869 = vmatpush1.msra.mxu0 0.0
  %2870 = vmatprep.subr.mxu0 0.0
  %2871 = vmatpush1.msra.mxu0 0.0
  %2872 = vmatprep.subr.mxu0 0.0
  %2873 = vmatpush1.msra.mxu0 0.0
  %2874 = vmatprep.mubr.f32.mxu0 0.0
  %2875 = vmatmul.mubr.f32.gmra.mrb[0].mxu0 %v2804
  %v2876 = vpop.f32.mrb[0].mxu0
  %v2877 = vadd.f32 0.0, %v2876
  %v2878 = vpop.f32.mrb[0].mxu0
  %v2879 = vadd.f32 0.0, %v2878
  %2880 = vdwg.mxu0
  %2881 = vmatprep.subr.mxu0 %v1931
  %2882 = vmatpush1.msra.mxu0 %v1930
  %2883 = vmatprep.subr.mxu0 %v1935
  %2884 = vmatpush1.msra.mxu0 %v1934
  %2885 = vmatprep.subr.mxu0 %v1939
  %2886 = vmatpush1.msra.mxu0 %v1938
  %2887 = vmatprep.subr.mxu0 %v1943
  %2888 = vmatpush1.msra.mxu0 %v1942
  %2889 = vmatprep.subr.mxu0 %v1947
  %2890 = vmatpush1.msra.mxu0 %v1946
  %2891 = vmatprep.subr.mxu0 %v1951
  %2892 = vmatpush1.msra.mxu0 %v1950
  %2893 = vmatprep.subr.mxu0 %v1955
  %2894 = vmatpush1.msra.mxu0 %v1954
  %2895 = vmatprep.subr.mxu0 %v1959
  %2896 = vmatpush1.msra.mxu0 %v1958
  %2897 = vmatprep.subr.mxu0 %v1963
  %2898 = vmatpush1.msra.mxu0 %v1962
  %2899 = vmatprep.subr.mxu0 %v1967
  %2900 = vmatpush1.msra.mxu0 %v1966
  %2901 = vmatprep.subr.mxu0 %v1971
  %2902 = vmatpush1.msra.mxu0 %v1970
  %2903 = vmatprep.subr.mxu0 %v1975
  %2904 = vmatpush1.msra.mxu0 %v1974
  %2905 = vmatprep.subr.mxu0 %v1979
  %2906 = vmatpush1.msra.mxu0 %v1978
  %2907 = vmatprep.subr.mxu0 %v1983
  %2908 = vmatpush1.msra.mxu0 %v1982
  %2909 = vmatprep.subr.mxu0 %v1987
  %2910 = vmatpush1.msra.mxu0 %v1986
  %2911 = vmatprep.subr.mxu0 %v1991
  %2912 = vmatpush1.msra.mxu0 %v1990
  %2913 = vmatprep.subr.mxu0 0.0
  %2914 = vmatpush1.msra.mxu0 0.0
  %2915 = vmatprep.subr.mxu0 0.0
  %2916 = vmatpush1.msra.mxu0 0.0
  %2917 = vmatprep.subr.mxu0 0.0
  %2918 = vmatpush1.msra.mxu0 0.0
  %2919 = vmatprep.subr.mxu0 0.0
  %2920 = vmatpush1.msra.mxu0 0.0
  %2921 = vmatprep.subr.mxu0 0.0
  %2922 = vmatpush1.msra.mxu0 0.0
  %2923 = vmatprep.subr.mxu0 0.0
  %2924 = vmatpush1.msra.mxu0 0.0
  %2925 = vmatprep.subr.mxu0 0.0
  %2926 = vmatpush1.msra.mxu0 0.0
  %2927 = vmatprep.subr.mxu0 0.0
  %2928 = vmatpush1.msra.mxu0 0.0
  %2929 = vmatprep.subr.mxu0 0.0
  %2930 = vmatpush1.msra.mxu0 0.0
  %2931 = vmatprep.subr.mxu0 0.0
  %2932 = vmatpush1.msra.mxu0 0.0
  %2933 = vmatprep.subr.mxu0 0.0
  %2934 = vmatpush1.msra.mxu0 0.0
  %2935 = vmatprep.subr.mxu0 0.0
  %2936 = vmatpush1.msra.mxu0 0.0
  %2937 = vmatprep.subr.mxu0 0.0
  %2938 = vmatpush1.msra.mxu0 0.0
  %2939 = vmatprep.subr.mxu0 0.0
  %2940 = vmatpush1.msra.mxu0 0.0
  %2941 = vmatprep.subr.mxu0 0.0
  %2942 = vmatpush1.msra.mxu0 0.0
  %2943 = vmatprep.subr.mxu0 0.0
  %2944 = vmatpush1.msra.mxu0 0.0
  %2945 = vmatprep.mubr.f32.mxu0 0.0
  %2946 = vmatmul.mubr.f32.gmra.mrb[0].mxu0 %v2804
  %v2947 = vpop.f32.mrb[0].mxu0
  %v2948 = vadd.f32 0.0, %v2947
  %v2949 = vpop.f32.mrb[0].mxu0
  %v2950 = vadd.f32 0.0, %v2949
  %2951 = vdwg.mxu0
  %v2952 = vadd.f32 %v2806, %v2877
  %v2953 = vadd.f32 %v2807, %v2879
  %v2954 = vadd.f32 %v2808, %v2948
  %v2955 = vadd.f32 %v2809, %v2950
  %v2956 = vxor.u32 %v2952, 2147483648
  %v2957 = vmul.f32 %v2956, 1.442695
  %v2958 = vpow.pop %v2957
  %v2959 = vadd.f32 %v2958, 1.0
  %v2960 = vrcp.pop %v2959
  %v2961 = vmul.f32 1.0, %v2960
  %v2962 = vxor.u32 %v2953, 2147483648
  %v2963 = vmul.f32 %v2962, 1.442695
  %v2964 = vpow.pop %v2963
  %v2965 = vadd.f32 %v2964, 1.0
  %v2966 = vrcp.pop %v2965
  %v2967 = vmul.f32 1.0, %v2966
  %v2968 = vtanh.pop %v2954
  %v2969 = vxor.u32 %v2955, 2147483648
  %v2970 = vmul.f32 %v2969, 1.442695
  %v2971 = vpow.pop %v2970
  %v2972 = vadd.f32 %v2971, 1.0
  %v2973 = vrcp.pop %v2972
  %v2974 = vmul.f32 1.0, %v2973
  %v2975 = vmul.f32 %v2967, %v2802
  %v2976 = vmul.f32 %v2961, %v2968
  %v2977 = vadd.f32 %v2975, %v2976
  %v2978 = vtanh.pop %v2977
  %v2979 = vmul.f32 %v2974, %v2978
  %2980 = vst [vmem:[%s1152] sm:$0xff] %v2979
  %v2981 = vld [vmem:[%s1154] sm:$0xff]
  %v2982 = vld [vmem:[%s1154 + $0x8] sm:$0xff]
  %v2983 = vld [vmem:[%s1154 + $0x10] sm:$0xff]
  %v2984 = vld [vmem:[%s1154 + $0x18] sm:$0xff]
  %2985 = vmatprep.subr.mxu0 %v1929
  %2986 = vmatpush1.msra.mxu0 %v1928
  %2987 = vmatprep.subr.mxu0 %v1933
  %2988 = vmatpush1.msra.mxu0 %v1932
  %2989 = vmatprep.subr.mxu0 %v1937
  %2990 = vmatpush1.msra.mxu0 %v1936
  %2991 = vmatprep.subr.mxu0 %v1941
  %2992 = vmatpush1.msra.mxu0 %v1940
  %2993 = vmatprep.subr.mxu0 %v1945
  %2994 = vmatpush1.msra.mxu0 %v1944
  %2995 = vmatprep.subr.mxu0 %v1949
  %2996 = vmatpush1.msra.mxu0 %v1948
  %2997 = vmatprep.subr.mxu0 %v1953
  %2998 = vmatpush1.msra.mxu0 %v1952
  %2999 = vmatprep.subr.mxu0 %v1957
  %3000 = vmatpush1.msra.mxu0 %v1956
  %3001 = vmatprep.subr.mxu0 %v1961
  %3002 = vmatpush1.msra.mxu0 %v1960
  %3003 = vmatprep.subr.mxu0 %v1965
  %3004 = vmatpush1.msra.mxu0 %v1964
  %3005 = vmatprep.subr.mxu0 %v1969
  %3006 = vmatpush1.msra.mxu0 %v1968
  %3007 = vmatprep.subr.mxu0 %v1973
  %3008 = vmatpush1.msra.mxu0 %v1972
  %3009 = vmatprep.subr.mxu0 %v1977
  %3010 = vmatpush1.msra.mxu0 %v1976
  %3011 = vmatprep.subr.mxu0 %v1981
  %3012 = vmatpush1.msra.mxu0 %v1980
  %3013 = vmatprep.subr.mxu0 %v1985
  %3014 = vmatpush1.msra.mxu0 %v1984
  %3015 = vmatprep.subr.mxu0 %v1989
  %3016 = vmatpush1.msra.mxu0 %v1988
  %3017 = vmatprep.subr.mxu0 0.0
  %3018 = vmatpush1.msra.mxu0 0.0
  %3019 = vmatprep.subr.mxu0 0.0
  %3020 = vmatpush1.msra.mxu0 0.0
  %3021 = vmatprep.subr.mxu0 0.0
  %3022 = vmatpush1.msra.mxu0 0.0
  %3023 = vmatprep.subr.mxu0 0.0
  %3024 = vmatpush1.msra.mxu0 0.0
  %3025 = vmatprep.subr.mxu0 0.0
  %3026 = vmatpush1.msra.mxu0 0.0
  %3027 = vmatprep.subr.mxu0 0.0
  %3028 = vmatpush1.msra.mxu0 0.0
  %3029 = vmatprep.subr.mxu0 0.0
  %3030 = vmatpush1.msra.mxu0 0.0
  %3031 = vmatprep.subr.mxu0 0.0
  %3032 = vmatpush1.msra.mxu0 0.0
  %3033 = vmatprep.subr.mxu0 0.0
  %3034 = vmatpush1.msra.mxu0 0.0
  %3035 = vmatprep.subr.mxu0 0.0
  %3036 = vmatpush1.msra.mxu0 0.0
  %3037 = vmatprep.subr.mxu0 0.0
  %3038 = vmatpush1.msra.mxu0 0.0
  %3039 = vmatprep.subr.mxu0 0.0
  %3040 = vmatpush1.msra.mxu0 0.0
  %3041 = vmatprep.subr.mxu0 0.0
  %3042 = vmatpush1.msra.mxu0 0.0
  %3043 = vmatprep.subr.mxu0 0.0
  %3044 = vmatpush1.msra.mxu0 0.0
  %3045 = vmatprep.subr.mxu0 0.0
  %3046 = vmatpush1.msra.mxu0 0.0
  %3047 = vmatprep.subr.mxu0 0.0
  %3048 = vmatpush1.msra.mxu0 0.0
  %3049 = vmatprep.mubr.f32.mxu0 0.0
  %3050 = vmatmul.mubr.f32.gmra.mrb[0].mxu0 %v2979
  %v3051 = vpop.f32.mrb[0].mxu0
  %v3052 = vadd.f32 0.0, %v3051
  %v3053 = vpop.f32.mrb[0].mxu0
  %v3054 = vadd.f32 0.0, %v3053
  %3055 = vdwg.mxu0
  %3056 = vmatprep.subr.mxu0 %v1931
  %3057 = vmatpush1.msra.mxu0 %v1930
  %3058 = vmatprep.subr.mxu0 %v1935
  %3059 = vmatpush1.msra.mxu0 %v1934
  %3060 = vmatprep.subr.mxu0 %v1939
  %3061 = vmatpush1.msra.mxu0 %v1938
  %3062 = vmatprep.subr.mxu0 %v1943
  %3063 = vmatpush1.msra.mxu0 %v1942
  %3064 = vmatprep.subr.mxu0 %v1947
  %3065 = vmatpush1.msra.mxu0 %v1946
  %3066 = vmatprep.subr.mxu0 %v1951
  %3067 = vmatpush1.msra.mxu0 %v1950
  %3068 = vmatprep.subr.mxu0 %v1955
  %3069 = vmatpush1.msra.mxu0 %v1954
  %3070 = vmatprep.subr.mxu0 %v1959
  %3071 = vmatpush1.msra.mxu0 %v1958
  %3072 = vmatprep.subr.mxu0 %v1963
  %3073 = vmatpush1.msra.mxu0 %v1962
  %3074 = vmatprep.subr.mxu0 %v1967
  %3075 = vmatpush1.msra.mxu0 %v1966
  %3076 = vmatprep.subr.mxu0 %v1971
  %3077 = vmatpush1.msra.mxu0 %v1970
  %3078 = vmatprep.subr.mxu0 %v1975
  %3079 = vmatpush1.msra.mxu0 %v1974
  %3080 = vmatprep.subr.mxu0 %v1979
  %3081 = vmatpush1.msra.mxu0 %v1978
  %3082 = vmatprep.subr.mxu0 %v1983
  %3083 = vmatpush1.msra.mxu0 %v1982
  %3084 = vmatprep.subr.mxu0 %v1987
  %3085 = vmatpush1.msra.mxu0 %v1986
  %3086 = vmatprep.subr.mxu0 %v1991
  %3087 = vmatpush1.msra.mxu0 %v1990
  %3088 = vmatprep.subr.mxu0 0.0
  %3089 = vmatpush1.msra.mxu0 0.0
  %3090 = vmatprep.subr.mxu0 0.0
  %3091 = vmatpush1.msra.mxu0 0.0
  %3092 = vmatprep.subr.mxu0 0.0
  %3093 = vmatpush1.msra.mxu0 0.0
  %3094 = vmatprep.subr.mxu0 0.0
  %3095 = vmatpush1.msra.mxu0 0.0
  %3096 = vmatprep.subr.mxu0 0.0
  %3097 = vmatpush1.msra.mxu0 0.0
  %3098 = vmatprep.subr.mxu0 0.0
  %3099 = vmatpush1.msra.mxu0 0.0
  %3100 = vmatprep.subr.mxu0 0.0
  %3101 = vmatpush1.msra.mxu0 0.0
  %3102 = vmatprep.subr.mxu0 0.0
  %3103 = vmatpush1.msra.mxu0 0.0
  %3104 = vmatprep.subr.mxu0 0.0
  %3105 = vmatpush1.msra.mxu0 0.0
  %3106 = vmatprep.subr.mxu0 0.0
  %3107 = vmatpush1.msra.mxu0 0.0
  %3108 = vmatprep.subr.mxu0 0.0
  %3109 = vmatpush1.msra.mxu0 0.0
  %3110 = vmatprep.subr.mxu0 0.0
  %3111 = vmatpush1.msra.mxu0 0.0
  %3112 = vmatprep.subr.mxu0 0.0
  %3113 = vmatpush1.msra.mxu0 0.0
  %3114 = vmatprep.subr.mxu0 0.0
  %3115 = vmatpush1.msra.mxu0 0.0
  %3116 = vmatprep.subr.mxu0 0.0
  %3117 = vmatpush1.msra.mxu0 0.0
  %3118 = vmatprep.subr.mxu0 0.0
  %3119 = vmatpush1.msra.mxu0 0.0
  %3120 = vmatprep.mubr.f32.mxu0 0.0
  %3121 = vmatmul.mubr.f32.gmra.mrb[0].mxu0 %v2979
  %v3122 = vpop.f32.mrb[0].mxu0
  %v3123 = vadd.f32 0.0, %v3122
  %v3124 = vpop.f32.mrb[0].mxu0
  %v3125 = vadd.f32 0.0, %v3124
  %3126 = vdwg.mxu0
  %v3127 = vadd.f32 %v2981, %v3052
  %v3128 = vadd.f32 %v2982, %v3054
  %v3129 = vadd.f32 %v2983, %v3123
  %v3130 = vadd.f32 %v2984, %v3125
  %v3131 = vxor.u32 %v3127, 2147483648
  %v3132 = vmul.f32 %v3131, 1.442695
  %v3133 = vpow.pop %v3132
  %v3134 = vadd.f32 %v3133, 1.0
  %v3135 = vrcp.pop %v3134
  %v3136 = vmul.f32 1.0, %v3135
  %v3137 = vxor.u32 %v3128, 2147483648
  %v3138 = vmul.f32 %v3137, 1.442695
  %v3139 = vpow.pop %v3138
  %v3140 = vadd.f32 %v3139, 1.0
  %v3141 = vrcp.pop %v3140
  %v3142 = vmul.f32 1.0, %v3141
  %v3143 = vtanh.pop %v3129
  %v3144 = vxor.u32 %v3130, 2147483648
  %v3145 = vmul.f32 %v3144, 1.442695
  %v3146 = vpow.pop %v3145
  %v3147 = vadd.f32 %v3146, 1.0
  %v3148 = vrcp.pop %v3147
  %v3149 = vmul.f32 1.0, %v3148
  %v3150 = vmul.f32 %v3142, %v2977
  %v3151 = vmul.f32 %v3136, %v3143
  %v3152 = vadd.f32 %v3150, %v3151
  %v3153 = vtanh.pop %v3152
  %v3154 = vmul.f32 %v3149, %v3153
  %3155 = vst [vmem:[%s1329] sm:$0xff] %v3154
  %v3156 = vld [vmem:[%s1331] sm:$0xff]
  %v3157 = vld [vmem:[%s1331 + $0x8] sm:$0xff]
  %v3158 = vld [vmem:[%s1331 + $0x10] sm:$0xff]
  %v3159 = vld [vmem:[%s1331 + $0x18] sm:$0xff]
  %3160 = vmatprep.subr.mxu0 %v1929
  %3161 = vmatpush1.msra.mxu0 %v1928
  %3162 = vmatprep.subr.mxu0 %v1933
  %3163 = vmatpush1.msra.mxu0 %v1932
  %3164 = vmatprep.subr.mxu0 %v1937
  %3165 = vmatpush1.msra.mxu0 %v1936
  %3166 = vmatprep.subr.mxu0 %v1941
  %3167 = vmatpush1.msra.mxu0 %v1940
  %3168 = vmatprep.subr.mxu0 %v1945
  %3169 = vmatpush1.msra.mxu0 %v1944
  %3170 = vmatprep.subr.mxu0 %v1949
  %3171 = vmatpush1.msra.mxu0 %v1948
  %3172 = vmatprep.subr.mxu0 %v1953
  %3173 = vmatpush1.msra.mxu0 %v1952
  %3174 = vmatprep.subr.mxu0 %v1957
  %3175 = vmatpush1.msra.mxu0 %v1956
  %3176 = vmatprep.subr.mxu0 %v1961
  %3177 = vmatpush1.msra.mxu0 %v1960
  %3178 = vmatprep.subr.mxu0 %v1965
  %3179 = vmatpush1.msra.mxu0 %v1964
  %3180 = vmatprep.subr.mxu0 %v1969
  %3181 = vmatpush1.msra.mxu0 %v1968
  %3182 = vmatprep.subr.mxu0 %v1973
  %3183 = vmatpush1.msra.mxu0 %v1972
  %3184 = vmatprep.subr.mxu0 %v1977
  %3185 = vmatpush1.msra.mxu0 %v1976
  %3186 = vmatprep.subr.mxu0 %v1981
  %3187 = vmatpush1.msra.mxu0 %v1980
  %3188 = vmatprep.subr.mxu0 %v1985
  %3189 = vmatpush1.msra.mxu0 %v1984
  %3190 = vmatprep.subr.mxu0 %v1989
  %3191 = vmatpush1.msra.mxu0 %v1988
  %3192 = vmatprep.subr.mxu0 0.0
  %3193 = vmatpush1.msra.mxu0 0.0
  %3194 = vmatprep.subr.mxu0 0.0
  %3195 = vmatpush1.msra.mxu0 0.0
  %3196 = vmatprep.subr.mxu0 0.0
  %3197 = vmatpush1.msra.mxu0 0.0
  %3198 = vmatprep.subr.mxu0 0.0
  %3199 = vmatpush1.msra.mxu0 0.0
  %3200 = vmatprep.subr.mxu0 0.0
  %3201 = vmatpush1.msra.mxu0 0.0
  %3202 = vmatprep.subr.mxu0 0.0
  %3203 = vmatpush1.msra.mxu0 0.0
  %3204 = vmatprep.subr.mxu0 0.0
  %3205 = vmatpush1.msra.mxu0 0.0
  %3206 = vmatprep.subr.mxu0 0.0
  %3207 = vmatpush1.msra.mxu0 0.0
  %3208 = vmatprep.subr.mxu0 0.0
  %3209 = vmatpush1.msra.mxu0 0.0
  %3210 = vmatprep.subr.mxu0 0.0
  %3211 = vmatpush1.msra.mxu0 0.0
  %3212 = vmatprep.subr.mxu0 0.0
  %3213 = vmatpush1.msra.mxu0 0.0
  %3214 = vmatprep.subr.mxu0 0.0
  %3215 = vmatpush1.msra.mxu0 0.0
  %3216 = vmatprep.subr.mxu0 0.0
  %3217 = vmatpush1.msra.mxu0 0.0
  %3218 = vmatprep.subr.mxu0 0.0
  %3219 = vmatpush1.msra.mxu0 0.0
  %3220 = vmatprep.subr.mxu0 0.0
  %3221 = vmatpush1.msra.mxu0 0.0
  %3222 = vmatprep.subr.mxu0 0.0
  %3223 = vmatpush1.msra.mxu0 0.0
  %3224 = vmatprep.mubr.f32.mxu0 0.0
  %3225 = vmatmul.mubr.f32.gmra.mrb[0].mxu0 %v3154
  %v3226 = vpop.f32.mrb[0].mxu0
  %v3227 = vadd.f32 0.0, %v3226
  %v3228 = vpop.f32.mrb[0].mxu0
  %v3229 = vadd.f32 0.0, %v3228
  %3230 = vdwg.mxu0
  %3231 = vmatprep.subr.mxu0 %v1931
  %3232 = vmatpush1.msra.mxu0 %v1930
  %3233 = vmatprep.subr.mxu0 %v1935
  %3234 = vmatpush1.msra.mxu0 %v1934
  %3235 = vmatprep.subr.mxu0 %v1939
  %3236 = vmatpush1.msra.mxu0 %v1938
  %3237 = vmatprep.subr.mxu0 %v1943
  %3238 = vmatpush1.msra.mxu0 %v1942
  %3239 = vmatprep.subr.mxu0 %v1947
  %3240 = vmatpush1.msra.mxu0 %v1946
  %3241 = vmatprep.subr.mxu0 %v1951
  %3242 = vmatpush1.msra.mxu0 %v1950
  %3243 = vmatprep.subr.mxu0 %v1955
  %3244 = vmatpush1.msra.mxu0 %v1954
  %3245 = vmatprep.subr.mxu0 %v1959
  %3246 = vmatpush1.msra.mxu0 %v1958
  %3247 = vmatprep.subr.mxu0 %v1963
  %3248 = vmatpush1.msra.mxu0 %v1962
  %3249 = vmatprep.subr.mxu0 %v1967
  %3250 = vmatpush1.msra.mxu0 %v1966
  %3251 = vmatprep.subr.mxu0 %v1971
  %3252 = vmatpush1.msra.mxu0 %v1970
  %3253 = vmatprep.subr.mxu0 %v1975
  %3254 = vmatpush1.msra.mxu0 %v1974
  %3255 = vmatprep.subr.mxu0 %v1979
  %3256 = vmatpush1.msra.mxu0 %v1978
  %3257 = vmatprep.subr.mxu0 %v1983
  %3258 = vmatpush1.msra.mxu0 %v1982
  %3259 = vmatprep.subr.mxu0 %v1987
  %3260 = vmatpush1.msra.mxu0 %v1986
  %3261 = vmatprep.subr.mxu0 %v1991
  %3262 = vmatpush1.msra.mxu0 %v1990
  %3263 = vmatprep.subr.mxu0 0.0
  %3264 = vmatpush1.msra.mxu0 0.0
  %3265 = vmatprep.subr.mxu0 0.0
  %3266 = vmatpush1.msra.mxu0 0.0
  %3267 = vmatprep.subr.mxu0 0.0
  %3268 = vmatpush1.msra.mxu0 0.0
  %3269 = vmatprep.subr.mxu0 0.0
  %3270 = vmatpush1.msra.mxu0 0.0
  %3271 = vmatprep.subr.mxu0 0.0
  %3272 = vmatpush1.msra.mxu0 0.0
  %3273 = vmatprep.subr.mxu0 0.0
  %3274 = vmatpush1.msra.mxu0 0.0
  %3275 = vmatprep.subr.mxu0 0.0
  %3276 = vmatpush1.msra.mxu0 0.0
  %3277 = vmatprep.subr.mxu0 0.0
  %3278 = vmatpush1.msra.mxu0 0.0
  %3279 = vmatprep.subr.mxu0 0.0
  %3280 = vmatpush1.msra.mxu0 0.0
  %3281 = vmatprep.subr.mxu0 0.0
  %3282 = vmatpush1.msra.mxu0 0.0
  %3283 = vmatprep.subr.mxu0 0.0
  %3284 = vmatpush1.msra.mxu0 0.0
  %3285 = vmatprep.subr.mxu0 0.0
  %3286 = vmatpush1.msra.mxu0 0.0
  %3287 = vmatprep.subr.mxu0 0.0
  %3288 = vmatpush1.msra.mxu0 0.0
  %3289 = vmatprep.subr.mxu0 0.0
  %3290 = vmatpush1.msra.mxu0 0.0
  %3291 = vmatprep.subr.mxu0 0.0
  %3292 = vmatpush1.msra.mxu0 0.0
  %3293 = vmatprep.subr.mxu0 0.0
  %3294 = vmatpush1.msra.mxu0 0.0
  %3295 = vmatprep.mubr.f32.mxu0 0.0
  %3296 = vmatmul.mubr.f32.gmra.mrb[0].mxu0 %v3154
  %v3297 = vpop.f32.mrb[0].mxu0
  %v3298 = vadd.f32 0.0, %v3297
  %v3299 = vpop.f32.mrb[0].mxu0
  %v3300 = vadd.f32 0.0, %v3299
  %3301 = vdwg.mxu0
  %v3302 = vadd.f32 %v3156, %v3227
  %v3303 = vadd.f32 %v3157, %v3229
  %v3304 = vadd.f32 %v3158, %v3298
  %v3305 = vadd.f32 %v3159, %v3300
  %v3306 = vxor.u32 %v3302, 2147483648
  %v3307 = vmul.f32 %v3306, 1.442695
  %v3308 = vpow.pop %v3307
  %v3309 = vadd.f32 %v3308, 1.0
  %v3310 = vrcp.pop %v3309
  %v3311 = vmul.f32 1.0, %v3310
  %v3312 = vxor.u32 %v3303, 2147483648
  %v3313 = vmul.f32 %v3312, 1.442695
  %v3314 = vpow.pop %v3313
  %v3315 = vadd.f32 %v3314, 1.0
  %v3316 = vrcp.pop %v3315
  %v3317 = vmul.f32 1.0, %v3316
  %v3318 = vtanh.pop %v3304
  %v3319 = vxor.u32 %v3305, 2147483648
  %v3320 = vmul.f32 %v3319, 1.442695
  %v3321 = vpow.pop %v3320
  %v3322 = vadd.f32 %v3321, 1.0
  %v3323 = vrcp.pop %v3322
  %v3324 = vmul.f32 1.0, %v3323
  %v3325 = vmul.f32 %v3317, %v3152
  %v3326 = vmul.f32 %v3311, %v3318
  %v3327 = vadd.f32 %v3325, %v3326
  %v3328 = vtanh.pop %v3327
  %v3329 = vmul.f32 %v3324, %v3328
  %3330 = vst [vmem:[%s1506] sm:$0xff] %v3329
  %v3331 = vld [vmem:[%s1508] sm:$0xff]
  %v3332 = vld [vmem:[%s1508 + $0x8] sm:$0xff]
  %v3333 = vld [vmem:[%s1508 + $0x10] sm:$0xff]
  %v3334 = vld [vmem:[%s1508 + $0x18] sm:$0xff]
  %3335 = vmatprep.subr.mxu0 %v1929
  %3336 = vmatpush1.msra.mxu0 %v1928
  %3337 = vmatprep.subr.mxu0 %v1933
  %3338 = vmatpush1.msra.mxu0 %v1932
  %3339 = vmatprep.subr.mxu0 %v1937
  %3340 = vmatpush1.msra.mxu0 %v1936
  %3341 = vmatprep.subr.mxu0 %v1941
  %3342 = vmatpush1.msra.mxu0 %v1940
  %3343 = vmatprep.subr.mxu0 %v1945
  %3344 = vmatpush1.msra.mxu0 %v1944
  %3345 = vmatprep.subr.mxu0 %v1949
  %3346 = vmatpush1.msra.mxu0 %v1948
  %3347 = vmatprep.subr.mxu0 %v1953
  %3348 = vmatpush1.msra.mxu0 %v1952
  %3349 = vmatprep.subr.mxu0 %v1957
  %3350 = vmatpush1.msra.mxu0 %v1956
  %3351 = vmatprep.subr.mxu0 %v1961
  %3352 = vmatpush1.msra.mxu0 %v1960
  %3353 = vmatprep.subr.mxu0 %v1965
  %3354 = vmatpush1.msra.mxu0 %v1964
  %3355 = vmatprep.subr.mxu0 %v1969
  %3356 = vmatpush1.msra.mxu0 %v1968
  %3357 = vmatprep.subr.mxu0 %v1973
  %3358 = vmatpush1.msra.mxu0 %v1972
  %3359 = vmatprep.subr.mxu0 %v1977
  %3360 = vmatpush1.msra.mxu0 %v1976
  %3361 = vmatprep.subr.mxu0 %v1981
  %3362 = vmatpush1.msra.mxu0 %v1980
  %3363 = vmatprep.subr.mxu0 %v1985
  %3364 = vmatpush1.msra.mxu0 %v1984
  %3365 = vmatprep.subr.mxu0 %v1989
  %3366 = vmatpush1.msra.mxu0 %v1988
  %3367 = vmatprep.subr.mxu0 0.0
  %3368 = vmatpush1.msra.mxu0 0.0
  %3369 = vmatprep.subr.mxu0 0.0
  %3370 = vmatpush1.msra.mxu0 0.0
  %3371 = vmatprep.subr.mxu0 0.0
  %3372 = vmatpush1.msra.mxu0 0.0
  %3373 = vmatprep.subr.mxu0 0.0
  %3374 = vmatpush1.msra.mxu0 0.0
  %3375 = vmatprep.subr.mxu0 0.0
  %3376 = vmatpush1.msra.mxu0 0.0
  %3377 = vmatprep.subr.mxu0 0.0
  %3378 = vmatpush1.msra.mxu0 0.0
  %3379 = vmatprep.subr.mxu0 0.0
  %3380 = vmatpush1.msra.mxu0 0.0
  %3381 = vmatprep.subr.mxu0 0.0
  %3382 = vmatpush1.msra.mxu0 0.0
  %3383 = vmatprep.subr.mxu0 0.0
  %3384 = vmatpush1.msra.mxu0 0.0
  %3385 = vmatprep.subr.mxu0 0.0
  %3386 = vmatpush1.msra.mxu0 0.0
  %3387 = vmatprep.subr.mxu0 0.0
  %3388 = vmatpush1.msra.mxu0 0.0
  %3389 = vmatprep.subr.mxu0 0.0
  %3390 = vmatpush1.msra.mxu0 0.0
  %3391 = vmatprep.subr.mxu0 0.0
  %3392 = vmatpush1.msra.mxu0 0.0
  %3393 = vmatprep.subr.mxu0 0.0
  %3394 = vmatpush1.msra.mxu0 0.0
  %3395 = vmatprep.subr.mxu0 0.0
  %3396 = vmatpush1.msra.mxu0 0.0
  %3397 = vmatprep.subr.mxu0 0.0
  %3398 = vmatpush1.msra.mxu0 0.0
  %3399 = vmatprep.mubr.f32.mxu0 0.0
  %3400 = vmatmul.mubr.f32.gmra.mrb[0].mxu0 %v3329
  %v3401 = vpop.f32.mrb[0].mxu0
  %v3402 = vadd.f32 0.0, %v3401
  %v3403 = vpop.f32.mrb[0].mxu0
  %v3404 = vadd.f32 0.0, %v3403
  %3405 = vdwg.mxu0
  %3406 = vmatprep.subr.mxu0 %v1931
  %3407 = vmatpush1.msra.mxu0 %v1930
  %3408 = vmatprep.subr.mxu0 %v1935
  %3409 = vmatpush1.msra.mxu0 %v1934
  %3410 = vmatprep.subr.mxu0 %v1939
  %3411 = vmatpush1.msra.mxu0 %v1938
  %3412 = vmatprep.subr.mxu0 %v1943
  %3413 = vmatpush1.msra.mxu0 %v1942
  %3414 = vmatprep.subr.mxu0 %v1947
  %3415 = vmatpush1.msra.mxu0 %v1946
  %3416 = vmatprep.subr.mxu0 %v1951
  %3417 = vmatpush1.msra.mxu0 %v1950
  %3418 = vmatprep.subr.mxu0 %v1955
  %3419 = vmatpush1.msra.mxu0 %v1954
  %3420 = vmatprep.subr.mxu0 %v1959
  %3421 = vmatpush1.msra.mxu0 %v1958
  %3422 = vmatprep.subr.mxu0 %v1963
  %3423 = vmatpush1.msra.mxu0 %v1962
  %3424 = vmatprep.subr.mxu0 %v1967
  %3425 = vmatpush1.msra.mxu0 %v1966
  %3426 = vmatprep.subr.mxu0 %v1971
  %3427 = vmatpush1.msra.mxu0 %v1970
  %3428 = vmatprep.subr.mxu0 %v1975
  %3429 = vmatpush1.msra.mxu0 %v1974
  %3430 = vmatprep.subr.mxu0 %v1979
  %3431 = vmatpush1.msra.mxu0 %v1978
  %3432 = vmatprep.subr.mxu0 %v1983
  %3433 = vmatpush1.msra.mxu0 %v1982
  %3434 = vmatprep.subr.mxu0 %v1987
  %3435 = vmatpush1.msra.mxu0 %v1986
  %3436 = vmatprep.subr.mxu0 %v1991
  %3437 = vmatpush1.msra.mxu0 %v1990
  %3438 = vmatprep.subr.mxu0 0.0
  %3439 = vmatpush1.msra.mxu0 0.0
  %3440 = vmatprep.subr.mxu0 0.0
  %3441 = vmatpush1.msra.mxu0 0.0
  %3442 = vmatprep.subr.mxu0 0.0
  %3443 = vmatpush1.msra.mxu0 0.0
  %3444 = vmatprep.subr.mxu0 0.0
  %3445 = vmatpush1.msra.mxu0 0.0
  %3446 = vmatprep.subr.mxu0 0.0
  %3447 = vmatpush1.msra.mxu0 0.0
  %3448 = vmatprep.subr.mxu0 0.0
  %3449 = vmatpush1.msra.mxu0 0.0
  %3450 = vmatprep.subr.mxu0 0.0
  %3451 = vmatpush1.msra.mxu0 0.0
  %3452 = vmatprep.subr.mxu0 0.0
  %3453 = vmatpush1.msra.mxu0 0.0
  %3454 = vmatprep.subr.mxu0 0.0
  %3455 = vmatpush1.msra.mxu0 0.0
  %3456 = vmatprep.subr.mxu0 0.0
  %3457 = vmatpush1.msra.mxu0 0.0
  %3458 = vmatprep.subr.mxu0 0.0
  %3459 = vmatpush1.msra.mxu0 0.0
  %3460 = vmatprep.subr.mxu0 0.0
  %3461 = vmatpush1.msra.mxu0 0.0
  %3462 = vmatprep.subr.mxu0 0.0
  %3463 = vmatpush1.msra.mxu0 0.0
  %3464 = vmatprep.subr.mxu0 0.0
  %3465 = vmatpush1.msra.mxu0 0.0
  %3466 = vmatprep.subr.mxu0 0.0
  %3467 = vmatpush1.msra.mxu0 0.0
  %3468 = vmatprep.subr.mxu0 0.0
  %3469 = vmatpush1.msra.mxu0 0.0
  %3470 = vmatprep.mubr.f32.mxu0 0.0
  %3471 = vmatmul.mubr.f32.gmra.mrb[0].mxu0 %v3329
  %v3472 = vpop.f32.mrb[0].mxu0
  %v3473 = vadd.f32 0.0, %v3472
  %v3474 = vpop.f32.mrb[0].mxu0
  %v3475 = vadd.f32 0.0, %v3474
  %3476 = vdwg.mxu0
  %v3477 = vadd.f32 %v3331, %v3402
  %v3478 = vadd.f32 %v3332, %v3404
  %v3479 = vadd.f32 %v3333, %v3473
  %v3480 = vadd.f32 %v3334, %v3475
  %v3481 = vxor.u32 %v3477, 2147483648
  %v3482 = vmul.f32 %v3481, 1.442695
  %v3483 = vpow.pop %v3482
  %v3484 = vadd.f32 %v3483, 1.0
  %v3485 = vrcp.pop %v3484
  %v3486 = vmul.f32 1.0, %v3485
  %v3487 = vxor.u32 %v3478, 2147483648
  %v3488 = vmul.f32 %v3487, 1.442695
  %v3489 = vpow.pop %v3488
  %v3490 = vadd.f32 %v3489, 1.0
  %v3491 = vrcp.pop %v3490
  %v3492 = vmul.f32 1.0, %v3491
  %v3493 = vtanh.pop %v3479
  %v3494 = vxor.u32 %v3480, 2147483648
  %v3495 = vmul.f32 %v3494, 1.442695
  %v3496 = vpow.pop %v3495
  %v3497 = vadd.f32 %v3496, 1.0
  %v3498 = vrcp.pop %v3497
  %v3499 = vmul.f32 1.0, %v3498
  %v3500 = vmul.f32 %v3492, %v3327
  %v3501 = vmul.f32 %v3486, %v3493
  %v3502 = vadd.f32 %v3500, %v3501
  %v3503 = vtanh.pop %v3502
  %v3504 = vmul.f32 %v3499, %v3503
  %3505 = vst [vmem:[%s1683] sm:$0xff] %v3504
  %v3506 = vld [vmem:[%s1685] sm:$0xff]
  %v3507 = vld [vmem:[%s1685 + $0x8] sm:$0xff]
  %v3508 = vld [vmem:[%s1685 + $0x10] sm:$0xff]
  %v3509 = vld [vmem:[%s1685 + $0x18] sm:$0xff]
  %3510 = vmatprep.subr.mxu0 %v1929
  %3511 = vmatpush1.msra.mxu0 %v1928
  %3512 = vmatprep.subr.mxu0 %v1933
  %3513 = vmatpush1.msra.mxu0 %v1932
  %3514 = vmatprep.subr.mxu0 %v1937
  %3515 = vmatpush1.msra.mxu0 %v1936
  %3516 = vmatprep.subr.mxu0 %v1941
  %3517 = vmatpush1.msra.mxu0 %v1940
  %3518 = vmatprep.subr.mxu0 %v1945
  %3519 = vmatpush1.msra.mxu0 %v1944
  %3520 = vmatprep.subr.mxu0 %v1949
  %3521 = vmatpush1.msra.mxu0 %v1948
  %3522 = vmatprep.subr.mxu0 %v1953
  %3523 = vmatpush1.msra.mxu0 %v1952
  %3524 = vmatprep.subr.mxu0 %v1957
  %3525 = vmatpush1.msra.mxu0 %v1956
  %3526 = vmatprep.subr.mxu0 %v1961
  %3527 = vmatpush1.msra.mxu0 %v1960
  %3528 = vmatprep.subr.mxu0 %v1965
  %3529 = vmatpush1.msra.mxu0 %v1964
  %3530 = vmatprep.subr.mxu0 %v1969
  %3531 = vmatpush1.msra.mxu0 %v1968
  %3532 = vmatprep.subr.mxu0 %v1973
  %3533 = vmatpush1.msra.mxu0 %v1972
  %3534 = vmatprep.subr.mxu0 %v1977
  %3535 = vmatpush1.msra.mxu0 %v1976
  %3536 = vmatprep.subr.mxu0 %v1981
  %3537 = vmatpush1.msra.mxu0 %v1980
  %3538 = vmatprep.subr.mxu0 %v1985
  %3539 = vmatpush1.msra.mxu0 %v1984
  %3540 = vmatprep.subr.mxu0 %v1989
  %3541 = vmatpush1.msra.mxu0 %v1988
  %3542 = vmatprep.subr.mxu0 0.0
  %3543 = vmatpush1.msra.mxu0 0.0
  %3544 = vmatprep.subr.mxu0 0.0
  %3545 = vmatpush1.msra.mxu0 0.0
  %3546 = vmatprep.subr.mxu0 0.0
  %3547 = vmatpush1.msra.mxu0 0.0
  %3548 = vmatprep.subr.mxu0 0.0
  %3549 = vmatpush1.msra.mxu0 0.0
  %3550 = vmatprep.subr.mxu0 0.0
  %3551 = vmatpush1.msra.mxu0 0.0
  %3552 = vmatprep.subr.mxu0 0.0
  %3553 = vmatpush1.msra.mxu0 0.0
  %3554 = vmatprep.subr.mxu0 0.0
  %3555 = vmatpush1.msra.mxu0 0.0
  %3556 = vmatprep.subr.mxu0 0.0
  %3557 = vmatpush1.msra.mxu0 0.0
  %3558 = vmatprep.subr.mxu0 0.0
  %3559 = vmatpush1.msra.mxu0 0.0
  %3560 = vmatprep.subr.mxu0 0.0
  %3561 = vmatpush1.msra.mxu0 0.0
  %3562 = vmatprep.subr.mxu0 0.0
  %3563 = vmatpush1.msra.mxu0 0.0
  %3564 = vmatprep.subr.mxu0 0.0
  %3565 = vmatpush1.msra.mxu0 0.0
  %3566 = vmatprep.subr.mxu0 0.0
  %3567 = vmatpush1.msra.mxu0 0.0
  %3568 = vmatprep.subr.mxu0 0.0
  %3569 = vmatpush1.msra.mxu0 0.0
  %3570 = vmatprep.subr.mxu0 0.0
  %3571 = vmatpush1.msra.mxu0 0.0
  %3572 = vmatprep.subr.mxu0 0.0
  %3573 = vmatpush1.msra.mxu0 0.0
  %3574 = vmatprep.mubr.f32.mxu0 0.0
  %3575 = vmatmul.mubr.f32.gmra.mrb[0].mxu0 %v3504
  %v3576 = vpop.f32.mrb[0].mxu0
  %v3577 = vadd.f32 0.0, %v3576
  %v3578 = vpop.f32.mrb[0].mxu0
  %v3579 = vadd.f32 0.0, %v3578
  %3580 = vdwg.mxu0
  %3581 = vmatprep.subr.mxu0 %v1931
  %3582 = vmatpush1.msra.mxu0 %v1930
  %3583 = vmatprep.subr.mxu0 %v1935
  %3584 = vmatpush1.msra.mxu0 %v1934
  %3585 = vmatprep.subr.mxu0 %v1939
  %3586 = vmatpush1.msra.mxu0 %v1938
  %3587 = vmatprep.subr.mxu0 %v1943
  %3588 = vmatpush1.msra.mxu0 %v1942
  %3589 = vmatprep.subr.mxu0 %v1947
  %3590 = vmatpush1.msra.mxu0 %v1946
  %3591 = vmatprep.subr.mxu0 %v1951
  %3592 = vmatpush1.msra.mxu0 %v1950
  %3593 = vmatprep.subr.mxu0 %v1955
  %3594 = vmatpush1.msra.mxu0 %v1954
  %3595 = vmatprep.subr.mxu0 %v1959
  %3596 = vmatpush1.msra.mxu0 %v1958
  %3597 = vmatprep.subr.mxu0 %v1963
  %3598 = vmatpush1.msra.mxu0 %v1962
  %3599 = vmatprep.subr.mxu0 %v1967
  %3600 = vmatpush1.msra.mxu0 %v1966
  %3601 = vmatprep.subr.mxu0 %v1971
  %3602 = vmatpush1.msra.mxu0 %v1970
  %3603 = vmatprep.subr.mxu0 %v1975
  %3604 = vmatpush1.msra.mxu0 %v1974
  %3605 = vmatprep.subr.mxu0 %v1979
  %3606 = vmatpush1.msra.mxu0 %v1978
  %3607 = vmatprep.subr.mxu0 %v1983
  %3608 = vmatpush1.msra.mxu0 %v1982
  %3609 = vmatprep.subr.mxu0 %v1987
  %3610 = vmatpush1.msra.mxu0 %v1986
  %3611 = vmatprep.subr.mxu0 %v1991
  %3612 = vmatpush1.msra.mxu0 %v1990
  %3613 = vmatprep.subr.mxu0 0.0
  %3614 = vmatpush1.msra.mxu0 0.0
  %3615 = vmatprep.subr.mxu0 0.0
  %3616 = vmatpush1.msra.mxu0 0.0
  %3617 = vmatprep.subr.mxu0 0.0
  %3618 = vmatpush1.msra.mxu0 0.0
  %3619 = vmatprep.subr.mxu0 0.0
  %3620 = vmatpush1.msra.mxu0 0.0
  %3621 = vmatprep.subr.mxu0 0.0
  %3622 = vmatpush1.msra.mxu0 0.0
  %3623 = vmatprep.subr.mxu0 0.0
  %3624 = vmatpush1.msra.mxu0 0.0
  %3625 = vmatprep.subr.mxu0 0.0
  %3626 = vmatpush1.msra.mxu0 0.0
  %3627 = vmatprep.subr.mxu0 0.0
  %3628 = vmatpush1.msra.mxu0 0.0
  %3629 = vmatprep.subr.mxu0 0.0
  %3630 = vmatpush1.msra.mxu0 0.0
  %3631 = vmatprep.subr.mxu0 0.0
  %3632 = vmatpush1.msra.mxu0 0.0
  %3633 = vmatprep.subr.mxu0 0.0
  %3634 = vmatpush1.msra.mxu0 0.0
  %3635 = vmatprep.subr.mxu0 0.0
  %3636 = vmatpush1.msra.mxu0 0.0
  %3637 = vmatprep.subr.mxu0 0.0
  %3638 = vmatpush1.msra.mxu0 0.0
  %3639 = vmatprep.subr.mxu0 0.0
  %3640 = vmatpush1.msra.mxu0 0.0
  %3641 = vmatprep.subr.mxu0 0.0
  %3642 = vmatpush1.msra.mxu0 0.0
  %3643 = vmatprep.subr.mxu0 0.0
  %3644 = vmatpush1.msra.mxu0 0.0
  %3645 = vmatprep.mubr.f32.mxu0 0.0
  %3646 = vmatmul.mubr.f32.gmra.mrb[0].mxu0 %v3504
  %v3647 = vpop.f32.mrb[0].mxu0
  %v3648 = vadd.f32 0.0, %v3647
  %v3649 = vpop.f32.mrb[0].mxu0
  %v3650 = vadd.f32 0.0, %v3649
  %3651 = vdwg.mxu0
  %v3652 = vadd.f32 %v3506, %v3577
  %v3653 = vadd.f32 %v3507, %v3579
  %v3654 = vadd.f32 %v3508, %v3648
  %v3655 = vadd.f32 %v3509, %v3650
  %v3656 = vxor.u32 %v3652, 2147483648
  %v3657 = vmul.f32 %v3656, 1.442695
  %v3658 = vpow.pop %v3657
  %v3659 = vadd.f32 %v3658, 1.0
  %v3660 = vrcp.pop %v3659
  %v3661 = vmul.f32 1.0, %v3660
  %v3662 = vxor.u32 %v3653, 2147483648
  %v3663 = vmul.f32 %v3662, 1.442695
  %v3664 = vpow.pop %v3663
  %v3665 = vadd.f32 %v3664, 1.0
  %v3666 = vrcp.pop %v3665
  %v3667 = vmul.f32 1.0, %v3666
  %v3668 = vtanh.pop %v3654
  %v3669 = vxor.u32 %v3655, 2147483648
  %v3670 = vmul.f32 %v3669, 1.442695
  %v3671 = vpow.pop %v3670
  %v3672 = vadd.f32 %v3671, 1.0
  %v3673 = vrcp.pop %v3672
  %v3674 = vmul.f32 1.0, %v3673
  %v3675 = vmul.f32 %v3667, %v3502
  %v3676 = vmul.f32 %v3661, %v3668
  %v3677 = vadd.f32 %v3675, %v3676
  %v3678 = vtanh.pop %v3677
  %v3679 = vmul.f32 %v3674, %v3678
  %3680 = vst [vmem:[%s1860] sm:$0xff] %v3679
  %v3681 = vld [vmem:[%s4] sm:$0xff]
  %v3682 = vld [vmem:[%s4 + $0x8] sm:$0xff]
  %v3683 = vld [vmem:[%s4 + $0x10] sm:$0xff]
  %v3684 = vld [vmem:[%s4 + $0x18] sm:$0xff]
  %v3685 = vld [vmem:[%s4 + $0x20] sm:$0xff]
  %v3686 = vld [vmem:[%s4 + $0x28] sm:$0xff]
  %v3687 = vld [vmem:[%s4 + $0x30] sm:$0xff]
  %v3688 = vld [vmem:[%s4 + $0x38] sm:$0xff]
  %v3689 = vld [vmem:[%s4 + $0x40] sm:$0xff]
  %v3690 = vld [vmem:[%s4 + $0x48] sm:$0xff]
  %v3691 = vld [vmem:[%s4 + $0x50] sm:$0xff]
  %v3692 = vld [vmem:[%s4 + $0x58] sm:$0xff]
  %v3693 = vld [vmem:[%s4 + $0x60] sm:$0xff]
  %v3694 = vld [vmem:[%s4 + $0x68] sm:$0xff]
  %v3695 = vld [vmem:[%s4 + $0x70] sm:$0xff]
  %v3696 = vld [vmem:[%s4 + $0x78] sm:$0xff]
  %v3697 = vld [vmem:[%s5] sm:$0x1]
  %v3698 = vld [vmem:[%s6] sm:$0x1]
  %v3699 = vld [vmem:[#allocation2] sm:$0xff]
  %v3700 = vld [vmem:[#allocation2 + $0x8] sm:$0xff]
  %v3701 = vld [vmem:[#allocation2 + $0x10] sm:$0xff]
  %v3702 = vld [vmem:[#allocation2 + $0x18] sm:$0xff]
  %v3703 = vld [vmem:[#allocation2 + $0x20] sm:$0xff]
  %v3704 = vld [vmem:[#allocation2 + $0x28] sm:$0xff]
  %v3705 = vld [vmem:[#allocation2 + $0x30] sm:$0xff]
  %v3706 = vld [vmem:[#allocation2 + $0x38] sm:$0xff]
  %v3708 = vlaneseq
  %v3709 = vshrl.u32 %v3708, 7
  %v3710 = vsub.s32 0, %v3709
  %v3711 = vrot.slane %v3697, %v3710
  %3713 = vmatprep.subr.mxu0 0.0
  %3714 = vmatpush1.msra.mxu0 %v3681
  %3715 = vmatprep.subr.mxu0 0.0
  %3716 = vmatpush1.msra.mxu0 %v3682
  %3717 = vmatprep.subr.mxu0 0.0
  %3718 = vmatpush1.msra.mxu0 %v3683
  %3719 = vmatprep.subr.mxu0 0.0
  %3720 = vmatpush1.msra.mxu0 %v3684
  %3721 = vmatprep.subr.mxu0 0.0
  %3722 = vmatpush1.msra.mxu0 %v3685
  %3723 = vmatprep.subr.mxu0 0.0
  %3724 = vmatpush1.msra.mxu0 %v3686
  %3725 = vmatprep.subr.mxu0 0.0
  %3726 = vmatpush1.msra.mxu0 %v3687
  %3727 = vmatprep.subr.mxu0 0.0
  %3728 = vmatpush1.msra.mxu0 %v3688
  %3729 = vmatprep.subr.mxu0 0.0
  %3730 = vmatpush1.msra.mxu0 %v3689
  %3731 = vmatprep.subr.mxu0 0.0
  %3732 = vmatpush1.msra.mxu0 %v3690
  %3733 = vmatprep.subr.mxu0 0.0
  %3734 = vmatpush1.msra.mxu0 %v3691
  %3735 = vmatprep.subr.mxu0 0.0
  %3736 = vmatpush1.msra.mxu0 %v3692
  %3737 = vmatprep.subr.mxu0 0.0
  %3738 = vmatpush1.msra.mxu0 %v3693
  %3739 = vmatprep.subr.mxu0 0.0
  %3740 = vmatpush1.msra.mxu0 %v3694
  %3741 = vmatprep.subr.mxu0 0.0
  %3742 = vmatpush1.msra.mxu0 %v3695
  %3743 = vmatprep.subr.mxu0 0.0
  %3744 = vmatpush1.msra.mxu0 %v3696
  %3745 = vmatprep.subr.mxu0 0.0
  %3746 = vmatpush1.msra.mxu0 0.0
  %3747 = vmatprep.subr.mxu0 0.0
  %3748 = vmatpush1.msra.mxu0 0.0
  %3749 = vmatprep.subr.mxu0 0.0
  %3750 = vmatpush1.msra.mxu0 0.0
  %3751 = vmatprep.subr.mxu0 0.0
  %3752 = vmatpush1.msra.mxu0 0.0
  %3753 = vmatprep.subr.mxu0 0.0
  %3754 = vmatpush1.msra.mxu0 0.0
  %3755 = vmatprep.subr.mxu0 0.0
  %3756 = vmatpush1.msra.mxu0 0.0
  %3757 = vmatprep.subr.mxu0 0.0
  %3758 = vmatpush1.msra.mxu0 0.0
  %3759 = vmatprep.subr.mxu0 0.0
  %3760 = vmatpush1.msra.mxu0 0.0
  %3761 = vmatprep.subr.mxu0 0.0
  %3762 = vmatpush1.msra.mxu0 0.0
  %3763 = vmatprep.subr.mxu0 0.0
  %3764 = vmatpush1.msra.mxu0 0.0
  %3765 = vmatprep.subr.mxu0 0.0
  %3766 = vmatpush1.msra.mxu0 0.0
  %3767 = vmatprep.subr.mxu0 0.0
  %3768 = vmatpush1.msra.mxu0 0.0
  %3769 = vmatprep.subr.mxu0 0.0
  %3770 = vmatpush1.msra.mxu0 0.0
  %3771 = vmatprep.subr.mxu0 0.0
  %3772 = vmatpush1.msra.mxu0 0.0
  %3773 = vmatprep.subr.mxu0 0.0
  %3774 = vmatpush1.msra.mxu0 0.0
  %3775 = vmatprep.subr.mxu0 0.0
  %3776 = vmatpush1.msra.mxu0 0.0
  %3777 = vmatprep.mubr.f32.mxu0 0.0
  %3778 = vmatmul.mubr.f32.gmra.mrb[0].mxu0 %v3699
  %v3779 = vpop.f32.mrb[0].mxu0
  %v3780 = vadd.f32 %v3711, %v3779
  %v3781 = vpop.f32.mrb[0].mxu0
  %3782 = vmatprep.mubr.f32.mxu0 0.0
  %3783 = vmatmul.mubr.f32.gmra.mrb[0].mxu0 %v3700
  %v3784 = vpop.f32.mrb[0].mxu0
  %v3785 = vadd.f32 %v3711, %v3784
  %v3786 = vpop.f32.mrb[0].mxu0
  %3787 = vmatprep.mubr.f32.mxu0 0.0
  %3788 = vmatmul.mubr.f32.gmra.mrb[0].mxu0 %v3701
  %v3789 = vpop.f32.mrb[0].mxu0
  %v3790 = vadd.f32 %v3711, %v3789
  %v3791 = vpop.f32.mrb[0].mxu0
  %3792 = vmatprep.mubr.f32.mxu0 0.0
  %3793 = vmatmul.mubr.f32.gmra.mrb[0].mxu0 %v3702
  %v3794 = vpop.f32.mrb[0].mxu0
  %v3795 = vadd.f32 %v3711, %v3794
  %v3796 = vpop.f32.mrb[0].mxu0
  %3797 = vmatprep.mubr.f32.mxu0 0.0
  %3798 = vmatmul.mubr.f32.gmra.mrb[0].mxu0 %v3703
  %v3799 = vpop.f32.mrb[0].mxu0
  %v3800 = vadd.f32 %v3711, %v3799
  %v3801 = vpop.f32.mrb[0].mxu0
  %3802 = vmatprep.mubr.f32.mxu0 0.0
  %3803 = vmatmul.mubr.f32.gmra.mrb[0].mxu0 %v3704
  %v3804 = vpop.f32.mrb[0].mxu0
  %v3805 = vadd.f32 %v3711, %v3804
  %v3806 = vpop.f32.mrb[0].mxu0
  %3807 = vmatprep.mubr.f32.mxu0 0.0
  %3808 = vmatmul.mubr.f32.gmra.mrb[0].mxu0 %v3705
  %v3809 = vpop.f32.mrb[0].mxu0
  %v3810 = vadd.f32 %v3711, %v3809
  %v3811 = vpop.f32.mrb[0].mxu0
  %3812 = vmatprep.mubr.f32.mxu0 0.0
  %3813 = vmatmul.mubr.f32.gmra.mrb[0].mxu0 %v3706
  %v3814 = vpop.f32.mrb[0].mxu0
  %v3815 = vadd.f32 %v3711, %v3814
  %v3816 = vpop.f32.mrb[0].mxu0
  %3817 = vdwg.mxu0
  %v3818 = vtanh.pop %v3780
  %v3819 = vtanh.pop %v3785
  %v3820 = vtanh.pop %v3790
  %v3821 = vtanh.pop %v3795
  %v3822 = vtanh.pop %v3800
  %v3823 = vtanh.pop %v3805
  %v3824 = vtanh.pop %v3810
  %v3825 = vtanh.pop %v3815
  %v3827 = vlaneseq
  %v3828 = vshrl.u32 %v3827, 7
  %v3829 = vsub.s32 0, %v3828
  %v3830 = vrot.slane %v3698, %v3829
  %v3832 = vmul.f32 %v3818, %v3830
  %v3833 = vmul.f32 %v3819, %v3830
  %v3834 = vmul.f32 %v3820, %v3830
  %v3835 = vmul.f32 %v3821, %v3830
  %v3836 = vmul.f32 %v3822, %v3830
  %v3837 = vmul.f32 %v3823, %v3830
  %v3838 = vmul.f32 %v3824, %v3830
  %v3839 = vmul.f32 %v3825, %v3830
  %3840 = vadd.xlane.f32.xlu0 %v3832
  %v3841 = vpop.xlane.xlu0 %3840
  %3842 = vadd.xlane.f32.xlu0 %v3833
  %v3843 = vpop.xlane.xlu0 %3842
  %3844 = vadd.xlane.f32.xlu0 %v3834
  %v3845 = vpop.xlane.xlu0 %3844
  %3846 = vadd.xlane.f32.xlu0 %v3835
  %v3847 = vpop.xlane.xlu0 %3846
  %3848 = vadd.xlane.f32.xlu0 %v3836
  %v3849 = vpop.xlane.xlu0 %3848
  %3850 = vadd.xlane.f32.xlu0 %v3837
  %v3851 = vpop.xlane.xlu0 %3850
  %3852 = vadd.xlane.f32.xlu0 %v3838
  %v3853 = vpop.xlane.xlu0 %3852
  %3854 = vadd.xlane.f32.xlu0 %v3839
  %v3855 = vpop.xlane.xlu0 %3854
  %v3856 = vmax.f32 %v3841, %v3849
  %v3857 = vmax.f32 %v3843, %v3851
  %v3858 = vmax.f32 %v3845, %v3853
  %v3859 = vmax.f32 %v3847, %v3855
  %v3860 = vmax.f32 %v3856, %v3857
  %v3861 = vmax.f32 %v3858, %v3859
  %v3862 = vmax.f32 %v3860, %v3861
  %v3863 = vsub.f32 %v3841, %v3862
  %v3864 = vsub.f32 %v3843, %v3862
  %v3865 = vsub.f32 %v3845, %v3862
  %v3866 = vsub.f32 %v3847, %v3862
  %v3867 = vsub.f32 %v3849, %v3862
  %v3868 = vsub.f32 %v3851, %v3862
  %v3869 = vsub.f32 %v3853, %v3862
  %v3870 = vsub.f32 %v3855, %v3862
  %v3871 = vmul.f32 %v3863, 1.442695
  %v3872 = vpow.pop %v3871
  %v3873 = vmul.f32 %v3864, 1.442695
  %v3874 = vpow.pop %v3873
  %v3875 = vmul.f32 %v3865, 1.442695
  %v3876 = vpow.pop %v3875
  %v3877 = vmul.f32 %v3866, 1.442695
  %v3878 = vpow.pop %v3877
  %v3879 = vmul.f32 %v3867, 1.442695
  %v3880 = vpow.pop %v3879
  %v3881 = vmul.f32 %v3868, 1.442695
  %v3882 = vpow.pop %v3881
  %v3883 = vmul.f32 %v3869, 1.442695
  %v3884 = vpow.pop %v3883
  %v3885 = vmul.f32 %v3870, 1.442695
  %v3886 = vpow.pop %v3885
  %v3887 = vadd.f32 %v3872, %v3874
  %v3888 = vadd.f32 %v3887, %v3876
  %v3889 = vadd.f32 %v3888, %v3878
  %v3890 = vadd.f32 %v3889, %v3880
  %v3891 = vadd.f32 %v3890, %v3882
  %v3892 = vadd.f32 %v3891, %v3884
  %v3893 = vadd.f32 %v3892, %v3886
  %v3894 = vrcp.pop %v3893
  %v3895 = vmul.f32 %v3872, %v3894
  %v3896 = vmul.f32 %v3874, %v3894
  %v3897 = vmul.f32 %v3876, %v3894
  %v3898 = vmul.f32 %v3878, %v3894
  %v3899 = vmul.f32 %v3880, %v3894
  %v3900 = vmul.f32 %v3882, %v3894
  %v3901 = vmul.f32 %v3884, %v3894
  %v3902 = vmul.f32 %v3886, %v3894
  %v3903 = vld [vmem:[#allocation2] sm:$0xff]
  %v3904 = vmul.f32 %v3895, %v3903
  %v3905 = vadd.f32 %v3904, 0.0
  %v3906 = vld [vmem:[%s798] sm:$0xff]
  %v3907 = vmul.f32 %v3896, %v3906
  %v3908 = vadd.f32 %v3905, %v3907
  %v3909 = vld [vmem:[%s975] sm:$0xff]
  %v3910 = vmul.f32 %v3897, %v3909
  %v3911 = vadd.f32 %v3908, %v3910
  %v3912 = vld [vmem:[%s1152] sm:$0xff]
  %v3913 = vmul.f32 %v3898, %v3912
  %v3914 = vadd.f32 %v3911, %v3913
  %v3915 = vld [vmem:[%s1329] sm:$0xff]
  %v3916 = vmul.f32 %v3899, %v3915
  %v3917 = vadd.f32 %v3914, %v3916
  %v3918 = vld [vmem:[%s1506] sm:$0xff]
  %v3919 = vmul.f32 %v3900, %v3918
  %v3920 = vadd.f32 %v3917, %v3919
  %v3921 = vld [vmem:[%s1683] sm:$0xff]
  %v3922 = vmul.f32 %v3901, %v3921
  %v3923 = vadd.f32 %v3920, %v3922
  %v3924 = vld [vmem:[%s1860] sm:$0xff]
  %v3925 = vmul.f32 %v3902, %v3924
  %v3926 = vadd.f32 %v3923, %v3925
  %v3927 = vld [vmem:[%s7] sm:$0xff]
  %v3928 = vld [vmem:[%s7 + $0x8] sm:$0xff]
  %v3929 = vld [vmem:[%s7 + $0x10] sm:$0xff]
  %v3930 = vld [vmem:[%s7 + $0x18] sm:$0xff]
  %v3931 = vld [vmem:[%s7 + $0x20] sm:$0xff]
  %v3932 = vld [vmem:[%s7 + $0x28] sm:$0xff]
  %v3933 = vld [vmem:[%s7 + $0x30] sm:$0xff]
  %v3934 = vld [vmem:[%s7 + $0x38] sm:$0xff]
  %v3935 = vld [vmem:[%s7 + $0x40] sm:$0xff]
  %v3936 = vld [vmem:[%s7 + $0x48] sm:$0xff]
  %v3937 = vld [vmem:[%s7 + $0x50] sm:$0xff]
  %v3938 = vld [vmem:[%s7 + $0x58] sm:$0xff]
  %v3939 = vld [vmem:[%s7 + $0x60] sm:$0xff]
  %v3940 = vld [vmem:[%s7 + $0x68] sm:$0xff]
  %v3941 = vld [vmem:[%s7 + $0x70] sm:$0xff]
  %v3942 = vld [vmem:[%s7 + $0x78] sm:$0xff]
  %v3943 = vld [vmem:[%s8] sm:$0x1]
  %v3945 = vlaneseq
  %v3946 = vshrl.u32 %v3945, 7
  %v3947 = vsub.s32 0, %v3946
  %v3948 = vrot.slane %v3943, %v3947
  %3950 = vmatprep.subr.mxu0 0.0
  %3951 = vmatpush1.msra.mxu0 %v3927
  %3952 = vmatprep.subr.mxu0 0.0
  %3953 = vmatpush1.msra.mxu0 %v3928
  %3954 = vmatprep.subr.mxu0 0.0
  %3955 = vmatpush1.msra.mxu0 %v3929
  %3956 = vmatprep.subr.mxu0 0.0
  %3957 = vmatpush1.msra.mxu0 %v3930
  %3958 = vmatprep.subr.mxu0 0.0
  %3959 = vmatpush1.msra.mxu0 %v3931
  %3960 = vmatprep.subr.mxu0 0.0
  %3961 = vmatpush1.msra.mxu0 %v3932
  %3962 = vmatprep.subr.mxu0 0.0
  %3963 = vmatpush1.msra.mxu0 %v3933
  %3964 = vmatprep.subr.mxu0 0.0
  %3965 = vmatpush1.msra.mxu0 %v3934
  %3966 = vmatprep.subr.mxu0 0.0
  %3967 = vmatpush1.msra.mxu0 %v3935
  %3968 = vmatprep.subr.mxu0 0.0
  %3969 = vmatpush1.msra.mxu0 %v3936
  %3970 = vmatprep.subr.mxu0 0.0
  %3971 = vmatpush1.msra.mxu0 %v3937
  %3972 = vmatprep.subr.mxu0 0.0
  %3973 = vmatpush1.msra.mxu0 %v3938
  %3974 = vmatprep.subr.mxu0 0.0
  %3975 = vmatpush1.msra.mxu0 %v3939
  %3976 = vmatprep.subr.mxu0 0.0
  %3977 = vmatpush1.msra.mxu0 %v3940
  %3978 = vmatprep.subr.mxu0 0.0
  %3979 = vmatpush1.msra.mxu0 %v3941
  %3980 = vmatprep.subr.mxu0 0.0
  %3981 = vmatpush1.msra.mxu0 %v3942
  %3982 = vmatprep.subr.mxu0 0.0
  %3983 = vmatpush1.msra.mxu0 0.0
  %3984 = vmatprep.subr.mxu0 0.0
  %3985 = vmatpush1.msra.mxu0 0.0
  %3986 = vmatprep.subr.mxu0 0.0
  %3987 = vmatpush1.msra.mxu0 0.0
  %3988 = vmatprep.subr.mxu0 0.0
  %3989 = vmatpush1.msra.mxu0 0.0
  %3990 = vmatprep.subr.mxu0 0.0
  %3991 = vmatpush1.msra.mxu0 0.0
  %3992 = vmatprep.subr.mxu0 0.0
  %3993 = vmatpush1.msra.mxu0 0.0
  %3994 = vmatprep.subr.mxu0 0.0
  %3995 = vmatpush1.msra.mxu0 0.0
  %3996 = vmatprep.subr.mxu0 0.0
  %3997 = vmatpush1.msra.mxu0 0.0
  %3998 = vmatprep.subr.mxu0 0.0
  %3999 = vmatpush1.msra.mxu0 0.0
  %4000 = vmatprep.subr.mxu0 0.0
  %4001 = vmatpush1.msra.mxu0 0.0
  %4002 = vmatprep.subr.mxu0 0.0
  %4003 = vmatpush1.msra.mxu0 0.0
  %4004 = vmatprep.subr.mxu0 0.0
  %4005 = vmatpush1.msra.mxu0 0.0
  %4006 = vmatprep.subr.mxu0 0.0
  %4007 = vmatpush1.msra.mxu0 0.0
  %4008 = vmatprep.subr.mxu0 0.0
  %4009 = vmatpush1.msra.mxu0 0.0
  %4010 = vmatprep.subr.mxu0 0.0
  %4011 = vmatpush1.msra.mxu0 0.0
  %4012 = vmatprep.subr.mxu0 0.0
  %4013 = vmatpush1.msra.mxu0 0.0
  %4014 = vmatprep.mubr.f32.mxu0 0.0
  %4015 = vmatmul.mubr.f32.gmra.mrb[0].mxu0 %v3926
  %v4016 = vpop.f32.mrb[0].mxu0
  %v4017 = vadd.f32 %v3948, %v4016
  %v4018 = vpop.f32.mrb[0].mxu0
  %4019 = vdwg.mxu0
  %4020 = vst [vmem:[%s9] sm:$0xff] %v4017
  // Predicated region
  $region38: #{attention_lstm_forward.1} parent=0 // pred_check
    _
  $region39: #{attention_lstm_forward.1} parent=0 // pred_check_branch
    %4022 = sbr.rel (0) target = $region41
  $region40: #{attention_lstm_forward.1} parent=0 // pred_region
    _
  $region41: #{attention_lstm_forward.1} parent=0 // pred_fallthru
    _
  // Predicated region
  $region42: #{attention_lstm_forward.1} parent=0 // pred_check
    _
  $region43: #{attention_lstm_forward.1} parent=0 // pred_check_branch
    %4024 = sbr.rel (0) target = $region45
  $region44: #{attention_lstm_forward.1} parent=0 // pred_region
    _
  $region45: #{attention_lstm_forward.1} parent=0 // pred_fallthru
    _

</llo_original>
